<compile_context>
chip_gen: v5e
topology: v5e:2x2
jax: 0.10.0
libtpu: 0.0.40
codegen_flags: <defaults>
</compile_context>

<pallas_src>
import functools

import jax
import jax.numpy as jnp
from jax.experimental import pallas as pl
from jax.experimental.pallas import tpu as pltpu

DROPOUT_P = 0.2


def _round_up(n, m):
    return ((n + m - 1) // m) * m


def _vmem_limit_bytes():
    # Raise the scoped-VMEM default (16 MiB v5e / 32 MiB v6e,v7x) so big row
    # tiles compile, leaving headroom under physical VMEM (128 MiB v5e/v6e,
    # 64 MiB v7x -> ~56 MiB budget).
    try:
        cap = pltpu.get_tpu_info().vmem_capacity_bytes
    except Exception:
        cap = 64 * 1024 * 1024
    return int(min(cap * 7 // 8, 100 * 1024 * 1024))


def _ffn_body(x_ref, w1_ref, b1_ref, w2_ref, b2_ref, compute_dtype):
    # x_ref: (tm, C)        w1_ref: (C, H) bf16   b1_ref: (1, H) bf16
    # w2_ref: (H, C) bf16   b2_ref: (1, C) f32
    x = x_ref[...].astype(compute_dtype)

    # Linear 1 (bf16 MXU matmul, f32 accumulation), then bias+ReLU in the
    # compute dtype (packed bf16 VALU on v6e/v7x; also feeds matmul 2 directly).
    h = jnp.dot(x, w1_ref[...], preferred_element_type=jnp.float32)
    h = jnp.maximum(h.astype(compute_dtype) + b1_ref[...], 0)

    # Linear 2, f32 accumulation, f32 bias.
    y = jnp.dot(h, w2_ref[...], preferred_element_type=jnp.float32)
    return y + b2_ref[...]


def _ffn_eval_kernel(x_ref, w1_ref, b1_ref, w2_ref, b2_ref, o_ref,
                     *, compute_dtype):
    y = _ffn_body(x_ref, w1_ref, b1_ref, w2_ref, b2_ref, compute_dtype)
    o_ref[...] = y.astype(o_ref.dtype)


def _ffn_train_kernel(x_ref, w1_ref, b1_ref, w2_ref, b2_ref, mask_ref, o_ref,
                      *, compute_dtype):
    y = _ffn_body(x_ref, w1_ref, b1_ref, w2_ref, b2_ref, compute_dtype)
    # mask already carries the 1/(1-p) inverted-dropout scale -> one multiply.
    o_ref[...] = (y * mask_ref[...].astype(jnp.float32)).astype(o_ref.dtype)


def feed_forward(x, w1, b1, w2, b2, *, training=False, rng=None, tm=1024,
                 compute_dtype=jnp.bfloat16, out_dtype=None):
    """x: (..., n_embd). Returns same shape as x (dtype = x.dtype by default)."""
    orig_shape = x.shape
    C = orig_shape[-1]
    H = w1.shape[1]
    xm = x.reshape(-1, C)
    M = xm.shape[0]
    out_dtype = x.dtype if out_dtype is None else out_dtype

    # Row tile: multiple of 16 (bf16 sublane packing); no wrapper-side pad of
    # x — the ragged last block is handled by Pallas masked loads/stores.
    tm_eff = min(tm, _round_up(M, 16))
    if M > 256:
        # Keep >= 2 grid steps so both v7x TensorCores get work; also bounds
        # the tile at a 256-row granule for MXU-friendly shapes.
        tm_eff = min(tm_eff, _round_up(-(-M // 2), 256))
    grid = (pl.cdiv(M, tm_eff),)

    # Cast only when needed — callers should hold persistent bf16 weights so
    # no per-call HBM convert is emitted.
    w1c = w1 if w1.dtype == compute_dtype else w1.astype(compute_dtype)
    w2c = w2 if w2.dtype == compute_dtype else w2.astype(compute_dtype)
    b1c = b1.reshape(1, H)
    b1c = b1c if b1c.dtype == compute_dtype else b1c.astype(compute_dtype)
    b2c = b2.reshape(1, C)
    b2c = b2c if b2c.dtype == jnp.float32 else b2c.astype(jnp.float32)

    resident = pl.Buffered(1)  # constant index_map -> single-buffer
    in_specs = [
        pl.BlockSpec((tm_eff, C), lambda i: (i, 0)),                    # x
        pl.BlockSpec((C, H), lambda i: (0, 0), pipeline_mode=resident),  # W1
        pl.BlockSpec((1, H), lambda i: (0, 0), pipeline_mode=resident),  # b1
        pl.BlockSpec((H, C), lambda i: (0, 0), pipeline_mode=resident),  # W2
        pl.BlockSpec((1, C), lambda i: (0, 0), pipeline_mode=resident),  # b2
    ]
    args = [xm, w1c, b1c, w2c, b2c]

    if training:
        key = rng if rng is not None else jax.random.PRNGKey(0)
        keep = jax.random.bernoulli(key, 1.0 - DROPOUT_P, (M, C))
        mask = (keep.astype(jnp.float32) * (1.0 / (1.0 - DROPOUT_P))
                ).astype(jnp.bfloat16)                                   # 0 or 1.25
        in_specs.append(pl.BlockSpec((tm_eff, C), lambda i: (i, 0)))
        args.append(mask)
        kernel = functools.partial(_ffn_train_kernel, compute_dtype=compute_dtype)
    else:
        kernel = functools.partial(_ffn_eval_kernel, compute_dtype=compute_dtype)

    out = pl.pallas_call(
        kernel,
        out_shape=jax.ShapeDtypeStruct((M, C), out_dtype),
        grid_spec=pltpu.PrefetchScalarGridSpec(
            num_scalar_prefetch=0,
            grid=grid,
            in_specs=in_specs,
            out_specs=pl.BlockSpec((tm_eff, C), lambda i: (i, 0)),
        ),
        compiler_params=pltpu.CompilerParams(
            dimension_semantics=("parallel",),
            vmem_limit_bytes=_vmem_limit_bytes()),
    )(*args)

    return out.reshape(orig_shape)


def init_params(key, n_embd):
    """Deterministic init matching nn.Linear's U(-1/sqrt(fan_in), 1/sqrt(fan_in))."""
    h = 4 * n_embd
    k1, k2, k3, k4 = jax.random.split(key, 4)
    bound1 = 1.0 / jnp.sqrt(n_embd)
    bound2 = 1.0 / jnp.sqrt(h)
    w1 = jax.random.uniform(k1, (n_embd, h), jnp.float32, -bound1, bound1)
    b1 = jax.random.uniform(k2, (h,), jnp.float32, -bound1, bound1)
    w2 = jax.random.uniform(k3, (h, n_embd), jnp.float32, -bound2, bound2)
    b2 = jax.random.uniform(k4, (n_embd,), jnp.float32, -bound2, bound2)
    return w1, b1, w2, b2


if __name__ == "__main__":
    # Small shapes consistent with the module: (batch, seq, n_embd=384), H=1536.
    B, T, C = 2, 8, 384
    key = jax.random.PRNGKey(0)
    kx, kp = jax.random.split(key)
    x = jax.random.normal(kx, (B, T, C), dtype=jnp.float32)
    w1, b1, w2, b2 = init_params(kp, C)

    # Persistent bf16 copies (cast once, not per call) for the MXU.
    w1_bf = w1.astype(jnp.bfloat16)
    w2_bf = w2.astype(jnp.bfloat16)
    b1_bf = b1.astype(jnp.bfloat16)

    # Eval mode (dropout = identity).
    y = feed_forward(x, w1_bf, b1_bf, w2_bf, b2, training=False)
    y = jax.block_until_ready(y)
    assert y.shape == x.shape

    # Reference with matching bf16 operands / f32 accumulation (tight check).
    xb = x.reshape(-1, C).astype(jnp.bfloat16)
    ref_h = jnp.dot(xb, w1_bf, preferred_element_type=jnp.float32)
    ref_h = jnp.maximum(ref_h.astype(jnp.bfloat16) + b1_bf, 0)
    ref = (jnp.dot(ref_h, w2_bf, preferred_element_type=jnp.float32)
           + b2).reshape(x.shape)
    assert jnp.allclose(y, ref, atol=2e-3, rtol=2e-3)

    # Sanity check vs full-f32 math (loose tolerance for bf16 matmuls).
    ref_f32 = (jnp.maximum(x @ w1 + b1, 0.0) @ w2 + b2)
    assert jnp.allclose(y, ref_f32, atol=7.5e-2, rtol=5e-2)

    # Training mode: exercise the dropout path; dropped fraction ~= 0.2 and
    # kept elements equal eval output scaled by 1/(1-p).
    y_train = feed_forward(x, w1_bf, b1_bf, w2_bf, b2, training=True,
                           rng=jax.random.PRNGKey(123))
    y_train = jax.block_until_ready(y_train)
    assert y_train.shape == x.shape
    drop_frac = float(jnp.mean(y_train == 0.0))
    assert 0.1 < drop_frac < 0.3, drop_frac
    kept = y_train != 0.0
    assert jnp.allclose(jnp.where(kept, y_train * (1.0 - DROPOUT_P), 0.0),
                        jnp.where(kept, y, 0.0), atol=2e-3, rtol=2e-3)

    print("KERNEL_OK")
</pallas_src>

<mosaic_0001>
module attributes {stable_mosaic.version = 11 : i64} {
  func.func @_ffn_eval_kernel(%arg0: i32, %arg1: memref<16x384xf32, #tpu.memory_space<vmem>>, %arg2: memref<384x1536xbf16, #tpu.memory_space<vmem>>, %arg3: memref<1x1536xbf16, #tpu.memory_space<vmem>>, %arg4: memref<1536x384xbf16, #tpu.memory_space<vmem>>, %arg5: memref<1x384xf32, #tpu.memory_space<vmem>>, %arg6: memref<16x384xf32, #tpu.memory_space<vmem>>) attributes {dimension_semantics = [#tpu.dimension_semantics<parallel>], iteration_bounds = array<i64: 1>, scalar_prefetch = 0 : i64, scratch_operands = 0 : i64, tpu.core_type = #tpu.core_type<tc>, window_params = [{transform_indices = @transform_0, window_bounds = array<i64: 16, 384>}, {pipeline_mode = #tpu.pipeline_mode<synchronous>, transform_indices = @transform_1, window_bounds = array<i64: 384, 1536>}, {pipeline_mode = #tpu.pipeline_mode<synchronous>, transform_indices = @transform_2, window_bounds = array<i64: 1, 1536>}, {pipeline_mode = #tpu.pipeline_mode<synchronous>, transform_indices = @transform_3, window_bounds = array<i64: 1536, 384>}, {pipeline_mode = #tpu.pipeline_mode<synchronous>, transform_indices = @transform_4, window_bounds = array<i64: 1, 384>}, {transform_indices = @transform_5, window_bounds = array<i64: 16, 384>}]} {
    %c0 = arith.constant 0 : index
    %c0_0 = arith.constant 0 : index
    %0 = vector.load %arg1[%c0, %c0_0] : memref<16x384xf32, #tpu.memory_space<vmem>>, vector<16x384xf32>
    %1 = arith.truncf %0 : vector<16x384xf32> to vector<16x384xbf16>
    %c0_1 = arith.constant 0 : index
    %c0_2 = arith.constant 0 : index
    %2 = vector.load %arg2[%c0_1, %c0_2] : memref<384x1536xbf16, #tpu.memory_space<vmem>>, vector<384x1536xbf16>
    %cst = arith.constant dense<0.000000e+00> : vector<16x1536xf32>
    %3 = tpu.matmul %1, %2, %cst {dimension_numbers = #tpu.dot_dimension_numbers<[1], [0], [0], [1], [0, 0, 1, 1], [], []>} : vector<16x384xbf16>, vector<384x1536xbf16>, vector<16x1536xf32> -> vector<16x1536xf32>
    %4 = arith.truncf %3 : vector<16x1536xf32> to vector<16x1536xbf16>
    %c0_3 = arith.constant 0 : index
    %c0_4 = arith.constant 0 : index
    %5 = vector.load %arg3[%c0_3, %c0_4] : memref<1x1536xbf16, #tpu.memory_space<vmem>>, vector<1x1536xbf16>
    %6 = vector.broadcast %5 : vector<1x1536xbf16> to vector<16x1536xbf16>
    %7 = arith.addf %4, %6 : vector<16x1536xbf16>
    %cst_5 = arith.constant 0.000000e+00 : bf16
    %8 = vector.broadcast %cst_5 : bf16 to vector<16x1536xbf16>
    %9 = arith.maximumf %7, %8 : vector<16x1536xbf16>
    %c0_6 = arith.constant 0 : index
    %c0_7 = arith.constant 0 : index
    %10 = vector.load %arg4[%c0_6, %c0_7] : memref<1536x384xbf16, #tpu.memory_space<vmem>>, vector<1536x384xbf16>
    %cst_8 = arith.constant dense<0.000000e+00> : vector<16x384xf32>
    %11 = tpu.matmul %9, %10, %cst_8 {dimension_numbers = #tpu.dot_dimension_numbers<[1], [0], [0], [1], [0, 0, 1, 1], [], []>} : vector<16x1536xbf16>, vector<1536x384xbf16>, vector<16x384xf32> -> vector<16x384xf32>
    %c0_9 = arith.constant 0 : index
    %c0_10 = arith.constant 0 : index
    %12 = vector.load %arg5[%c0_9, %c0_10] : memref<1x384xf32, #tpu.memory_space<vmem>>, vector<1x384xf32>
    %13 = vector.broadcast %12 : vector<1x384xf32> to vector<16x384xf32>
    %14 = arith.addf %11, %13 : vector<16x384xf32>
    %c0_11 = arith.constant 0 : index
    %c0_12 = arith.constant 0 : index
    %15 = vector.load %arg6[%c0_11, %c0_12] : memref<16x384xf32, #tpu.memory_space<vmem>>, vector<16x384xf32>
    tpu.vector_store %arg6[%c0_11, %c0_12], %14 {strides = array<i32>} : memref<16x384xf32, #tpu.memory_space<vmem>>, vector<16x384xf32>,
    return
  }
  func.func @transform_0(%arg0: i32) -> (i32, i32) {
    %c0_i32 = arith.constant 0 : i32
    %c0_i32_0 = arith.constant 0 : i32
    return %arg0, %c0_i32 : i32, i32
  }
  func.func @transform_1(%arg0: i32) -> (i32, i32) {
    %c0_i32 = arith.constant 0 : i32
    %c0_i32_0 = arith.constant 0 : i32
    %c0_i32_1 = arith.constant 0 : i32
    return %c0_i32, %c0_i32_0 : i32, i32
  }
  func.func @transform_2(%arg0: i32) -> (i32, i32) {
    %c0_i32 = arith.constant 0 : i32
    %c0_i32_0 = arith.constant 0 : i32
    %c0_i32_1 = arith.constant 0 : i32
    return %c0_i32, %c0_i32_0 : i32, i32
  }
  func.func @transform_3(%arg0: i32) -> (i32, i32) {
    %c0_i32 = arith.constant 0 : i32
    %c0_i32_0 = arith.constant 0 : i32
    %c0_i32_1 = arith.constant 0 : i32
    return %c0_i32, %c0_i32_0 : i32, i32
  }
  func.func @transform_4(%arg0: i32) -> (i32, i32) {
    %c0_i32 = arith.constant 0 : i32
    %c0_i32_0 = arith.constant 0 : i32
    %c0_i32_1 = arith.constant 0 : i32
    return %c0_i32, %c0_i32_0 : i32, i32
  }
  func.func @transform_5(%arg0: i32) -> (i32, i32) {
    %c0_i32 = arith.constant 0 : i32
    %c0_i32_0 = arith.constant 0 : i32
    return %arg0, %c0_i32 : i32, i32
  }
}

</mosaic_0001>

<llo_original>
// kernel: tpu_custom_call.1
$region0: #{tpu_custom_call.1}
  #allocation0 [shape = 'u32[]', space=smem, size = 0x4, offset = 0x4, fixed_abs, tag = 'smem constant byte address 0x4 - core index']
  #allocation1 [shape = 'u32[72,128]{1,0:T(1,128)}', space=vmem, size = 0x9000, scoped, tag = 'internal scratch']
  %s0 = inlined_call_operand.hbm [shape: f32[16,384], index: 0, kind: input, shape index: {}]
  %s1 = inlined_call_operand.hbm [shape: bf16[384,1536], index: 1, kind: input, shape index: {}]
  %s2 = inlined_call_operand.hbm [shape: bf16[1,1536], index: 2, kind: input, shape index: {}]
  %s3 = inlined_call_operand.hbm [shape: bf16[1536,384], index: 3, kind: input, shape index: {}]
  %s4 = inlined_call_operand.hbm [shape: f32[1,384], index: 4, kind: input, shape index: {}]
  %s5 = inlined_call_operand.hbm [shape: f32[16,384], index: 5, kind: output, shape index: {}]
  %s6 = sld [smem:[#allocation0]]
  $region50: #{tpu_custom_call.1} parent=0
    _
  %s8 = ssub.s32 1, %s6
  %s9 = scalar_select 0, %s8, %s6
  $region1: #{tpu_custom_call.1} parent=0
    #allocation2 [shape = 'u8[24576]{0}', space=vmem, size = 0x6000, scoped, tag = 'input window, operand 0, single buffered']
    #allocation3 [shape = 's32[1]{0}', space=sflag, size = 0x4, scoped, tag = 'scoped memory for tpu_custom_call.1']
    #allocation4 [shape = 's32[1]{0}', space=sflag, size = 0x4, scoped, tag = 'scoped memory for tpu_custom_call.1']
    #allocation5 [shape = 'u8[1179648]{0}', space=vmem, size = 0x120000, scoped, tag = 'input window, operand 1, single buffered']
    #allocation6 [shape = 's32[1]{0}', space=sflag, size = 0x4, scoped, tag = 'scoped memory for tpu_custom_call.1']
    #allocation7 [shape = 'u8[6144]{0}', space=vmem, size = 0x1800, scoped, tag = 'input window, operand 2, single buffered']
    #allocation8 [shape = 'u8[1179648]{0}', space=vmem, size = 0x120000, scoped, tag = 'input window, operand 3, single buffered']
    #allocation9 [shape = 's32[1]{0}', space=sflag, size = 0x4, scoped, tag = 'scoped memory for tpu_custom_call.1']
    #allocation10 [shape = 'u8[1536]{0}', space=vmem, size = 0x800, scoped, tag = 'input window, operand 4, single buffered']
    #allocation11 [shape = 'u8[24576]{0}', space=vmem, size = 0x6000, scoped, tag = 'output window, operand 0, single buffered']
    %10 = vsyncpa [#allocation3], 0
    %11 = vsyncpa [#allocation6], 0
    %12 = vsyncpa [#allocation9], 0
    %13 = vsyncpa [#allocation4], 0
    // Predicated region
    $region2: #{tpu_custom_call.1} parent=1 // pred_check
      _
    $region3: #{tpu_custom_call.1} parent=1 // pred_check_branch
      %15 = sbr.rel (0) target = $region5
    $region4: #{tpu_custom_call.1} parent=1 // pred_region
      %17 = vsyncadd [#allocation3], 0
      %s18 = sshll.u32 %s0, 4
      %s19 = int_to_ptr.hbm [resolvable:$true] %s18
      %s20 = sshll.u32 [#allocation2], 4
      %s21 = int_to_ptr.vmem [resolvable:$true] %s20
      %26 = dma.hbm_to_vmem [thread:$0]  %s19, 768, %s21, [#allocation3], 384, 384, 24
    $region5: #{tpu_custom_call.1} parent=1 // pred_fallthru
      _
    // Predicated region
    $region6: #{tpu_custom_call.1} parent=1 // pred_check
      _
    $region7: #{tpu_custom_call.1} parent=1 // pred_check_branch
      %28 = sbr.rel (0) target = $region9
    $region8: #{tpu_custom_call.1} parent=1 // pred_region
      %30 = vsyncadd [#allocation6], 0
      %s31 = sshll.u32 %s1, 4
      %s32 = int_to_ptr.hbm [resolvable:$true] %s31
      %s33 = sshll.u32 [#allocation5], 4
      %s34 = int_to_ptr.vmem [resolvable:$true] %s33
      %39 = dma.hbm_to_vmem [thread:$0]  %s32, 36864, %s34, [#allocation6], 768, 768, 48
    $region9: #{tpu_custom_call.1} parent=1 // pred_fallthru
      _
    // Predicated region
    $region10: #{tpu_custom_call.1} parent=1 // pred_check
      _
    $region11: #{tpu_custom_call.1} parent=1 // pred_check_branch
      %41 = sbr.rel (0) target = $region13
    $region12: #{tpu_custom_call.1} parent=1 // pred_region
      %43 = vsyncadd [#allocation6], 0
      %s45 = sshll.u32 %s2, 4
      %s46 = int_to_ptr.hbm [resolvable:$true] %s45
      %s47 = sshll.u32 [#allocation7], 4
      %s48 = int_to_ptr.vmem [resolvable:$true] %s47
      %50 = dma.hbm_to_vmem [thread:$0]  %s46, 192, %s48, [#allocation6]
    $region13: #{tpu_custom_call.1} parent=1 // pred_fallthru
      _
    // Predicated region
    $region14: #{tpu_custom_call.1} parent=1 // pred_check
      _
    $region15: #{tpu_custom_call.1} parent=1 // pred_check_branch
      %52 = sbr.rel (0) target = $region17
    $region16: #{tpu_custom_call.1} parent=1 // pred_region
      %54 = vsyncadd [#allocation9], 0
      %s55 = sshll.u32 %s3, 4
      %s56 = int_to_ptr.hbm [resolvable:$true] %s55
      %s57 = sshll.u32 [#allocation8], 4
      %s58 = int_to_ptr.vmem [resolvable:$true] %s57
      %63 = dma.hbm_to_vmem [thread:$0]  %s56, 36864, %s58, [#allocation9], 192, 192, 12
    $region17: #{tpu_custom_call.1} parent=1 // pred_fallthru
      _
    // Predicated region
    $region18: #{tpu_custom_call.1} parent=1 // pred_check
      _
    $region19: #{tpu_custom_call.1} parent=1 // pred_check_branch
      %65 = sbr.rel (0) target = $region21
    $region20: #{tpu_custom_call.1} parent=1 // pred_region
      %67 = vsyncadd [#allocation9], 0
      %s69 = sshll.u32 %s4, 4
      %s70 = int_to_ptr.hbm [resolvable:$true] %s69
      %s71 = sshll.u32 [#allocation10], 4
      %s72 = int_to_ptr.vmem [resolvable:$true] %s71
      %74 = dma.hbm_to_vmem [thread:$0]  %s70, 48, %s72, [#allocation9]
    $region21: #{tpu_custom_call.1} parent=1 // pred_fallthru
      _
    // Predicated region
    $region22: #{tpu_custom_call.1} parent=1 // pred_check
      _
    $region23: #{tpu_custom_call.1} parent=1 // pred_check_branch
      %76 = sbr.rel (0) target = $region25
    $region24: #{tpu_custom_call.1} parent=1 // pred_region
      %78 = dma.done [#allocation3], 768
    $region25: #{tpu_custom_call.1} parent=1 // pred_fallthru
      _
    // Predicated region
    $region26: #{tpu_custom_call.1} parent=1 // pred_check
      _
    $region27: #{tpu_custom_call.1} parent=1 // pred_check_branch
      %80 = sbr.rel (0) target = $region29
    $region28: #{tpu_custom_call.1} parent=1 // pred_region
      %82 = dma.done [#allocation6], 36864
    $region29: #{tpu_custom_call.1} parent=1 // pred_fallthru
      _
    // Predicated region
    $region30: #{tpu_custom_call.1} parent=1 // pred_check
      _
    $region31: #{tpu_custom_call.1} parent=1 // pred_check_branch
      %84 = sbr.rel (0) target = $region33
    $region32: #{tpu_custom_call.1} parent=1 // pred_region
      %86 = dma.done [#allocation6], 192
    $region33: #{tpu_custom_call.1} parent=1 // pred_fallthru
      _
    // Predicated region
    $region34: #{tpu_custom_call.1} parent=1 // pred_check
      _
    $region35: #{tpu_custom_call.1} parent=1 // pred_check_branch
      %88 = sbr.rel (0) target = $region37
    $region36: #{tpu_custom_call.1} parent=1 // pred_region
      %90 = dma.done [#allocation9], 36864
    $region37: #{tpu_custom_call.1} parent=1 // pred_fallthru
      _
    // Predicated region
    $region38: #{tpu_custom_call.1} parent=1 // pred_check
      _
    $region39: #{tpu_custom_call.1} parent=1 // pred_check_branch
      %92 = sbr.rel (0) target = $region41
    $region40: #{tpu_custom_call.1} parent=1 // pred_region
      %94 = dma.done [#allocation9], 48
    $region41: #{tpu_custom_call.1} parent=1 // pred_fallthru
      _
    %v95 = vld [vmem:[#allocation2] sm:$0xff]
    %v96 = vld [vmem:[#allocation2 + $0x8] sm:$0xff]
    %v97 = vld [vmem:[#allocation2 + $0x10] sm:$0xff]
    %v98 = vld [vmem:[#allocation2 + $0x18] sm:$0xff]
    %v99 = vld [vmem:[#allocation2 + $0x20] sm:$0xff]
    %v100 = vld [vmem:[#allocation2 + $0x28] sm:$0xff]
    %v101 = vpack.c.bf16 %v98, %v95
    %v102 = vpack.c.bf16 %v99, %v96
    %v103 = vpack.c.bf16 %v100, %v97
    %v104 = vld [vmem:[#allocation5] sm:$0xff]
    %v105 = vld [vmem:[#allocation5 + $0x8] sm:$0xff]
    %v106 = vld [vmem:[#allocation5 + $0x10] sm:$0xff]
    %v107 = vld [vmem:[#allocation5 + $0x18] sm:$0xff]
    %v108 = vld [vmem:[#allocation5 + $0x20] sm:$0xff]
    %v109 = vld [vmem:[#allocation5 + $0x28] sm:$0xff]
    %v110 = vld [vmem:[#allocation5 + $0x30] sm:$0xff]
    %v111 = vld [vmem:[#allocation5 + $0x38] sm:$0xff]
    %v112 = vld [vmem:[#allocation5 + $0x40] sm:$0xff]
    %v113 = vld [vmem:[#allocation5 + $0x48] sm:$0xff]
    %v114 = vld [vmem:[#allocation5 + $0x50] sm:$0xff]
    %v115 = vld [vmem:[#allocation5 + $0x58] sm:$0xff]
    %v116 = vld [vmem:[#allocation5 + $0x60] sm:$0xff]
    %v117 = vld [vmem:[#allocation5 + $0x68] sm:$0xff]
    %v118 = vld [vmem:[#allocation5 + $0x70] sm:$0xff]
    %v119 = vld [vmem:[#allocation5 + $0x78] sm:$0xff]
    %v120 = vld [vmem:[#allocation5 + $0x80] sm:$0xff]
    %v121 = vld [vmem:[#allocation5 + $0x88] sm:$0xff]
    %v122 = vld [vmem:[#allocation5 + $0x90] sm:$0xff]
    %v123 = vld [vmem:[#allocation5 + $0x98] sm:$0xff]
    %v124 = vld [vmem:[#allocation5 + $0xa0] sm:$0xff]
    %v125 = vld [vmem:[#allocation5 + $0xa8] sm:$0xff]
    %v126 = vld [vmem:[#allocation5 + $0xb0] sm:$0xff]
    %v127 = vld [vmem:[#allocation5 + $0xb8] sm:$0xff]
    %v128 = vld [vmem:[#allocation5 + $0xc0] sm:$0xff]
    %v129 = vld [vmem:[#allocation5 + $0xc8] sm:$0xff]
    %v130 = vld [vmem:[#allocation5 + $0xd0] sm:$0xff]
    %v131 = vld [vmem:[#allocation5 + $0xd8] sm:$0xff]
    %v132 = vld [vmem:[#allocation5 + $0xe0] sm:$0xff]
    %v133 = vld [vmem:[#allocation5 + $0xe8] sm:$0xff]
    %v134 = vld [vmem:[#allocation5 + $0xf0] sm:$0xff]
    %v135 = vld [vmem:[#allocation5 + $0xf8] sm:$0xff]
    %v136 = vld [vmem:[#allocation5 + $0x100] sm:$0xff]
    %v137 = vld [vmem:[#allocation5 + $0x108] sm:$0xff]
    %v138 = vld [vmem:[#allocation5 + $0x110] sm:$0xff]
    %v139 = vld [vmem:[#allocation5 + $0x118] sm:$0xff]
    %v140 = vld [vmem:[#allocation5 + $0x120] sm:$0xff]
    %v141 = vld [vmem:[#allocation5 + $0x128] sm:$0xff]
    %v142 = vld [vmem:[#allocation5 + $0x130] sm:$0xff]
    %v143 = vld [vmem:[#allocation5 + $0x138] sm:$0xff]
    %v144 = vld [vmem:[#allocation5 + $0x140] sm:$0xff]
    %v145 = vld [vmem:[#allocation5 + $0x148] sm:$0xff]
    %v146 = vld [vmem:[#allocation5 + $0x150] sm:$0xff]
    %v147 = vld [vmem:[#allocation5 + $0x158] sm:$0xff]
    %v148 = vld [vmem:[#allocation5 + $0x160] sm:$0xff]
    %v149 = vld [vmem:[#allocation5 + $0x168] sm:$0xff]
    %v150 = vld [vmem:[#allocation5 + $0x170] sm:$0xff]
    %v151 = vld [vmem:[#allocation5 + $0x178] sm:$0xff]
    %v152 = vld [vmem:[#allocation5 + $0x180] sm:$0xff]
    %v153 = vld [vmem:[#allocation5 + $0x188] sm:$0xff]
    %v154 = vld [vmem:[#allocation5 + $0x190] sm:$0xff]
    %v155 = vld [vmem:[#allocation5 + $0x198] sm:$0xff]
    %v156 = vld [vmem:[#allocation5 + $0x1a0] sm:$0xff]
    %v157 = vld [vmem:[#allocation5 + $0x1a8] sm:$0xff]
    %v158 = vld [vmem:[#allocation5 + $0x1b0] sm:$0xff]
    %v159 = vld [vmem:[#allocation5 + $0x1b8] sm:$0xff]
    %v160 = vld [vmem:[#allocation5 + $0x1c0] sm:$0xff]
    %v161 = vld [vmem:[#allocation5 + $0x1c8] sm:$0xff]
    %v162 = vld [vmem:[#allocation5 + $0x1d0] sm:$0xff]
    %v163 = vld [vmem:[#allocation5 + $0x1d8] sm:$0xff]
    %v164 = vld [vmem:[#allocation5 + $0x1e0] sm:$0xff]
    %v165 = vld [vmem:[#allocation5 + $0x1e8] sm:$0xff]
    %v166 = vld [vmem:[#allocation5 + $0x1f0] sm:$0xff]
    %v167 = vld [vmem:[#allocation5 + $0x1f8] sm:$0xff]
    %v168 = vld [vmem:[#allocation5 + $0x200] sm:$0xff]
    %v169 = vld [vmem:[#allocation5 + $0x208] sm:$0xff]
    %v170 = vld [vmem:[#allocation5 + $0x210] sm:$0xff]
    %v171 = vld [vmem:[#allocation5 + $0x218] sm:$0xff]
    %v172 = vld [vmem:[#allocation5 + $0x220] sm:$0xff]
    %v173 = vld [vmem:[#allocation5 + $0x228] sm:$0xff]
    %v174 = vld [vmem:[#allocation5 + $0x230] sm:$0xff]
    %v175 = vld [vmem:[#allocation5 + $0x238] sm:$0xff]
    %v176 = vld [vmem:[#allocation5 + $0x240] sm:$0xff]
    %v177 = vld [vmem:[#allocation5 + $0x248] sm:$0xff]
    %v178 = vld [vmem:[#allocation5 + $0x250] sm:$0xff]
    %v179 = vld [vmem:[#allocation5 + $0x258] sm:$0xff]
    %v180 = vld [vmem:[#allocation5 + $0x260] sm:$0xff]
    %v181 = vld [vmem:[#allocation5 + $0x268] sm:$0xff]
    %v182 = vld [vmem:[#allocation5 + $0x270] sm:$0xff]
    %v183 = vld [vmem:[#allocation5 + $0x278] sm:$0xff]
    %v184 = vld [vmem:[#allocation5 + $0x280] sm:$0xff]
    %v185 = vld [vmem:[#allocation5 + $0x288] sm:$0xff]
    %v186 = vld [vmem:[#allocation5 + $0x290] sm:$0xff]
    %v187 = vld [vmem:[#allocation5 + $0x298] sm:$0xff]
    %v188 = vld [vmem:[#allocation5 + $0x2a0] sm:$0xff]
    %v189 = vld [vmem:[#allocation5 + $0x2a8] sm:$0xff]
    %v190 = vld [vmem:[#allocation5 + $0x2b0] sm:$0xff]
    %v191 = vld [vmem:[#allocation5 + $0x2b8] sm:$0xff]
    %v192 = vld [vmem:[#allocation5 + $0x2c0] sm:$0xff]
    %v193 = vld [vmem:[#allocation5 + $0x2c8] sm:$0xff]
    %v194 = vld [vmem:[#allocation5 + $0x2d0] sm:$0xff]
    %v195 = vld [vmem:[#allocation5 + $0x2d8] sm:$0xff]
    %v196 = vld [vmem:[#allocation5 + $0x2e0] sm:$0xff]
    %v197 = vld [vmem:[#allocation5 + $0x2e8] sm:$0xff]
    %v198 = vld [vmem:[#allocation5 + $0x2f0] sm:$0xff]
    %v199 = vld [vmem:[#allocation5 + $0x2f8] sm:$0xff]
    %v200 = vld [vmem:[#allocation5 + $0x300] sm:$0xff]
    %v201 = vld [vmem:[#allocation5 + $0x308] sm:$0xff]
    %v202 = vld [vmem:[#allocation5 + $0x310] sm:$0xff]
    %v203 = vld [vmem:[#allocation5 + $0x318] sm:$0xff]
    %v204 = vld [vmem:[#allocation5 + $0x320] sm:$0xff]
    %v205 = vld [vmem:[#allocation5 + $0x328] sm:$0xff]
    %v206 = vld [vmem:[#allocation5 + $0x330] sm:$0xff]
    %v207 = vld [vmem:[#allocation5 + $0x338] sm:$0xff]
    %v208 = vld [vmem:[#allocation5 + $0x340] sm:$0xff]
    %v209 = vld [vmem:[#allocation5 + $0x348] sm:$0xff]
    %v210 = vld [vmem:[#allocation5 + $0x350] sm:$0xff]
    %v211 = vld [vmem:[#allocation5 + $0x358] sm:$0xff]
    %v212 = vld [vmem:[#allocation5 + $0x360] sm:$0xff]
    %v213 = vld [vmem:[#allocation5 + $0x368] sm:$0xff]
    %v214 = vld [vmem:[#allocation5 + $0x370] sm:$0xff]
    %v215 = vld [vmem:[#allocation5 + $0x378] sm:$0xff]
    %v216 = vld [vmem:[#allocation5 + $0x380] sm:$0xff]
    %v217 = vld [vmem:[#allocation5 + $0x388] sm:$0xff]
    %v218 = vld [vmem:[#allocation5 + $0x390] sm:$0xff]
    %v219 = vld [vmem:[#allocation5 + $0x398] sm:$0xff]
    %v220 = vld [vmem:[#allocation5 + $0x3a0] sm:$0xff]
    %v221 = vld [vmem:[#allocation5 + $0x3a8] sm:$0xff]
    %v222 = vld [vmem:[#allocation5 + $0x3b0] sm:$0xff]
    %v223 = vld [vmem:[#allocation5 + $0x3b8] sm:$0xff]
    %v224 = vld [vmem:[#allocation5 + $0x3c0] sm:$0xff]
    %v225 = vld [vmem:[#allocation5 + $0x3c8] sm:$0xff]
    %v226 = vld [vmem:[#allocation5 + $0x3d0] sm:$0xff]
    %v227 = vld [vmem:[#allocation5 + $0x3d8] sm:$0xff]
    %v228 = vld [vmem:[#allocation5 + $0x3e0] sm:$0xff]
    %v229 = vld [vmem:[#allocation5 + $0x3e8] sm:$0xff]
    %v230 = vld [vmem:[#allocation5 + $0x3f0] sm:$0xff]
    %v231 = vld [vmem:[#allocation5 + $0x3f8] sm:$0xff]
    %v232 = vld [vmem:[#allocation5 + $0x400] sm:$0xff]
    %v233 = vld [vmem:[#allocation5 + $0x408] sm:$0xff]
    %v234 = vld [vmem:[#allocation5 + $0x410] sm:$0xff]
    %v235 = vld [vmem:[#allocation5 + $0x418] sm:$0xff]
    %v236 = vld [vmem:[#allocation5 + $0x420] sm:$0xff]
    %v237 = vld [vmem:[#allocation5 + $0x428] sm:$0xff]
    %v238 = vld [vmem:[#allocation5 + $0x430] sm:$0xff]
    %v239 = vld [vmem:[#allocation5 + $0x438] sm:$0xff]
    %v240 = vld [vmem:[#allocation5 + $0x440] sm:$0xff]
    %v241 = vld [vmem:[#allocation5 + $0x448] sm:$0xff]
    %v242 = vld [vmem:[#allocation5 + $0x450] sm:$0xff]
    %v243 = vld [vmem:[#allocation5 + $0x458] sm:$0xff]
    %v244 = vld [vmem:[#allocation5 + $0x460] sm:$0xff]
    %v245 = vld [vmem:[#allocation5 + $0x468] sm:$0xff]
    %v246 = vld [vmem:[#allocation5 + $0x470] sm:$0xff]
    %v247 = vld [vmem:[#allocation5 + $0x478] sm:$0xff]
    %v248 = vld [vmem:[#allocation5 + $0x480] sm:$0xff]
    %v249 = vld [vmem:[#allocation5 + $0x488] sm:$0xff]
    %v250 = vld [vmem:[#allocation5 + $0x490] sm:$0xff]
    %v251 = vld [vmem:[#allocation5 + $0x498] sm:$0xff]
    %v252 = vld [vmem:[#allocation5 + $0x4a0] sm:$0xff]
    %v253 = vld [vmem:[#allocation5 + $0x4a8] sm:$0xff]
    %v254 = vld [vmem:[#allocation5 + $0x4b0] sm:$0xff]
    %v255 = vld [vmem:[#allocation5 + $0x4b8] sm:$0xff]
    %v256 = vld [vmem:[#allocation5 + $0x4c0] sm:$0xff]
    %v257 = vld [vmem:[#allocation5 + $0x4c8] sm:$0xff]
    %v258 = vld [vmem:[#allocation5 + $0x4d0] sm:$0xff]
    %v259 = vld [vmem:[#allocation5 + $0x4d8] sm:$0xff]
    %v260 = vld [vmem:[#allocation5 + $0x4e0] sm:$0xff]
    %v261 = vld [vmem:[#allocation5 + $0x4e8] sm:$0xff]
    %v262 = vld [vmem:[#allocation5 + $0x4f0] sm:$0xff]
    %v263 = vld [vmem:[#allocation5 + $0x4f8] sm:$0xff]
    %v264 = vld [vmem:[#allocation5 + $0x500] sm:$0xff]
    %v265 = vld [vmem:[#allocation5 + $0x508] sm:$0xff]
    %v266 = vld [vmem:[#allocation5 + $0x510] sm:$0xff]
    %v267 = vld [vmem:[#allocation5 + $0x518] sm:$0xff]
    %v268 = vld [vmem:[#allocation5 + $0x520] sm:$0xff]
    %v269 = vld [vmem:[#allocation5 + $0x528] sm:$0xff]
    %v270 = vld [vmem:[#allocation5 + $0x530] sm:$0xff]
    %v271 = vld [vmem:[#allocation5 + $0x538] sm:$0xff]
    %v272 = vld [vmem:[#allocation5 + $0x540] sm:$0xff]
    %v273 = vld [vmem:[#allocation5 + $0x548] sm:$0xff]
    %v274 = vld [vmem:[#allocation5 + $0x550] sm:$0xff]
    %v275 = vld [vmem:[#allocation5 + $0x558] sm:$0xff]
    %v276 = vld [vmem:[#allocation5 + $0x560] sm:$0xff]
    %v277 = vld [vmem:[#allocation5 + $0x568] sm:$0xff]
    %v278 = vld [vmem:[#allocation5 + $0x570] sm:$0xff]
    %v279 = vld [vmem:[#allocation5 + $0x578] sm:$0xff]
    %v280 = vld [vmem:[#allocation5 + $0x580] sm:$0xff]
    %v281 = vld [vmem:[#allocation5 + $0x588] sm:$0xff]
    %v282 = vld [vmem:[#allocation5 + $0x590] sm:$0xff]
    %v283 = vld [vmem:[#allocation5 + $0x598] sm:$0xff]
    %v284 = vld [vmem:[#allocation5 + $0x5a0] sm:$0xff]
    %v285 = vld [vmem:[#allocation5 + $0x5a8] sm:$0xff]
    %v286 = vld [vmem:[#allocation5 + $0x5b0] sm:$0xff]
    %v287 = vld [vmem:[#allocation5 + $0x5b8] sm:$0xff]
    %v288 = vld [vmem:[#allocation5 + $0x5c0] sm:$0xff]
    %v289 = vld [vmem:[#allocation5 + $0x5c8] sm:$0xff]
    %v290 = vld [vmem:[#allocation5 + $0x5d0] sm:$0xff]
    %v291 = vld [vmem:[#allocation5 + $0x5d8] sm:$0xff]
    %v292 = vld [vmem:[#allocation5 + $0x5e0] sm:$0xff]
    %v293 = vld [vmem:[#allocation5 + $0x5e8] sm:$0xff]
    %v294 = vld [vmem:[#allocation5 + $0x5f0] sm:$0xff]
    %v295 = vld [vmem:[#allocation5 + $0x5f8] sm:$0xff]
    %v296 = vld [vmem:[#allocation5 + $0x600] sm:$0xff]
    %v297 = vld [vmem:[#allocation5 + $0x608] sm:$0xff]
    %v298 = vld [vmem:[#allocation5 + $0x610] sm:$0xff]
    %v299 = vld [vmem:[#allocation5 + $0x618] sm:$0xff]
    %v300 = vld [vmem:[#allocation5 + $0x620] sm:$0xff]
    %v301 = vld [vmem:[#allocation5 + $0x628] sm:$0xff]
    %v302 = vld [vmem:[#allocation5 + $0x630] sm:$0xff]
    %v303 = vld [vmem:[#allocation5 + $0x638] sm:$0xff]
    %v304 = vld [vmem:[#allocation5 + $0x640] sm:$0xff]
    %v305 = vld [vmem:[#allocation5 + $0x648] sm:$0xff]
    %v306 = vld [vmem:[#allocation5 + $0x650] sm:$0xff]
    %v307 = vld [vmem:[#allocation5 + $0x658] sm:$0xff]
    %v308 = vld [vmem:[#allocation5 + $0x660] sm:$0xff]
    %v309 = vld [vmem:[#allocation5 + $0x668] sm:$0xff]
    %v310 = vld [vmem:[#allocation5 + $0x670] sm:$0xff]
    %v311 = vld [vmem:[#allocation5 + $0x678] sm:$0xff]
    %v312 = vld [vmem:[#allocation5 + $0x680] sm:$0xff]
    %v313 = vld [vmem:[#allocation5 + $0x688] sm:$0xff]
    %v314 = vld [vmem:[#allocation5 + $0x690] sm:$0xff]
    %v315 = vld [vmem:[#allocation5 + $0x698] sm:$0xff]
    %v316 = vld [vmem:[#allocation5 + $0x6a0] sm:$0xff]
    %v317 = vld [vmem:[#allocation5 + $0x6a8] sm:$0xff]
    %v318 = vld [vmem:[#allocation5 + $0x6b0] sm:$0xff]
    %v319 = vld [vmem:[#allocation5 + $0x6b8] sm:$0xff]
    %v320 = vld [vmem:[#allocation5 + $0x6c0] sm:$0xff]
    %v321 = vld [vmem:[#allocation5 + $0x6c8] sm:$0xff]
    %v322 = vld [vmem:[#allocation5 + $0x6d0] sm:$0xff]
    %v323 = vld [vmem:[#allocation5 + $0x6d8] sm:$0xff]
    %v324 = vld [vmem:[#allocation5 + $0x6e0] sm:$0xff]
    %v325 = vld [vmem:[#allocation5 + $0x6e8] sm:$0xff]
    %v326 = vld [vmem:[#allocation5 + $0x6f0] sm:$0xff]
    %v327 = vld [vmem:[#allocation5 + $0x6f8] sm:$0xff]
    %v328 = vld [vmem:[#allocation5 + $0x700] sm:$0xff]
    %v329 = vld [vmem:[#allocation5 + $0x708] sm:$0xff]
    %v330 = vld [vmem:[#allocation5 + $0x710] sm:$0xff]
    %v331 = vld [vmem:[#allocation5 + $0x718] sm:$0xff]
    %v332 = vld [vmem:[#allocation5 + $0x720] sm:$0xff]
    %v333 = vld [vmem:[#allocation5 + $0x728] sm:$0xff]
    %v334 = vld [vmem:[#allocation5 + $0x730] sm:$0xff]
    %v335 = vld [vmem:[#allocation5 + $0x738] sm:$0xff]
    %v336 = vld [vmem:[#allocation5 + $0x740] sm:$0xff]
    %v337 = vld [vmem:[#allocation5 + $0x748] sm:$0xff]
    %v338 = vld [vmem:[#allocation5 + $0x750] sm:$0xff]
    %v339 = vld [vmem:[#allocation5 + $0x758] sm:$0xff]
    %v340 = vld [vmem:[#allocation5 + $0x760] sm:$0xff]
    %v341 = vld [vmem:[#allocation5 + $0x768] sm:$0xff]
    %v342 = vld [vmem:[#allocation5 + $0x770] sm:$0xff]
    %v343 = vld [vmem:[#allocation5 + $0x778] sm:$0xff]
    %v344 = vld [vmem:[#allocation5 + $0x780] sm:$0xff]
    %v345 = vld [vmem:[#allocation5 + $0x788] sm:$0xff]
    %v346 = vld [vmem:[#allocation5 + $0x790] sm:$0xff]
    %v347 = vld [vmem:[#allocation5 + $0x798] sm:$0xff]
    %v348 = vld [vmem:[#allocation5 + $0x7a0] sm:$0xff]
    %v349 = vld [vmem:[#allocation5 + $0x7a8] sm:$0xff]
    %v350 = vld [vmem:[#allocation5 + $0x7b0] sm:$0xff]
    %v351 = vld [vmem:[#allocation5 + $0x7b8] sm:$0xff]
    %v352 = vld [vmem:[#allocation5 + $0x7c0] sm:$0xff]
    %v353 = vld [vmem:[#allocation5 + $0x7c8] sm:$0xff]
    %v354 = vld [vmem:[#allocation5 + $0x7d0] sm:$0xff]
    %v355 = vld [vmem:[#allocation5 + $0x7d8] sm:$0xff]
    %v356 = vld [vmem:[#allocation5 + $0x7e0] sm:$0xff]
    %v357 = vld [vmem:[#allocation5 + $0x7e8] sm:$0xff]
    %v358 = vld [vmem:[#allocation5 + $0x7f0] sm:$0xff]
    %v359 = vld [vmem:[#allocation5 + $0x7f8] sm:$0xff]
    %v360 = vld [vmem:[#allocation5 + $0x800] sm:$0xff]
    %v361 = vld [vmem:[#allocation5 + $0x808] sm:$0xff]
    %v362 = vld [vmem:[#allocation5 + $0x810] sm:$0xff]
    %v363 = vld [vmem:[#allocation5 + $0x818] sm:$0xff]
    %v364 = vld [vmem:[#allocation5 + $0x820] sm:$0xff]
    %v365 = vld [vmem:[#allocation5 + $0x828] sm:$0xff]
    %v366 = vld [vmem:[#allocation5 + $0x830] sm:$0xff]
    %v367 = vld [vmem:[#allocation5 + $0x838] sm:$0xff]
    %v368 = vld [vmem:[#allocation5 + $0x840] sm:$0xff]
    %v369 = vld [vmem:[#allocation5 + $0x848] sm:$0xff]
    %v370 = vld [vmem:[#allocation5 + $0x850] sm:$0xff]
    %v371 = vld [vmem:[#allocation5 + $0x858] sm:$0xff]
    %v372 = vld [vmem:[#allocation5 + $0x860] sm:$0xff]
    %v373 = vld [vmem:[#allocation5 + $0x868] sm:$0xff]
    %v374 = vld [vmem:[#allocation5 + $0x870] sm:$0xff]
    %v375 = vld [vmem:[#allocation5 + $0x878] sm:$0xff]
    %v376 = vld [vmem:[#allocation5 + $0x880] sm:$0xff]
    %v377 = vld [vmem:[#allocation5 + $0x888] sm:$0xff]
    %v378 = vld [vmem:[#allocation5 + $0x890] sm:$0xff]
    %v379 = vld [vmem:[#allocation5 + $0x898] sm:$0xff]
    %v380 = vld [vmem:[#allocation5 + $0x8a0] sm:$0xff]
    %v381 = vld [vmem:[#allocation5 + $0x8a8] sm:$0xff]
    %v382 = vld [vmem:[#allocation5 + $0x8b0] sm:$0xff]
    %v383 = vld [vmem:[#allocation5 + $0x8b8] sm:$0xff]
    %v384 = vld [vmem:[#allocation5 + $0x8c0] sm:$0xff]
    %v385 = vld [vmem:[#allocation5 + $0x8c8] sm:$0xff]
    %v386 = vld [vmem:[#allocation5 + $0x8d0] sm:$0xff]
    %v387 = vld [vmem:[#allocation5 + $0x8d8] sm:$0xff]
    %v388 = vld [vmem:[#allocation5 + $0x8e0] sm:$0xff]
    %v389 = vld [vmem:[#allocation5 + $0x8e8] sm:$0xff]
    %v390 = vld [vmem:[#allocation5 + $0x8f0] sm:$0xff]
    %v391 = vld [vmem:[#allocation5 + $0x8f8] sm:$0xff]
    %v680 = vunpack.c.l.b16 %v104
    %v681 = vunpack.c.h.b16 %v104
    %v682 = vunpack.c.l.b16 %v105
    %v683 = vunpack.c.h.b16 %v105
    %v684 = vunpack.c.l.b16 %v106
    %v685 = vunpack.c.h.b16 %v106
    %v686 = vunpack.c.l.b16 %v107
    %v687 = vunpack.c.h.b16 %v107
    %v688 = vunpack.c.l.b16 %v108
    %v689 = vunpack.c.h.b16 %v108
    %v690 = vunpack.c.l.b16 %v109
    %v691 = vunpack.c.h.b16 %v109
    %v692 = vunpack.c.l.b16 %v110
    %v693 = vunpack.c.h.b16 %v110
    %v694 = vunpack.c.l.b16 %v111
    %v695 = vunpack.c.h.b16 %v111
    %v696 = vunpack.c.l.b16 %v112
    %v697 = vunpack.c.h.b16 %v112
    %v698 = vunpack.c.l.b16 %v113
    %v699 = vunpack.c.h.b16 %v113
    %v700 = vunpack.c.l.b16 %v114
    %v701 = vunpack.c.h.b16 %v114
    %v702 = vunpack.c.l.b16 %v115
    %v703 = vunpack.c.h.b16 %v115
    %v704 = vunpack.c.l.b16 %v116
    %v705 = vunpack.c.h.b16 %v116
    %v706 = vunpack.c.l.b16 %v117
    %v707 = vunpack.c.h.b16 %v117
    %v708 = vunpack.c.l.b16 %v118
    %v709 = vunpack.c.h.b16 %v118
    %v710 = vunpack.c.l.b16 %v119
    %v711 = vunpack.c.h.b16 %v119
    %v712 = vunpack.c.l.b16 %v120
    %v713 = vunpack.c.h.b16 %v120
    %v714 = vunpack.c.l.b16 %v121
    %v715 = vunpack.c.h.b16 %v121
    %v716 = vunpack.c.l.b16 %v122
    %v717 = vunpack.c.h.b16 %v122
    %v718 = vunpack.c.l.b16 %v123
    %v719 = vunpack.c.h.b16 %v123
    %v720 = vunpack.c.l.b16 %v124
    %v721 = vunpack.c.h.b16 %v124
    %v722 = vunpack.c.l.b16 %v125
    %v723 = vunpack.c.h.b16 %v125
    %v724 = vunpack.c.l.b16 %v126
    %v725 = vunpack.c.h.b16 %v126
    %v726 = vunpack.c.l.b16 %v127
    %v727 = vunpack.c.h.b16 %v127
    %v728 = vunpack.c.l.b16 %v128
    %v729 = vunpack.c.h.b16 %v128
    %v730 = vunpack.c.l.b16 %v129
    %v731 = vunpack.c.h.b16 %v129
    %v732 = vunpack.c.l.b16 %v130
    %v733 = vunpack.c.h.b16 %v130
    %v734 = vunpack.c.l.b16 %v131
    %v735 = vunpack.c.h.b16 %v131
    %v736 = vunpack.c.l.b16 %v132
    %v737 = vunpack.c.h.b16 %v132
    %v738 = vunpack.c.l.b16 %v133
    %v739 = vunpack.c.h.b16 %v133
    %v740 = vunpack.c.l.b16 %v134
    %v741 = vunpack.c.h.b16 %v134
    %v742 = vunpack.c.l.b16 %v135
    %v743 = vunpack.c.h.b16 %v135
    %v744 = vunpack.c.l.b16 %v136
    %v745 = vunpack.c.h.b16 %v136
    %v746 = vunpack.c.l.b16 %v137
    %v747 = vunpack.c.h.b16 %v137
    %v748 = vunpack.c.l.b16 %v138
    %v749 = vunpack.c.h.b16 %v138
    %v750 = vunpack.c.l.b16 %v139
    %v751 = vunpack.c.h.b16 %v139
    %v752 = vunpack.c.l.b16 %v140
    %v753 = vunpack.c.h.b16 %v140
    %v754 = vunpack.c.l.b16 %v141
    %v755 = vunpack.c.h.b16 %v141
    %v756 = vunpack.c.l.b16 %v142
    %v757 = vunpack.c.h.b16 %v142
    %v758 = vunpack.c.l.b16 %v143
    %v759 = vunpack.c.h.b16 %v143
    %v760 = vunpack.c.l.b16 %v144
    %v761 = vunpack.c.h.b16 %v144
    %v762 = vunpack.c.l.b16 %v145
    %v763 = vunpack.c.h.b16 %v145
    %v764 = vunpack.c.l.b16 %v146
    %v765 = vunpack.c.h.b16 %v146
    %v766 = vunpack.c.l.b16 %v147
    %v767 = vunpack.c.h.b16 %v147
    %v768 = vunpack.c.l.b16 %v148
    %v769 = vunpack.c.h.b16 %v148
    %v770 = vunpack.c.l.b16 %v149
    %v771 = vunpack.c.h.b16 %v149
    %v772 = vunpack.c.l.b16 %v150
    %v773 = vunpack.c.h.b16 %v150
    %v774 = vunpack.c.l.b16 %v151
    %v775 = vunpack.c.h.b16 %v151
    %v776 = vunpack.c.l.b16 %v152
    %v777 = vunpack.c.h.b16 %v152
    %v778 = vunpack.c.l.b16 %v153
    %v779 = vunpack.c.h.b16 %v153
    %v780 = vunpack.c.l.b16 %v154
    %v781 = vunpack.c.h.b16 %v154
    %v782 = vunpack.c.l.b16 %v155
    %v783 = vunpack.c.h.b16 %v155
    %v784 = vunpack.c.l.b16 %v156
    %v785 = vunpack.c.h.b16 %v156
    %v786 = vunpack.c.l.b16 %v157
    %v787 = vunpack.c.h.b16 %v157
    %v788 = vunpack.c.l.b16 %v158
    %v789 = vunpack.c.h.b16 %v158
    %v790 = vunpack.c.l.b16 %v159
    %v791 = vunpack.c.h.b16 %v159
    %v792 = vunpack.c.l.b16 %v160
    %v793 = vunpack.c.h.b16 %v160
    %v794 = vunpack.c.l.b16 %v161
    %v795 = vunpack.c.h.b16 %v161
    %v796 = vunpack.c.l.b16 %v162
    %v797 = vunpack.c.h.b16 %v162
    %v798 = vunpack.c.l.b16 %v163
    %v799 = vunpack.c.h.b16 %v163
    %v800 = vunpack.c.l.b16 %v164
    %v801 = vunpack.c.h.b16 %v164
    %v802 = vunpack.c.l.b16 %v165
    %v803 = vunpack.c.h.b16 %v165
    %v804 = vunpack.c.l.b16 %v166
    %v805 = vunpack.c.h.b16 %v166
    %v806 = vunpack.c.l.b16 %v167
    %v807 = vunpack.c.h.b16 %v167
    %v808 = vunpack.c.l.b16 %v168
    %v809 = vunpack.c.h.b16 %v168
    %v810 = vunpack.c.l.b16 %v169
    %v811 = vunpack.c.h.b16 %v169
    %v812 = vunpack.c.l.b16 %v170
    %v813 = vunpack.c.h.b16 %v170
    %v814 = vunpack.c.l.b16 %v171
    %v815 = vunpack.c.h.b16 %v171
    %v816 = vunpack.c.l.b16 %v172
    %v817 = vunpack.c.h.b16 %v172
    %v818 = vunpack.c.l.b16 %v173
    %v819 = vunpack.c.h.b16 %v173
    %v820 = vunpack.c.l.b16 %v174
    %v821 = vunpack.c.h.b16 %v174
    %v822 = vunpack.c.l.b16 %v175
    %v823 = vunpack.c.h.b16 %v175
    %v824 = vunpack.c.l.b16 %v176
    %v825 = vunpack.c.h.b16 %v176
    %v826 = vunpack.c.l.b16 %v177
    %v827 = vunpack.c.h.b16 %v177
    %v828 = vunpack.c.l.b16 %v178
    %v829 = vunpack.c.h.b16 %v178
    %v830 = vunpack.c.l.b16 %v179
    %v831 = vunpack.c.h.b16 %v179
    %v832 = vunpack.c.l.b16 %v180
    %v833 = vunpack.c.h.b16 %v180
    %v834 = vunpack.c.l.b16 %v181
    %v835 = vunpack.c.h.b16 %v181
    %v836 = vunpack.c.l.b16 %v182
    %v837 = vunpack.c.h.b16 %v182
    %v838 = vunpack.c.l.b16 %v183
    %v839 = vunpack.c.h.b16 %v183
    %v840 = vunpack.c.l.b16 %v184
    %v841 = vunpack.c.h.b16 %v184
    %v842 = vunpack.c.l.b16 %v185
    %v843 = vunpack.c.h.b16 %v185
    %v844 = vunpack.c.l.b16 %v186
    %v845 = vunpack.c.h.b16 %v186
    %v846 = vunpack.c.l.b16 %v187
    %v847 = vunpack.c.h.b16 %v187
    %v848 = vunpack.c.l.b16 %v188
    %v849 = vunpack.c.h.b16 %v188
    %v850 = vunpack.c.l.b16 %v189
    %v851 = vunpack.c.h.b16 %v189
    %v852 = vunpack.c.l.b16 %v190
    %v853 = vunpack.c.h.b16 %v190
    %v854 = vunpack.c.l.b16 %v191
    %v855 = vunpack.c.h.b16 %v191
    %v856 = vunpack.c.l.b16 %v192
    %v857 = vunpack.c.h.b16 %v192
    %v858 = vunpack.c.l.b16 %v193
    %v859 = vunpack.c.h.b16 %v193
    %v860 = vunpack.c.l.b16 %v194
    %v861 = vunpack.c.h.b16 %v194
    %v862 = vunpack.c.l.b16 %v195
    %v863 = vunpack.c.h.b16 %v195
    %v864 = vunpack.c.l.b16 %v196
    %v865 = vunpack.c.h.b16 %v196
    %v866 = vunpack.c.l.b16 %v197
    %v867 = vunpack.c.h.b16 %v197
    %v868 = vunpack.c.l.b16 %v198
    %v869 = vunpack.c.h.b16 %v198
    %v870 = vunpack.c.l.b16 %v199
    %v871 = vunpack.c.h.b16 %v199
    %v872 = vunpack.c.l.b16 %v200
    %v873 = vunpack.c.h.b16 %v200
    %v874 = vunpack.c.l.b16 %v201
    %v875 = vunpack.c.h.b16 %v201
    %v876 = vunpack.c.l.b16 %v202
    %v877 = vunpack.c.h.b16 %v202
    %v878 = vunpack.c.l.b16 %v203
    %v879 = vunpack.c.h.b16 %v203
    %v880 = vunpack.c.l.b16 %v204
    %v881 = vunpack.c.h.b16 %v204
    %v882 = vunpack.c.l.b16 %v205
    %v883 = vunpack.c.h.b16 %v205
    %v884 = vunpack.c.l.b16 %v206
    %v885 = vunpack.c.h.b16 %v206
    %v886 = vunpack.c.l.b16 %v207
    %v887 = vunpack.c.h.b16 %v207
    %v888 = vunpack.c.l.b16 %v208
    %v889 = vunpack.c.h.b16 %v208
    %v890 = vunpack.c.l.b16 %v209
    %v891 = vunpack.c.h.b16 %v209
    %v892 = vunpack.c.l.b16 %v210
    %v893 = vunpack.c.h.b16 %v210
    %v894 = vunpack.c.l.b16 %v211
    %v895 = vunpack.c.h.b16 %v211
    %v896 = vunpack.c.l.b16 %v212
    %v897 = vunpack.c.h.b16 %v212
    %v898 = vunpack.c.l.b16 %v213
    %v899 = vunpack.c.h.b16 %v213
    %v900 = vunpack.c.l.b16 %v214
    %v901 = vunpack.c.h.b16 %v214
    %v902 = vunpack.c.l.b16 %v215
    %v903 = vunpack.c.h.b16 %v215
    %v904 = vunpack.c.l.b16 %v216
    %v905 = vunpack.c.h.b16 %v216
    %v906 = vunpack.c.l.b16 %v217
    %v907 = vunpack.c.h.b16 %v217
    %v908 = vunpack.c.l.b16 %v218
    %v909 = vunpack.c.h.b16 %v218
    %v910 = vunpack.c.l.b16 %v219
    %v911 = vunpack.c.h.b16 %v219
    %v912 = vunpack.c.l.b16 %v220
    %v913 = vunpack.c.h.b16 %v220
    %v914 = vunpack.c.l.b16 %v221
    %v915 = vunpack.c.h.b16 %v221
    %v916 = vunpack.c.l.b16 %v222
    %v917 = vunpack.c.h.b16 %v222
    %v918 = vunpack.c.l.b16 %v223
    %v919 = vunpack.c.h.b16 %v223
    %v920 = vunpack.c.l.b16 %v224
    %v921 = vunpack.c.h.b16 %v224
    %v922 = vunpack.c.l.b16 %v225
    %v923 = vunpack.c.h.b16 %v225
    %v924 = vunpack.c.l.b16 %v226
    %v925 = vunpack.c.h.b16 %v226
    %v926 = vunpack.c.l.b16 %v227
    %v927 = vunpack.c.h.b16 %v227
    %v928 = vunpack.c.l.b16 %v228
    %v929 = vunpack.c.h.b16 %v228
    %v930 = vunpack.c.l.b16 %v229
    %v931 = vunpack.c.h.b16 %v229
    %v932 = vunpack.c.l.b16 %v230
    %v933 = vunpack.c.h.b16 %v230
    %v934 = vunpack.c.l.b16 %v231
    %v935 = vunpack.c.h.b16 %v231
    %v936 = vunpack.c.l.b16 %v232
    %v937 = vunpack.c.h.b16 %v232
    %v938 = vunpack.c.l.b16 %v233
    %v939 = vunpack.c.h.b16 %v233
    %v940 = vunpack.c.l.b16 %v234
    %v941 = vunpack.c.h.b16 %v234
    %v942 = vunpack.c.l.b16 %v235
    %v943 = vunpack.c.h.b16 %v235
    %v944 = vunpack.c.l.b16 %v236
    %v945 = vunpack.c.h.b16 %v236
    %v946 = vunpack.c.l.b16 %v237
    %v947 = vunpack.c.h.b16 %v237
    %v948 = vunpack.c.l.b16 %v238
    %v949 = vunpack.c.h.b16 %v238
    %v950 = vunpack.c.l.b16 %v239
    %v951 = vunpack.c.h.b16 %v239
    %v952 = vunpack.c.l.b16 %v240
    %v953 = vunpack.c.h.b16 %v240
    %v954 = vunpack.c.l.b16 %v241
    %v955 = vunpack.c.h.b16 %v241
    %v956 = vunpack.c.l.b16 %v242
    %v957 = vunpack.c.h.b16 %v242
    %v958 = vunpack.c.l.b16 %v243
    %v959 = vunpack.c.h.b16 %v243
    %v960 = vunpack.c.l.b16 %v244
    %v961 = vunpack.c.h.b16 %v244
    %v962 = vunpack.c.l.b16 %v245
    %v963 = vunpack.c.h.b16 %v245
    %v964 = vunpack.c.l.b16 %v246
    %v965 = vunpack.c.h.b16 %v246
    %v966 = vunpack.c.l.b16 %v247
    %v967 = vunpack.c.h.b16 %v247
    %v968 = vunpack.c.l.b16 %v248
    %v969 = vunpack.c.h.b16 %v248
    %v970 = vunpack.c.l.b16 %v249
    %v971 = vunpack.c.h.b16 %v249
    %v972 = vunpack.c.l.b16 %v250
    %v973 = vunpack.c.h.b16 %v250
    %v974 = vunpack.c.l.b16 %v251
    %v975 = vunpack.c.h.b16 %v251
    %v976 = vunpack.c.l.b16 %v252
    %v977 = vunpack.c.h.b16 %v252
    %v978 = vunpack.c.l.b16 %v253
    %v979 = vunpack.c.h.b16 %v253
    %v980 = vunpack.c.l.b16 %v254
    %v981 = vunpack.c.h.b16 %v254
    %v982 = vunpack.c.l.b16 %v255
    %v983 = vunpack.c.h.b16 %v255
    %v984 = vunpack.c.l.b16 %v256
    %v985 = vunpack.c.h.b16 %v256
    %v986 = vunpack.c.l.b16 %v257
    %v987 = vunpack.c.h.b16 %v257
    %v988 = vunpack.c.l.b16 %v258
    %v989 = vunpack.c.h.b16 %v258
    %v990 = vunpack.c.l.b16 %v259
    %v991 = vunpack.c.h.b16 %v259
    %v992 = vunpack.c.l.b16 %v260
    %v993 = vunpack.c.h.b16 %v260
    %v994 = vunpack.c.l.b16 %v261
    %v995 = vunpack.c.h.b16 %v261
    %v996 = vunpack.c.l.b16 %v262
    %v997 = vunpack.c.h.b16 %v262
    %v998 = vunpack.c.l.b16 %v263
    %v999 = vunpack.c.h.b16 %v263
    %v1000 = vunpack.c.l.b16 %v264
    %v1001 = vunpack.c.h.b16 %v264
    %v1002 = vunpack.c.l.b16 %v265
    %v1003 = vunpack.c.h.b16 %v265
    %v1004 = vunpack.c.l.b16 %v266
    %v1005 = vunpack.c.h.b16 %v266
    %v1006 = vunpack.c.l.b16 %v267
    %v1007 = vunpack.c.h.b16 %v267
    %v1008 = vunpack.c.l.b16 %v268
    %v1009 = vunpack.c.h.b16 %v268
    %v1010 = vunpack.c.l.b16 %v269
    %v1011 = vunpack.c.h.b16 %v269
    %v1012 = vunpack.c.l.b16 %v270
    %v1013 = vunpack.c.h.b16 %v270
    %v1014 = vunpack.c.l.b16 %v271
    %v1015 = vunpack.c.h.b16 %v271
    %v1016 = vunpack.c.l.b16 %v272
    %v1017 = vunpack.c.h.b16 %v272
    %v1018 = vunpack.c.l.b16 %v273
    %v1019 = vunpack.c.h.b16 %v273
    %v1020 = vunpack.c.l.b16 %v274
    %v1021 = vunpack.c.h.b16 %v274
    %v1022 = vunpack.c.l.b16 %v275
    %v1023 = vunpack.c.h.b16 %v275
    %v1024 = vunpack.c.l.b16 %v276
    %v1025 = vunpack.c.h.b16 %v276
    %v1026 = vunpack.c.l.b16 %v277
    %v1027 = vunpack.c.h.b16 %v277
    %v1028 = vunpack.c.l.b16 %v278
    %v1029 = vunpack.c.h.b16 %v278
    %v1030 = vunpack.c.l.b16 %v279
    %v1031 = vunpack.c.h.b16 %v279
    %v1032 = vunpack.c.l.b16 %v280
    %v1033 = vunpack.c.h.b16 %v280
    %v1034 = vunpack.c.l.b16 %v281
    %v1035 = vunpack.c.h.b16 %v281
    %v1036 = vunpack.c.l.b16 %v282
    %v1037 = vunpack.c.h.b16 %v282
    %v1038 = vunpack.c.l.b16 %v283
    %v1039 = vunpack.c.h.b16 %v283
    %v1040 = vunpack.c.l.b16 %v284
    %v1041 = vunpack.c.h.b16 %v284
    %v1042 = vunpack.c.l.b16 %v285
    %v1043 = vunpack.c.h.b16 %v285
    %v1044 = vunpack.c.l.b16 %v286
    %v1045 = vunpack.c.h.b16 %v286
    %v1046 = vunpack.c.l.b16 %v287
    %v1047 = vunpack.c.h.b16 %v287
    %v1048 = vunpack.c.l.b16 %v288
    %v1049 = vunpack.c.h.b16 %v288
    %v1050 = vunpack.c.l.b16 %v289
    %v1051 = vunpack.c.h.b16 %v289
    %v1052 = vunpack.c.l.b16 %v290
    %v1053 = vunpack.c.h.b16 %v290
    %v1054 = vunpack.c.l.b16 %v291
    %v1055 = vunpack.c.h.b16 %v291
    %v1056 = vunpack.c.l.b16 %v292
    %v1057 = vunpack.c.h.b16 %v292
    %v1058 = vunpack.c.l.b16 %v293
    %v1059 = vunpack.c.h.b16 %v293
    %v1060 = vunpack.c.l.b16 %v294
    %v1061 = vunpack.c.h.b16 %v294
    %v1062 = vunpack.c.l.b16 %v295
    %v1063 = vunpack.c.h.b16 %v295
    %v1064 = vunpack.c.l.b16 %v296
    %v1065 = vunpack.c.h.b16 %v296
    %v1066 = vunpack.c.l.b16 %v297
    %v1067 = vunpack.c.h.b16 %v297
    %v1068 = vunpack.c.l.b16 %v298
    %v1069 = vunpack.c.h.b16 %v298
    %v1070 = vunpack.c.l.b16 %v299
    %v1071 = vunpack.c.h.b16 %v299
    %v1072 = vunpack.c.l.b16 %v300
    %v1073 = vunpack.c.h.b16 %v300
    %v1074 = vunpack.c.l.b16 %v301
    %v1075 = vunpack.c.h.b16 %v301
    %v1076 = vunpack.c.l.b16 %v302
    %v1077 = vunpack.c.h.b16 %v302
    %v1078 = vunpack.c.l.b16 %v303
    %v1079 = vunpack.c.h.b16 %v303
    %v1080 = vunpack.c.l.b16 %v304
    %v1081 = vunpack.c.h.b16 %v304
    %v1082 = vunpack.c.l.b16 %v305
    %v1083 = vunpack.c.h.b16 %v305
    %v1084 = vunpack.c.l.b16 %v306
    %v1085 = vunpack.c.h.b16 %v306
    %v1086 = vunpack.c.l.b16 %v307
    %v1087 = vunpack.c.h.b16 %v307
    %v1088 = vunpack.c.l.b16 %v308
    %v1089 = vunpack.c.h.b16 %v308
    %v1090 = vunpack.c.l.b16 %v309
    %v1091 = vunpack.c.h.b16 %v309
    %v1092 = vunpack.c.l.b16 %v310
    %v1093 = vunpack.c.h.b16 %v310
    %v1094 = vunpack.c.l.b16 %v311
    %v1095 = vunpack.c.h.b16 %v311
    %v1096 = vunpack.c.l.b16 %v312
    %v1097 = vunpack.c.h.b16 %v312
    %v1098 = vunpack.c.l.b16 %v313
    %v1099 = vunpack.c.h.b16 %v313
    %v1100 = vunpack.c.l.b16 %v314
    %v1101 = vunpack.c.h.b16 %v314
    %v1102 = vunpack.c.l.b16 %v315
    %v1103 = vunpack.c.h.b16 %v315
    %v1104 = vunpack.c.l.b16 %v316
    %v1105 = vunpack.c.h.b16 %v316
    %v1106 = vunpack.c.l.b16 %v317
    %v1107 = vunpack.c.h.b16 %v317
    %v1108 = vunpack.c.l.b16 %v318
    %v1109 = vunpack.c.h.b16 %v318
    %v1110 = vunpack.c.l.b16 %v319
    %v1111 = vunpack.c.h.b16 %v319
    %v1112 = vunpack.c.l.b16 %v320
    %v1113 = vunpack.c.h.b16 %v320
    %v1114 = vunpack.c.l.b16 %v321
    %v1115 = vunpack.c.h.b16 %v321
    %v1116 = vunpack.c.l.b16 %v322
    %v1117 = vunpack.c.h.b16 %v322
    %v1118 = vunpack.c.l.b16 %v323
    %v1119 = vunpack.c.h.b16 %v323
    %v1120 = vunpack.c.l.b16 %v324
    %v1121 = vunpack.c.h.b16 %v324
    %v1122 = vunpack.c.l.b16 %v325
    %v1123 = vunpack.c.h.b16 %v325
    %v1124 = vunpack.c.l.b16 %v326
    %v1125 = vunpack.c.h.b16 %v326
    %v1126 = vunpack.c.l.b16 %v327
    %v1127 = vunpack.c.h.b16 %v327
    %v1128 = vunpack.c.l.b16 %v328
    %v1129 = vunpack.c.h.b16 %v328
    %v1130 = vunpack.c.l.b16 %v329
    %v1131 = vunpack.c.h.b16 %v329
    %v1132 = vunpack.c.l.b16 %v330
    %v1133 = vunpack.c.h.b16 %v330
    %v1134 = vunpack.c.l.b16 %v331
    %v1135 = vunpack.c.h.b16 %v331
    %v1136 = vunpack.c.l.b16 %v332
    %v1137 = vunpack.c.h.b16 %v332
    %v1138 = vunpack.c.l.b16 %v333
    %v1139 = vunpack.c.h.b16 %v333
    %v1140 = vunpack.c.l.b16 %v334
    %v1141 = vunpack.c.h.b16 %v334
    %v1142 = vunpack.c.l.b16 %v335
    %v1143 = vunpack.c.h.b16 %v335
    %v1144 = vunpack.c.l.b16 %v336
    %v1145 = vunpack.c.h.b16 %v336
    %v1146 = vunpack.c.l.b16 %v337
    %v1147 = vunpack.c.h.b16 %v337
    %v1148 = vunpack.c.l.b16 %v338
    %v1149 = vunpack.c.h.b16 %v338
    %v1150 = vunpack.c.l.b16 %v339
    %v1151 = vunpack.c.h.b16 %v339
    %v1152 = vunpack.c.l.b16 %v340
    %v1153 = vunpack.c.h.b16 %v340
    %v1154 = vunpack.c.l.b16 %v341
    %v1155 = vunpack.c.h.b16 %v341
    %v1156 = vunpack.c.l.b16 %v342
    %v1157 = vunpack.c.h.b16 %v342
    %v1158 = vunpack.c.l.b16 %v343
    %v1159 = vunpack.c.h.b16 %v343
    %v1160 = vunpack.c.l.b16 %v344
    %v1161 = vunpack.c.h.b16 %v344
    %v1162 = vunpack.c.l.b16 %v345
    %v1163 = vunpack.c.h.b16 %v345
    %v1164 = vunpack.c.l.b16 %v346
    %v1165 = vunpack.c.h.b16 %v346
    %v1166 = vunpack.c.l.b16 %v347
    %v1167 = vunpack.c.h.b16 %v347
    %v1168 = vunpack.c.l.b16 %v348
    %v1169 = vunpack.c.h.b16 %v348
    %v1170 = vunpack.c.l.b16 %v349
    %v1171 = vunpack.c.h.b16 %v349
    %v1172 = vunpack.c.l.b16 %v350
    %v1173 = vunpack.c.h.b16 %v350
    %v1174 = vunpack.c.l.b16 %v351
    %v1175 = vunpack.c.h.b16 %v351
    %v1176 = vunpack.c.l.b16 %v352
    %v1177 = vunpack.c.h.b16 %v352
    %v1178 = vunpack.c.l.b16 %v353
    %v1179 = vunpack.c.h.b16 %v353
    %v1180 = vunpack.c.l.b16 %v354
    %v1181 = vunpack.c.h.b16 %v354
    %v1182 = vunpack.c.l.b16 %v355
    %v1183 = vunpack.c.h.b16 %v355
    %v1184 = vunpack.c.l.b16 %v356
    %v1185 = vunpack.c.h.b16 %v356
    %v1186 = vunpack.c.l.b16 %v357
    %v1187 = vunpack.c.h.b16 %v357
    %v1188 = vunpack.c.l.b16 %v358
    %v1189 = vunpack.c.h.b16 %v358
    %v1190 = vunpack.c.l.b16 %v359
    %v1191 = vunpack.c.h.b16 %v359
    %v1192 = vunpack.c.l.b16 %v360
    %v1193 = vunpack.c.h.b16 %v360
    %v1194 = vunpack.c.l.b16 %v361
    %v1195 = vunpack.c.h.b16 %v361
    %v1196 = vunpack.c.l.b16 %v362
    %v1197 = vunpack.c.h.b16 %v362
    %v1198 = vunpack.c.l.b16 %v363
    %v1199 = vunpack.c.h.b16 %v363
    %v1200 = vunpack.c.l.b16 %v364
    %v1201 = vunpack.c.h.b16 %v364
    %v1202 = vunpack.c.l.b16 %v365
    %v1203 = vunpack.c.h.b16 %v365
    %v1204 = vunpack.c.l.b16 %v366
    %v1205 = vunpack.c.h.b16 %v366
    %v1206 = vunpack.c.l.b16 %v367
    %v1207 = vunpack.c.h.b16 %v367
    %v1208 = vunpack.c.l.b16 %v368
    %v1209 = vunpack.c.h.b16 %v368
    %v1210 = vunpack.c.l.b16 %v369
    %v1211 = vunpack.c.h.b16 %v369
    %v1212 = vunpack.c.l.b16 %v370
    %v1213 = vunpack.c.h.b16 %v370
    %v1214 = vunpack.c.l.b16 %v371
    %v1215 = vunpack.c.h.b16 %v371
    %v1216 = vunpack.c.l.b16 %v372
    %v1217 = vunpack.c.h.b16 %v372
    %v1218 = vunpack.c.l.b16 %v373
    %v1219 = vunpack.c.h.b16 %v373
    %v1220 = vunpack.c.l.b16 %v374
    %v1221 = vunpack.c.h.b16 %v374
    %v1222 = vunpack.c.l.b16 %v375
    %v1223 = vunpack.c.h.b16 %v375
    %v1224 = vunpack.c.l.b16 %v376
    %v1225 = vunpack.c.h.b16 %v376
    %v1226 = vunpack.c.l.b16 %v377
    %v1227 = vunpack.c.h.b16 %v377
    %v1228 = vunpack.c.l.b16 %v378
    %v1229 = vunpack.c.h.b16 %v378
    %v1230 = vunpack.c.l.b16 %v379
    %v1231 = vunpack.c.h.b16 %v379
    %v1232 = vunpack.c.l.b16 %v380
    %v1233 = vunpack.c.h.b16 %v380
    %v1234 = vunpack.c.l.b16 %v381
    %v1235 = vunpack.c.h.b16 %v381
    %v1236 = vunpack.c.l.b16 %v382
    %v1237 = vunpack.c.h.b16 %v382
    %v1238 = vunpack.c.l.b16 %v383
    %v1239 = vunpack.c.h.b16 %v383
    %v1240 = vunpack.c.l.b16 %v384
    %v1241 = vunpack.c.h.b16 %v384
    %v1242 = vunpack.c.l.b16 %v385
    %v1243 = vunpack.c.h.b16 %v385
    %v1244 = vunpack.c.l.b16 %v386
    %v1245 = vunpack.c.h.b16 %v386
    %v1246 = vunpack.c.l.b16 %v387
    %v1247 = vunpack.c.h.b16 %v387
    %v1248 = vunpack.c.l.b16 %v388
    %v1249 = vunpack.c.h.b16 %v388
    %v1250 = vunpack.c.l.b16 %v389
    %v1251 = vunpack.c.h.b16 %v389
    %v1252 = vunpack.c.l.b16 %v390
    %v1253 = vunpack.c.h.b16 %v390
    %v1254 = vunpack.c.l.b16 %v391
    %v1255 = vunpack.c.h.b16 %v391
    %v1256 = vpack.c.b16 %v692, %v680
    %v1257 = vpack.c.b16 %v693, %v681
    %v1258 = vpack.c.b16 %v694, %v682
    %v1259 = vpack.c.b16 %v695, %v683
    %v1260 = vpack.c.b16 %v696, %v684
    %v1261 = vpack.c.b16 %v697, %v685
    %v1262 = vpack.c.b16 %v698, %v686
    %v1263 = vpack.c.b16 %v699, %v687
    %v1264 = vpack.c.b16 %v700, %v688
    %v1265 = vpack.c.b16 %v701, %v689
    %v1266 = vpack.c.b16 %v702, %v690
    %v1267 = vpack.c.b16 %v703, %v691
    %v1268 = vpack.c.b16 %v716, %v704
    %v1269 = vpack.c.b16 %v717, %v705
    %v1270 = vpack.c.b16 %v718, %v706
    %v1271 = vpack.c.b16 %v719, %v707
    %v1272 = vpack.c.b16 %v720, %v708
    %v1273 = vpack.c.b16 %v721, %v709
    %v1274 = vpack.c.b16 %v722, %v710
    %v1275 = vpack.c.b16 %v723, %v711
    %v1276 = vpack.c.b16 %v724, %v712
    %v1277 = vpack.c.b16 %v725, %v713
    %v1278 = vpack.c.b16 %v726, %v714
    %v1279 = vpack.c.b16 %v727, %v715
    %v1280 = vpack.c.b16 %v740, %v728
    %v1281 = vpack.c.b16 %v741, %v729
    %v1282 = vpack.c.b16 %v742, %v730
    %v1283 = vpack.c.b16 %v743, %v731
    %v1284 = vpack.c.b16 %v744, %v732
    %v1285 = vpack.c.b16 %v745, %v733
    %v1286 = vpack.c.b16 %v746, %v734
    %v1287 = vpack.c.b16 %v747, %v735
    %v1288 = vpack.c.b16 %v748, %v736
    %v1289 = vpack.c.b16 %v749, %v737
    %v1290 = vpack.c.b16 %v750, %v738
    %v1291 = vpack.c.b16 %v751, %v739
    %v1292 = vpack.c.b16 %v764, %v752
    %v1293 = vpack.c.b16 %v765, %v753
    %v1294 = vpack.c.b16 %v766, %v754
    %v1295 = vpack.c.b16 %v767, %v755
    %v1296 = vpack.c.b16 %v768, %v756
    %v1297 = vpack.c.b16 %v769, %v757
    %v1298 = vpack.c.b16 %v770, %v758
    %v1299 = vpack.c.b16 %v771, %v759
    %v1300 = vpack.c.b16 %v772, %v760
    %v1301 = vpack.c.b16 %v773, %v761
    %v1302 = vpack.c.b16 %v774, %v762
    %v1303 = vpack.c.b16 %v775, %v763
    %v1304 = vpack.c.b16 %v788, %v776
    %v1305 = vpack.c.b16 %v789, %v777
    %v1306 = vpack.c.b16 %v790, %v778
    %v1307 = vpack.c.b16 %v791, %v779
    %v1308 = vpack.c.b16 %v792, %v780
    %v1309 = vpack.c.b16 %v793, %v781
    %v1310 = vpack.c.b16 %v794, %v782
    %v1311 = vpack.c.b16 %v795, %v783
    %v1312 = vpack.c.b16 %v796, %v784
    %v1313 = vpack.c.b16 %v797, %v785
    %v1314 = vpack.c.b16 %v798, %v786
    %v1315 = vpack.c.b16 %v799, %v787
    %v1316 = vpack.c.b16 %v812, %v800
    %v1317 = vpack.c.b16 %v813, %v801
    %v1318 = vpack.c.b16 %v814, %v802
    %v1319 = vpack.c.b16 %v815, %v803
    %v1320 = vpack.c.b16 %v816, %v804
    %v1321 = vpack.c.b16 %v817, %v805
    %v1322 = vpack.c.b16 %v818, %v806
    %v1323 = vpack.c.b16 %v819, %v807
    %v1324 = vpack.c.b16 %v820, %v808
    %v1325 = vpack.c.b16 %v821, %v809
    %v1326 = vpack.c.b16 %v822, %v810
    %v1327 = vpack.c.b16 %v823, %v811
    %v1328 = vpack.c.b16 %v836, %v824
    %v1329 = vpack.c.b16 %v837, %v825
    %v1330 = vpack.c.b16 %v838, %v826
    %v1331 = vpack.c.b16 %v839, %v827
    %v1332 = vpack.c.b16 %v840, %v828
    %v1333 = vpack.c.b16 %v841, %v829
    %v1334 = vpack.c.b16 %v842, %v830
    %v1335 = vpack.c.b16 %v843, %v831
    %v1336 = vpack.c.b16 %v844, %v832
    %v1337 = vpack.c.b16 %v845, %v833
    %v1338 = vpack.c.b16 %v846, %v834
    %v1339 = vpack.c.b16 %v847, %v835
    %v1340 = vpack.c.b16 %v860, %v848
    %v1341 = vpack.c.b16 %v861, %v849
    %v1342 = vpack.c.b16 %v862, %v850
    %v1343 = vpack.c.b16 %v863, %v851
    %v1344 = vpack.c.b16 %v864, %v852
    %v1345 = vpack.c.b16 %v865, %v853
    %v1346 = vpack.c.b16 %v866, %v854
    %v1347 = vpack.c.b16 %v867, %v855
    %v1348 = vpack.c.b16 %v868, %v856
    %v1349 = vpack.c.b16 %v869, %v857
    %v1350 = vpack.c.b16 %v870, %v858
    %v1351 = vpack.c.b16 %v871, %v859
    %v1352 = vpack.c.b16 %v884, %v872
    %v1353 = vpack.c.b16 %v885, %v873
    %v1354 = vpack.c.b16 %v886, %v874
    %v1355 = vpack.c.b16 %v887, %v875
    %v1356 = vpack.c.b16 %v888, %v876
    %v1357 = vpack.c.b16 %v889, %v877
    %v1358 = vpack.c.b16 %v890, %v878
    %v1359 = vpack.c.b16 %v891, %v879
    %v1360 = vpack.c.b16 %v892, %v880
    %v1361 = vpack.c.b16 %v893, %v881
    %v1362 = vpack.c.b16 %v894, %v882
    %v1363 = vpack.c.b16 %v895, %v883
    %v1364 = vpack.c.b16 %v908, %v896
    %v1365 = vpack.c.b16 %v909, %v897
    %v1366 = vpack.c.b16 %v910, %v898
    %v1367 = vpack.c.b16 %v911, %v899
    %v1368 = vpack.c.b16 %v912, %v900
    %v1369 = vpack.c.b16 %v913, %v901
    %v1370 = vpack.c.b16 %v914, %v902
    %v1371 = vpack.c.b16 %v915, %v903
    %v1372 = vpack.c.b16 %v916, %v904
    %v1373 = vpack.c.b16 %v917, %v905
    %v1374 = vpack.c.b16 %v918, %v906
    %v1375 = vpack.c.b16 %v919, %v907
    %v1376 = vpack.c.b16 %v932, %v920
    %v1377 = vpack.c.b16 %v933, %v921
    %v1378 = vpack.c.b16 %v934, %v922
    %v1379 = vpack.c.b16 %v935, %v923
    %v1380 = vpack.c.b16 %v936, %v924
    %v1381 = vpack.c.b16 %v937, %v925
    %v1382 = vpack.c.b16 %v938, %v926
    %v1383 = vpack.c.b16 %v939, %v927
    %v1384 = vpack.c.b16 %v940, %v928
    %v1385 = vpack.c.b16 %v941, %v929
    %v1386 = vpack.c.b16 %v942, %v930
    %v1387 = vpack.c.b16 %v943, %v931
    %v1388 = vpack.c.b16 %v956, %v944
    %v1389 = vpack.c.b16 %v957, %v945
    %v1390 = vpack.c.b16 %v958, %v946
    %v1391 = vpack.c.b16 %v959, %v947
    %v1392 = vpack.c.b16 %v960, %v948
    %v1393 = vpack.c.b16 %v961, %v949
    %v1394 = vpack.c.b16 %v962, %v950
    %v1395 = vpack.c.b16 %v963, %v951
    %v1396 = vpack.c.b16 %v964, %v952
    %v1397 = vpack.c.b16 %v965, %v953
    %v1398 = vpack.c.b16 %v966, %v954
    %v1399 = vpack.c.b16 %v967, %v955
    %v1400 = vpack.c.b16 %v980, %v968
    %v1401 = vpack.c.b16 %v981, %v969
    %v1402 = vpack.c.b16 %v982, %v970
    %v1403 = vpack.c.b16 %v983, %v971
    %v1404 = vpack.c.b16 %v984, %v972
    %v1405 = vpack.c.b16 %v985, %v973
    %v1406 = vpack.c.b16 %v986, %v974
    %v1407 = vpack.c.b16 %v987, %v975
    %v1408 = vpack.c.b16 %v988, %v976
    %v1409 = vpack.c.b16 %v989, %v977
    %v1410 = vpack.c.b16 %v990, %v978
    %v1411 = vpack.c.b16 %v991, %v979
    %v1412 = vpack.c.b16 %v1004, %v992
    %v1413 = vpack.c.b16 %v1005, %v993
    %v1414 = vpack.c.b16 %v1006, %v994
    %v1415 = vpack.c.b16 %v1007, %v995
    %v1416 = vpack.c.b16 %v1008, %v996
    %v1417 = vpack.c.b16 %v1009, %v997
    %v1418 = vpack.c.b16 %v1010, %v998
    %v1419 = vpack.c.b16 %v1011, %v999
    %v1420 = vpack.c.b16 %v1012, %v1000
    %v1421 = vpack.c.b16 %v1013, %v1001
    %v1422 = vpack.c.b16 %v1014, %v1002
    %v1423 = vpack.c.b16 %v1015, %v1003
    %v1424 = vpack.c.b16 %v1028, %v1016
    %v1425 = vpack.c.b16 %v1029, %v1017
    %v1426 = vpack.c.b16 %v1030, %v1018
    %v1427 = vpack.c.b16 %v1031, %v1019
    %v1428 = vpack.c.b16 %v1032, %v1020
    %v1429 = vpack.c.b16 %v1033, %v1021
    %v1430 = vpack.c.b16 %v1034, %v1022
    %v1431 = vpack.c.b16 %v1035, %v1023
    %v1432 = vpack.c.b16 %v1036, %v1024
    %v1433 = vpack.c.b16 %v1037, %v1025
    %v1434 = vpack.c.b16 %v1038, %v1026
    %v1435 = vpack.c.b16 %v1039, %v1027
    %v1436 = vpack.c.b16 %v1052, %v1040
    %v1437 = vpack.c.b16 %v1053, %v1041
    %v1438 = vpack.c.b16 %v1054, %v1042
    %v1439 = vpack.c.b16 %v1055, %v1043
    %v1440 = vpack.c.b16 %v1056, %v1044
    %v1441 = vpack.c.b16 %v1057, %v1045
    %v1442 = vpack.c.b16 %v1058, %v1046
    %v1443 = vpack.c.b16 %v1059, %v1047
    %v1444 = vpack.c.b16 %v1060, %v1048
    %v1445 = vpack.c.b16 %v1061, %v1049
    %v1446 = vpack.c.b16 %v1062, %v1050
    %v1447 = vpack.c.b16 %v1063, %v1051
    %v1448 = vpack.c.b16 %v1076, %v1064
    %v1449 = vpack.c.b16 %v1077, %v1065
    %v1450 = vpack.c.b16 %v1078, %v1066
    %v1451 = vpack.c.b16 %v1079, %v1067
    %v1452 = vpack.c.b16 %v1080, %v1068
    %v1453 = vpack.c.b16 %v1081, %v1069
    %v1454 = vpack.c.b16 %v1082, %v1070
    %v1455 = vpack.c.b16 %v1083, %v1071
    %v1456 = vpack.c.b16 %v1084, %v1072
    %v1457 = vpack.c.b16 %v1085, %v1073
    %v1458 = vpack.c.b16 %v1086, %v1074
    %v1459 = vpack.c.b16 %v1087, %v1075
    %v1460 = vpack.c.b16 %v1100, %v1088
    %v1461 = vpack.c.b16 %v1101, %v1089
    %v1462 = vpack.c.b16 %v1102, %v1090
    %v1463 = vpack.c.b16 %v1103, %v1091
    %v1464 = vpack.c.b16 %v1104, %v1092
    %v1465 = vpack.c.b16 %v1105, %v1093
    %v1466 = vpack.c.b16 %v1106, %v1094
    %v1467 = vpack.c.b16 %v1107, %v1095
    %v1468 = vpack.c.b16 %v1108, %v1096
    %v1469 = vpack.c.b16 %v1109, %v1097
    %v1470 = vpack.c.b16 %v1110, %v1098
    %v1471 = vpack.c.b16 %v1111, %v1099
    %v1472 = vpack.c.b16 %v1124, %v1112
    %v1473 = vpack.c.b16 %v1125, %v1113
    %v1474 = vpack.c.b16 %v1126, %v1114
    %v1475 = vpack.c.b16 %v1127, %v1115
    %v1476 = vpack.c.b16 %v1128, %v1116
    %v1477 = vpack.c.b16 %v1129, %v1117
    %v1478 = vpack.c.b16 %v1130, %v1118
    %v1479 = vpack.c.b16 %v1131, %v1119
    %v1480 = vpack.c.b16 %v1132, %v1120
    %v1481 = vpack.c.b16 %v1133, %v1121
    %v1482 = vpack.c.b16 %v1134, %v1122
    %v1483 = vpack.c.b16 %v1135, %v1123
    %v1484 = vpack.c.b16 %v1148, %v1136
    %v1485 = vpack.c.b16 %v1149, %v1137
    %v1486 = vpack.c.b16 %v1150, %v1138
    %v1487 = vpack.c.b16 %v1151, %v1139
    %v1488 = vpack.c.b16 %v1152, %v1140
    %v1489 = vpack.c.b16 %v1153, %v1141
    %v1490 = vpack.c.b16 %v1154, %v1142
    %v1491 = vpack.c.b16 %v1155, %v1143
    %v1492 = vpack.c.b16 %v1156, %v1144
    %v1493 = vpack.c.b16 %v1157, %v1145
    %v1494 = vpack.c.b16 %v1158, %v1146
    %v1495 = vpack.c.b16 %v1159, %v1147
    %v1496 = vpack.c.b16 %v1172, %v1160
    %v1497 = vpack.c.b16 %v1173, %v1161
    %v1498 = vpack.c.b16 %v1174, %v1162
    %v1499 = vpack.c.b16 %v1175, %v1163
    %v1500 = vpack.c.b16 %v1176, %v1164
    %v1501 = vpack.c.b16 %v1177, %v1165
    %v1502 = vpack.c.b16 %v1178, %v1166
    %v1503 = vpack.c.b16 %v1179, %v1167
    %v1504 = vpack.c.b16 %v1180, %v1168
    %v1505 = vpack.c.b16 %v1181, %v1169
    %v1506 = vpack.c.b16 %v1182, %v1170
    %v1507 = vpack.c.b16 %v1183, %v1171
    %v1508 = vpack.c.b16 %v1196, %v1184
    %v1509 = vpack.c.b16 %v1197, %v1185
    %v1510 = vpack.c.b16 %v1198, %v1186
    %v1511 = vpack.c.b16 %v1199, %v1187
    %v1512 = vpack.c.b16 %v1200, %v1188
    %v1513 = vpack.c.b16 %v1201, %v1189
    %v1514 = vpack.c.b16 %v1202, %v1190
    %v1515 = vpack.c.b16 %v1203, %v1191
    %v1516 = vpack.c.b16 %v1204, %v1192
    %v1517 = vpack.c.b16 %v1205, %v1193
    %v1518 = vpack.c.b16 %v1206, %v1194
    %v1519 = vpack.c.b16 %v1207, %v1195
    %v1520 = vpack.c.b16 %v1220, %v1208
    %v1521 = vpack.c.b16 %v1221, %v1209
    %v1522 = vpack.c.b16 %v1222, %v1210
    %v1523 = vpack.c.b16 %v1223, %v1211
    %v1524 = vpack.c.b16 %v1224, %v1212
    %v1525 = vpack.c.b16 %v1225, %v1213
    %v1526 = vpack.c.b16 %v1226, %v1214
    %v1527 = vpack.c.b16 %v1227, %v1215
    %v1528 = vpack.c.b16 %v1228, %v1216
    %v1529 = vpack.c.b16 %v1229, %v1217
    %v1530 = vpack.c.b16 %v1230, %v1218
    %v1531 = vpack.c.b16 %v1231, %v1219
    %v1532 = vpack.c.b16 %v1244, %v1232
    %v1533 = vpack.c.b16 %v1245, %v1233
    %v1534 = vpack.c.b16 %v1246, %v1234
    %v1535 = vpack.c.b16 %v1247, %v1235
    %v1536 = vpack.c.b16 %v1248, %v1236
    %v1537 = vpack.c.b16 %v1249, %v1237
    %v1538 = vpack.c.b16 %v1250, %v1238
    %v1539 = vpack.c.b16 %v1251, %v1239
    %v1540 = vpack.c.b16 %v1252, %v1240
    %v1541 = vpack.c.b16 %v1253, %v1241
    %v1542 = vpack.c.b16 %v1254, %v1242
    %v1543 = vpack.c.b16 %v1255, %v1243
    %1832 = vmatpush.bf16.msra.mxu0 %v1340
    %1833 = vmatpush.bf16.msra.mxu0 %v1328
    %1834 = vmatpush.bf16.msra.mxu0 %v1316
    %1835 = vmatpush.bf16.msra.mxu0 %v1304
    %1836 = vmatpush.bf16.msra.mxu0 %v1292
    %1837 = vmatpush.bf16.msra.mxu0 %v1280
    %1838 = vmatpush.bf16.msra.mxu0 %v1268
    %1839 = vmatpush.bf16.msra.mxu0 %v1256
    %1840 = vmatmul.bf16.gmra.mxu0 %v101
    %v1841 = vpop.f32.mrf.mxu0
    %v1842 = vadd.f32 0.0, %v1841
    %v1843 = vpop.f32.mrf.mxu0
    %v1844 = vadd.f32 0.0, %v1843
    %1845 = vdwg.mxu0
    %1846 = vmatpush.bf16.msra.mxu0 %v1436
    %1847 = vmatpush.bf16.msra.mxu0 %v1424
    %1848 = vmatpush.bf16.msra.mxu0 %v1412
    %1849 = vmatpush.bf16.msra.mxu0 %v1400
    %1850 = vmatpush.bf16.msra.mxu0 %v1388
    %1851 = vmatpush.bf16.msra.mxu0 %v1376
    %1852 = vmatpush.bf16.msra.mxu0 %v1364
    %1853 = vmatpush.bf16.msra.mxu0 %v1352
    %1854 = vmatmul.bf16.gmra.mxu0 %v102
    %v1855 = vpop.f32.mrf.mxu0
    %v1856 = vadd.f32 %v1842, %v1855
    %v1857 = vpop.f32.mrf.mxu0
    %v1858 = vadd.f32 %v1844, %v1857
    %1859 = vdwg.mxu0
    %1860 = vmatpush.bf16.msra.mxu0 %v1532
    %1861 = vmatpush.bf16.msra.mxu0 %v1520
    %1862 = vmatpush.bf16.msra.mxu0 %v1508
    %1863 = vmatpush.bf16.msra.mxu0 %v1496
    %1864 = vmatpush.bf16.msra.mxu0 %v1484
    %1865 = vmatpush.bf16.msra.mxu0 %v1472
    %1866 = vmatpush.bf16.msra.mxu0 %v1460
    %1867 = vmatpush.bf16.msra.mxu0 %v1448
    %1868 = vmatmul.bf16.gmra.mxu0 %v103
    %v1869 = vpop.f32.mrf.mxu0
    %v1870 = vadd.f32 %v1856, %v1869
    %v1871 = vpop.f32.mrf.mxu0
    %v1872 = vadd.f32 %v1858, %v1871
    %1873 = vdwg.mxu0
    %1874 = vmatpush.bf16.msra.mxu0 %v1341
    %1875 = vmatpush.bf16.msra.mxu0 %v1329
    %1876 = vmatpush.bf16.msra.mxu0 %v1317
    %1877 = vmatpush.bf16.msra.mxu0 %v1305
    %1878 = vmatpush.bf16.msra.mxu0 %v1293
    %1879 = vmatpush.bf16.msra.mxu0 %v1281
    %1880 = vmatpush.bf16.msra.mxu0 %v1269
    %1881 = vmatpush.bf16.msra.mxu0 %v1257
    %1882 = vmatmul.bf16.gmra.mxu0 %v101
    %v1883 = vpop.f32.mrf.mxu0
    %v1884 = vadd.f32 0.0, %v1883
    %v1885 = vpop.f32.mrf.mxu0
    %v1886 = vadd.f32 0.0, %v1885
    %1887 = vdwg.mxu0
    %1888 = vmatpush.bf16.msra.mxu0 %v1437
    %1889 = vmatpush.bf16.msra.mxu0 %v1425
    %1890 = vmatpush.bf16.msra.mxu0 %v1413
    %1891 = vmatpush.bf16.msra.mxu0 %v1401
    %1892 = vmatpush.bf16.msra.mxu0 %v1389
    %1893 = vmatpush.bf16.msra.mxu0 %v1377
    %1894 = vmatpush.bf16.msra.mxu0 %v1365
    %1895 = vmatpush.bf16.msra.mxu0 %v1353
    %1896 = vmatmul.bf16.gmra.mxu0 %v102
    %v1897 = vpop.f32.mrf.mxu0
    %v1898 = vadd.f32 %v1884, %v1897
    %v1899 = vpop.f32.mrf.mxu0
    %v1900 = vadd.f32 %v1886, %v1899
    %1901 = vdwg.mxu0
    %1902 = vmatpush.bf16.msra.mxu0 %v1533
    %1903 = vmatpush.bf16.msra.mxu0 %v1521
    %1904 = vmatpush.bf16.msra.mxu0 %v1509
    %1905 = vmatpush.bf16.msra.mxu0 %v1497
    %1906 = vmatpush.bf16.msra.mxu0 %v1485
    %1907 = vmatpush.bf16.msra.mxu0 %v1473
    %1908 = vmatpush.bf16.msra.mxu0 %v1461
    %1909 = vmatpush.bf16.msra.mxu0 %v1449
    %1910 = vmatmul.bf16.gmra.mxu0 %v103
    %v1911 = vpop.f32.mrf.mxu0
    %v1912 = vadd.f32 %v1898, %v1911
    %v1913 = vpop.f32.mrf.mxu0
    %v1914 = vadd.f32 %v1900, %v1913
    %1915 = vdwg.mxu0
    %1916 = vmatpush.bf16.msra.mxu0 %v1342
    %1917 = vmatpush.bf16.msra.mxu0 %v1330
    %1918 = vmatpush.bf16.msra.mxu0 %v1318
    %1919 = vmatpush.bf16.msra.mxu0 %v1306
    %1920 = vmatpush.bf16.msra.mxu0 %v1294
    %1921 = vmatpush.bf16.msra.mxu0 %v1282
    %1922 = vmatpush.bf16.msra.mxu0 %v1270
    %1923 = vmatpush.bf16.msra.mxu0 %v1258
    %1924 = vmatmul.bf16.gmra.mxu0 %v101
    %v1925 = vpop.f32.mrf.mxu0
    %v1926 = vadd.f32 0.0, %v1925
    %v1927 = vpop.f32.mrf.mxu0
    %v1928 = vadd.f32 0.0, %v1927
    %1929 = vdwg.mxu0
    %1930 = vmatpush.bf16.msra.mxu0 %v1438
    %1931 = vmatpush.bf16.msra.mxu0 %v1426
    %1932 = vmatpush.bf16.msra.mxu0 %v1414
    %1933 = vmatpush.bf16.msra.mxu0 %v1402
    %1934 = vmatpush.bf16.msra.mxu0 %v1390
    %1935 = vmatpush.bf16.msra.mxu0 %v1378
    %1936 = vmatpush.bf16.msra.mxu0 %v1366
    %1937 = vmatpush.bf16.msra.mxu0 %v1354
    %1938 = vmatmul.bf16.gmra.mxu0 %v102
    %v1939 = vpop.f32.mrf.mxu0
    %v1940 = vadd.f32 %v1926, %v1939
    %v1941 = vpop.f32.mrf.mxu0
    %v1942 = vadd.f32 %v1928, %v1941
    %1943 = vdwg.mxu0
    %1944 = vmatpush.bf16.msra.mxu0 %v1534
    %1945 = vmatpush.bf16.msra.mxu0 %v1522
    %1946 = vmatpush.bf16.msra.mxu0 %v1510
    %1947 = vmatpush.bf16.msra.mxu0 %v1498
    %1948 = vmatpush.bf16.msra.mxu0 %v1486
    %1949 = vmatpush.bf16.msra.mxu0 %v1474
    %1950 = vmatpush.bf16.msra.mxu0 %v1462
    %1951 = vmatpush.bf16.msra.mxu0 %v1450
    %1952 = vmatmul.bf16.gmra.mxu0 %v103
    %v1953 = vpop.f32.mrf.mxu0
    %v1954 = vadd.f32 %v1940, %v1953
    %v1955 = vpop.f32.mrf.mxu0
    %v1956 = vadd.f32 %v1942, %v1955
    %1957 = vdwg.mxu0
    %1958 = vmatpush.bf16.msra.mxu0 %v1343
    %1959 = vmatpush.bf16.msra.mxu0 %v1331
    %1960 = vmatpush.bf16.msra.mxu0 %v1319
    %1961 = vmatpush.bf16.msra.mxu0 %v1307
    %1962 = vmatpush.bf16.msra.mxu0 %v1295
    %1963 = vmatpush.bf16.msra.mxu0 %v1283
    %1964 = vmatpush.bf16.msra.mxu0 %v1271
    %1965 = vmatpush.bf16.msra.mxu0 %v1259
    %1966 = vmatmul.bf16.gmra.mxu0 %v101
    %v1967 = vpop.f32.mrf.mxu0
    %v1968 = vadd.f32 0.0, %v1967
    %v1969 = vpop.f32.mrf.mxu0
    %v1970 = vadd.f32 0.0, %v1969
    %1971 = vdwg.mxu0
    %1972 = vmatpush.bf16.msra.mxu0 %v1439
    %1973 = vmatpush.bf16.msra.mxu0 %v1427
    %1974 = vmatpush.bf16.msra.mxu0 %v1415
    %1975 = vmatpush.bf16.msra.mxu0 %v1403
    %1976 = vmatpush.bf16.msra.mxu0 %v1391
    %1977 = vmatpush.bf16.msra.mxu0 %v1379
    %1978 = vmatpush.bf16.msra.mxu0 %v1367
    %1979 = vmatpush.bf16.msra.mxu0 %v1355
    %1980 = vmatmul.bf16.gmra.mxu0 %v102
    %v1981 = vpop.f32.mrf.mxu0
    %v1982 = vadd.f32 %v1968, %v1981
    %v1983 = vpop.f32.mrf.mxu0
    %v1984 = vadd.f32 %v1970, %v1983
    %1985 = vdwg.mxu0
    %1986 = vmatpush.bf16.msra.mxu0 %v1535
    %1987 = vmatpush.bf16.msra.mxu0 %v1523
    %1988 = vmatpush.bf16.msra.mxu0 %v1511
    %1989 = vmatpush.bf16.msra.mxu0 %v1499
    %1990 = vmatpush.bf16.msra.mxu0 %v1487
    %1991 = vmatpush.bf16.msra.mxu0 %v1475
    %1992 = vmatpush.bf16.msra.mxu0 %v1463
    %1993 = vmatpush.bf16.msra.mxu0 %v1451
    %1994 = vmatmul.bf16.gmra.mxu0 %v103
    %v1995 = vpop.f32.mrf.mxu0
    %v1996 = vadd.f32 %v1982, %v1995
    %v1997 = vpop.f32.mrf.mxu0
    %v1998 = vadd.f32 %v1984, %v1997
    %1999 = vdwg.mxu0
    %2000 = vmatpush.bf16.msra.mxu0 %v1344
    %2001 = vmatpush.bf16.msra.mxu0 %v1332
    %2002 = vmatpush.bf16.msra.mxu0 %v1320
    %2003 = vmatpush.bf16.msra.mxu0 %v1308
    %2004 = vmatpush.bf16.msra.mxu0 %v1296
    %2005 = vmatpush.bf16.msra.mxu0 %v1284
    %2006 = vmatpush.bf16.msra.mxu0 %v1272
    %2007 = vmatpush.bf16.msra.mxu0 %v1260
    %2008 = vmatmul.bf16.gmra.mxu0 %v101
    %v2009 = vpop.f32.mrf.mxu0
    %v2010 = vadd.f32 0.0, %v2009
    %v2011 = vpop.f32.mrf.mxu0
    %v2012 = vadd.f32 0.0, %v2011
    %2013 = vdwg.mxu0
    %2014 = vmatpush.bf16.msra.mxu0 %v1440
    %2015 = vmatpush.bf16.msra.mxu0 %v1428
    %2016 = vmatpush.bf16.msra.mxu0 %v1416
    %2017 = vmatpush.bf16.msra.mxu0 %v1404
    %2018 = vmatpush.bf16.msra.mxu0 %v1392
    %2019 = vmatpush.bf16.msra.mxu0 %v1380
    %2020 = vmatpush.bf16.msra.mxu0 %v1368
    %2021 = vmatpush.bf16.msra.mxu0 %v1356
    %2022 = vmatmul.bf16.gmra.mxu0 %v102
    %v2023 = vpop.f32.mrf.mxu0
    %v2024 = vadd.f32 %v2010, %v2023
    %v2025 = vpop.f32.mrf.mxu0
    %v2026 = vadd.f32 %v2012, %v2025
    %2027 = vdwg.mxu0
    %2028 = vmatpush.bf16.msra.mxu0 %v1536
    %2029 = vmatpush.bf16.msra.mxu0 %v1524
    %2030 = vmatpush.bf16.msra.mxu0 %v1512
    %2031 = vmatpush.bf16.msra.mxu0 %v1500
    %2032 = vmatpush.bf16.msra.mxu0 %v1488
    %2033 = vmatpush.bf16.msra.mxu0 %v1476
    %2034 = vmatpush.bf16.msra.mxu0 %v1464
    %2035 = vmatpush.bf16.msra.mxu0 %v1452
    %2036 = vmatmul.bf16.gmra.mxu0 %v103
    %v2037 = vpop.f32.mrf.mxu0
    %v2038 = vadd.f32 %v2024, %v2037
    %v2039 = vpop.f32.mrf.mxu0
    %v2040 = vadd.f32 %v2026, %v2039
    %2041 = vdwg.mxu0
    %2042 = vmatpush.bf16.msra.mxu0 %v1345
    %2043 = vmatpush.bf16.msra.mxu0 %v1333
    %2044 = vmatpush.bf16.msra.mxu0 %v1321
    %2045 = vmatpush.bf16.msra.mxu0 %v1309
    %2046 = vmatpush.bf16.msra.mxu0 %v1297
    %2047 = vmatpush.bf16.msra.mxu0 %v1285
    %2048 = vmatpush.bf16.msra.mxu0 %v1273
    %2049 = vmatpush.bf16.msra.mxu0 %v1261
    %2050 = vmatmul.bf16.gmra.mxu0 %v101
    %v2051 = vpop.f32.mrf.mxu0
    %v2052 = vadd.f32 0.0, %v2051
    %v2053 = vpop.f32.mrf.mxu0
    %v2054 = vadd.f32 0.0, %v2053
    %2055 = vdwg.mxu0
    %2056 = vmatpush.bf16.msra.mxu0 %v1441
    %2057 = vmatpush.bf16.msra.mxu0 %v1429
    %2058 = vmatpush.bf16.msra.mxu0 %v1417
    %2059 = vmatpush.bf16.msra.mxu0 %v1405
    %2060 = vmatpush.bf16.msra.mxu0 %v1393
    %2061 = vmatpush.bf16.msra.mxu0 %v1381
    %2062 = vmatpush.bf16.msra.mxu0 %v1369
    %2063 = vmatpush.bf16.msra.mxu0 %v1357
    %2064 = vmatmul.bf16.gmra.mxu0 %v102
    %v2065 = vpop.f32.mrf.mxu0
    %v2066 = vadd.f32 %v2052, %v2065
    %v2067 = vpop.f32.mrf.mxu0
    %v2068 = vadd.f32 %v2054, %v2067
    %2069 = vdwg.mxu0
    %2070 = vmatpush.bf16.msra.mxu0 %v1537
    %2071 = vmatpush.bf16.msra.mxu0 %v1525
    %2072 = vmatpush.bf16.msra.mxu0 %v1513
    %2073 = vmatpush.bf16.msra.mxu0 %v1501
    %2074 = vmatpush.bf16.msra.mxu0 %v1489
    %2075 = vmatpush.bf16.msra.mxu0 %v1477
    %2076 = vmatpush.bf16.msra.mxu0 %v1465
    %2077 = vmatpush.bf16.msra.mxu0 %v1453
    %2078 = vmatmul.bf16.gmra.mxu0 %v103
    %v2079 = vpop.f32.mrf.mxu0
    %v2080 = vadd.f32 %v2066, %v2079
    %v2081 = vpop.f32.mrf.mxu0
    %v2082 = vadd.f32 %v2068, %v2081
    %2083 = vdwg.mxu0
    %2084 = vmatpush.bf16.msra.mxu0 %v1346
    %2085 = vmatpush.bf16.msra.mxu0 %v1334
    %2086 = vmatpush.bf16.msra.mxu0 %v1322
    %2087 = vmatpush.bf16.msra.mxu0 %v1310
    %2088 = vmatpush.bf16.msra.mxu0 %v1298
    %2089 = vmatpush.bf16.msra.mxu0 %v1286
    %2090 = vmatpush.bf16.msra.mxu0 %v1274
    %2091 = vmatpush.bf16.msra.mxu0 %v1262
    %2092 = vmatmul.bf16.gmra.mxu0 %v101
    %v2093 = vpop.f32.mrf.mxu0
    %v2094 = vadd.f32 0.0, %v2093
    %v2095 = vpop.f32.mrf.mxu0
    %v2096 = vadd.f32 0.0, %v2095
    %2097 = vdwg.mxu0
    %2098 = vmatpush.bf16.msra.mxu0 %v1442
    %2099 = vmatpush.bf16.msra.mxu0 %v1430
    %2100 = vmatpush.bf16.msra.mxu0 %v1418
    %2101 = vmatpush.bf16.msra.mxu0 %v1406
    %2102 = vmatpush.bf16.msra.mxu0 %v1394
    %2103 = vmatpush.bf16.msra.mxu0 %v1382
    %2104 = vmatpush.bf16.msra.mxu0 %v1370
    %2105 = vmatpush.bf16.msra.mxu0 %v1358
    %2106 = vmatmul.bf16.gmra.mxu0 %v102
    %v2107 = vpop.f32.mrf.mxu0
    %v2108 = vadd.f32 %v2094, %v2107
    %v2109 = vpop.f32.mrf.mxu0
    %v2110 = vadd.f32 %v2096, %v2109
    %2111 = vdwg.mxu0
    %2112 = vmatpush.bf16.msra.mxu0 %v1538
    %2113 = vmatpush.bf16.msra.mxu0 %v1526
    %2114 = vmatpush.bf16.msra.mxu0 %v1514
    %2115 = vmatpush.bf16.msra.mxu0 %v1502
    %2116 = vmatpush.bf16.msra.mxu0 %v1490
    %2117 = vmatpush.bf16.msra.mxu0 %v1478
    %2118 = vmatpush.bf16.msra.mxu0 %v1466
    %2119 = vmatpush.bf16.msra.mxu0 %v1454
    %2120 = vmatmul.bf16.gmra.mxu0 %v103
    %v2121 = vpop.f32.mrf.mxu0
    %v2122 = vadd.f32 %v2108, %v2121
    %v2123 = vpop.f32.mrf.mxu0
    %v2124 = vadd.f32 %v2110, %v2123
    %2125 = vdwg.mxu0
    %2126 = vmatpush.bf16.msra.mxu0 %v1347
    %2127 = vmatpush.bf16.msra.mxu0 %v1335
    %2128 = vmatpush.bf16.msra.mxu0 %v1323
    %2129 = vmatpush.bf16.msra.mxu0 %v1311
    %2130 = vmatpush.bf16.msra.mxu0 %v1299
    %2131 = vmatpush.bf16.msra.mxu0 %v1287
    %2132 = vmatpush.bf16.msra.mxu0 %v1275
    %2133 = vmatpush.bf16.msra.mxu0 %v1263
    %2134 = vmatmul.bf16.gmra.mxu0 %v101
    %v2135 = vpop.f32.mrf.mxu0
    %v2136 = vadd.f32 0.0, %v2135
    %v2137 = vpop.f32.mrf.mxu0
    %v2138 = vadd.f32 0.0, %v2137
    %2139 = vdwg.mxu0
    %2140 = vmatpush.bf16.msra.mxu0 %v1443
    %2141 = vmatpush.bf16.msra.mxu0 %v1431
    %2142 = vmatpush.bf16.msra.mxu0 %v1419
    %2143 = vmatpush.bf16.msra.mxu0 %v1407
    %2144 = vmatpush.bf16.msra.mxu0 %v1395
    %2145 = vmatpush.bf16.msra.mxu0 %v1383
    %2146 = vmatpush.bf16.msra.mxu0 %v1371
    %2147 = vmatpush.bf16.msra.mxu0 %v1359
    %2148 = vmatmul.bf16.gmra.mxu0 %v102
    %v2149 = vpop.f32.mrf.mxu0
    %v2150 = vadd.f32 %v2136, %v2149
    %v2151 = vpop.f32.mrf.mxu0
    %v2152 = vadd.f32 %v2138, %v2151
    %2153 = vdwg.mxu0
    %2154 = vmatpush.bf16.msra.mxu0 %v1539
    %2155 = vmatpush.bf16.msra.mxu0 %v1527
    %2156 = vmatpush.bf16.msra.mxu0 %v1515
    %2157 = vmatpush.bf16.msra.mxu0 %v1503
    %2158 = vmatpush.bf16.msra.mxu0 %v1491
    %2159 = vmatpush.bf16.msra.mxu0 %v1479
    %2160 = vmatpush.bf16.msra.mxu0 %v1467
    %2161 = vmatpush.bf16.msra.mxu0 %v1455
    %2162 = vmatmul.bf16.gmra.mxu0 %v103
    %v2163 = vpop.f32.mrf.mxu0
    %v2164 = vadd.f32 %v2150, %v2163
    %v2165 = vpop.f32.mrf.mxu0
    %v2166 = vadd.f32 %v2152, %v2165
    %2167 = vdwg.mxu0
    %2168 = vmatpush.bf16.msra.mxu0 %v1348
    %2169 = vmatpush.bf16.msra.mxu0 %v1336
    %2170 = vmatpush.bf16.msra.mxu0 %v1324
    %2171 = vmatpush.bf16.msra.mxu0 %v1312
    %2172 = vmatpush.bf16.msra.mxu0 %v1300
    %2173 = vmatpush.bf16.msra.mxu0 %v1288
    %2174 = vmatpush.bf16.msra.mxu0 %v1276
    %2175 = vmatpush.bf16.msra.mxu0 %v1264
    %2176 = vmatmul.bf16.gmra.mxu0 %v101
    %v2177 = vpop.f32.mrf.mxu0
    %v2178 = vadd.f32 0.0, %v2177
    %v2179 = vpop.f32.mrf.mxu0
    %v2180 = vadd.f32 0.0, %v2179
    %2181 = vdwg.mxu0
    %2182 = vmatpush.bf16.msra.mxu0 %v1444
    %2183 = vmatpush.bf16.msra.mxu0 %v1432
    %2184 = vmatpush.bf16.msra.mxu0 %v1420
    %2185 = vmatpush.bf16.msra.mxu0 %v1408
    %2186 = vmatpush.bf16.msra.mxu0 %v1396
    %2187 = vmatpush.bf16.msra.mxu0 %v1384
    %2188 = vmatpush.bf16.msra.mxu0 %v1372
    %2189 = vmatpush.bf16.msra.mxu0 %v1360
    %2190 = vmatmul.bf16.gmra.mxu0 %v102
    %v2191 = vpop.f32.mrf.mxu0
    %v2192 = vadd.f32 %v2178, %v2191
    %v2193 = vpop.f32.mrf.mxu0
    %v2194 = vadd.f32 %v2180, %v2193
    %2195 = vdwg.mxu0
    %2196 = vmatpush.bf16.msra.mxu0 %v1540
    %2197 = vmatpush.bf16.msra.mxu0 %v1528
    %2198 = vmatpush.bf16.msra.mxu0 %v1516
    %2199 = vmatpush.bf16.msra.mxu0 %v1504
    %2200 = vmatpush.bf16.msra.mxu0 %v1492
    %2201 = vmatpush.bf16.msra.mxu0 %v1480
    %2202 = vmatpush.bf16.msra.mxu0 %v1468
    %2203 = vmatpush.bf16.msra.mxu0 %v1456
    %2204 = vmatmul.bf16.gmra.mxu0 %v103
    %v2205 = vpop.f32.mrf.mxu0
    %v2206 = vadd.f32 %v2192, %v2205
    %v2207 = vpop.f32.mrf.mxu0
    %v2208 = vadd.f32 %v2194, %v2207
    %2209 = vdwg.mxu0
    %2210 = vmatpush.bf16.msra.mxu0 %v1349
    %2211 = vmatpush.bf16.msra.mxu0 %v1337
    %2212 = vmatpush.bf16.msra.mxu0 %v1325
    %2213 = vmatpush.bf16.msra.mxu0 %v1313
    %2214 = vmatpush.bf16.msra.mxu0 %v1301
    %2215 = vmatpush.bf16.msra.mxu0 %v1289
    %2216 = vmatpush.bf16.msra.mxu0 %v1277
    %2217 = vmatpush.bf16.msra.mxu0 %v1265
    %2218 = vmatmul.bf16.gmra.mxu0 %v101
    %v2219 = vpop.f32.mrf.mxu0
    %v2220 = vadd.f32 0.0, %v2219
    %v2221 = vpop.f32.mrf.mxu0
    %v2222 = vadd.f32 0.0, %v2221
    %2223 = vdwg.mxu0
    %2224 = vmatpush.bf16.msra.mxu0 %v1445
    %2225 = vmatpush.bf16.msra.mxu0 %v1433
    %2226 = vmatpush.bf16.msra.mxu0 %v1421
    %2227 = vmatpush.bf16.msra.mxu0 %v1409
    %2228 = vmatpush.bf16.msra.mxu0 %v1397
    %2229 = vmatpush.bf16.msra.mxu0 %v1385
    %2230 = vmatpush.bf16.msra.mxu0 %v1373
    %2231 = vmatpush.bf16.msra.mxu0 %v1361
    %2232 = vmatmul.bf16.gmra.mxu0 %v102
    %v2233 = vpop.f32.mrf.mxu0
    %v2234 = vadd.f32 %v2220, %v2233
    %v2235 = vpop.f32.mrf.mxu0
    %v2236 = vadd.f32 %v2222, %v2235
    %2237 = vdwg.mxu0
    %2238 = vmatpush.bf16.msra.mxu0 %v1541
    %2239 = vmatpush.bf16.msra.mxu0 %v1529
    %2240 = vmatpush.bf16.msra.mxu0 %v1517
    %2241 = vmatpush.bf16.msra.mxu0 %v1505
    %2242 = vmatpush.bf16.msra.mxu0 %v1493
    %2243 = vmatpush.bf16.msra.mxu0 %v1481
    %2244 = vmatpush.bf16.msra.mxu0 %v1469
    %2245 = vmatpush.bf16.msra.mxu0 %v1457
    %2246 = vmatmul.bf16.gmra.mxu0 %v103
    %v2247 = vpop.f32.mrf.mxu0
    %v2248 = vadd.f32 %v2234, %v2247
    %v2249 = vpop.f32.mrf.mxu0
    %v2250 = vadd.f32 %v2236, %v2249
    %2251 = vdwg.mxu0
    %2252 = vmatpush.bf16.msra.mxu0 %v1350
    %2253 = vmatpush.bf16.msra.mxu0 %v1338
    %2254 = vmatpush.bf16.msra.mxu0 %v1326
    %2255 = vmatpush.bf16.msra.mxu0 %v1314
    %2256 = vmatpush.bf16.msra.mxu0 %v1302
    %2257 = vmatpush.bf16.msra.mxu0 %v1290
    %2258 = vmatpush.bf16.msra.mxu0 %v1278
    %2259 = vmatpush.bf16.msra.mxu0 %v1266
    %2260 = vmatmul.bf16.gmra.mxu0 %v101
    %v2261 = vpop.f32.mrf.mxu0
    %v2262 = vadd.f32 0.0, %v2261
    %v2263 = vpop.f32.mrf.mxu0
    %v2264 = vadd.f32 0.0, %v2263
    %2265 = vdwg.mxu0
    %2266 = vmatpush.bf16.msra.mxu0 %v1446
    %2267 = vmatpush.bf16.msra.mxu0 %v1434
    %2268 = vmatpush.bf16.msra.mxu0 %v1422
    %2269 = vmatpush.bf16.msra.mxu0 %v1410
    %2270 = vmatpush.bf16.msra.mxu0 %v1398
    %2271 = vmatpush.bf16.msra.mxu0 %v1386
    %2272 = vmatpush.bf16.msra.mxu0 %v1374
    %2273 = vmatpush.bf16.msra.mxu0 %v1362
    %2274 = vmatmul.bf16.gmra.mxu0 %v102
    %v2275 = vpop.f32.mrf.mxu0
    %v2276 = vadd.f32 %v2262, %v2275
    %v2277 = vpop.f32.mrf.mxu0
    %v2278 = vadd.f32 %v2264, %v2277
    %2279 = vdwg.mxu0
    %2280 = vmatpush.bf16.msra.mxu0 %v1542
    %2281 = vmatpush.bf16.msra.mxu0 %v1530
    %2282 = vmatpush.bf16.msra.mxu0 %v1518
    %2283 = vmatpush.bf16.msra.mxu0 %v1506
    %2284 = vmatpush.bf16.msra.mxu0 %v1494
    %2285 = vmatpush.bf16.msra.mxu0 %v1482
    %2286 = vmatpush.bf16.msra.mxu0 %v1470
    %2287 = vmatpush.bf16.msra.mxu0 %v1458
    %2288 = vmatmul.bf16.gmra.mxu0 %v103
    %v2289 = vpop.f32.mrf.mxu0
    %v2290 = vadd.f32 %v2276, %v2289
    %v2291 = vpop.f32.mrf.mxu0
    %v2292 = vadd.f32 %v2278, %v2291
    %2293 = vdwg.mxu0
    %2294 = vmatpush.bf16.msra.mxu0 %v1351
    %2295 = vmatpush.bf16.msra.mxu0 %v1339
    %2296 = vmatpush.bf16.msra.mxu0 %v1327
    %2297 = vmatpush.bf16.msra.mxu0 %v1315
    %2298 = vmatpush.bf16.msra.mxu0 %v1303
    %2299 = vmatpush.bf16.msra.mxu0 %v1291
    %2300 = vmatpush.bf16.msra.mxu0 %v1279
    %2301 = vmatpush.bf16.msra.mxu0 %v1267
    %2302 = vmatmul.bf16.gmra.mxu0 %v101
    %v2303 = vpop.f32.mrf.mxu0
    %v2304 = vadd.f32 0.0, %v2303
    %v2305 = vpop.f32.mrf.mxu0
    %v2306 = vadd.f32 0.0, %v2305
    %2307 = vdwg.mxu0
    %2308 = vmatpush.bf16.msra.mxu0 %v1447
    %2309 = vmatpush.bf16.msra.mxu0 %v1435
    %2310 = vmatpush.bf16.msra.mxu0 %v1423
    %2311 = vmatpush.bf16.msra.mxu0 %v1411
    %2312 = vmatpush.bf16.msra.mxu0 %v1399
    %2313 = vmatpush.bf16.msra.mxu0 %v1387
    %2314 = vmatpush.bf16.msra.mxu0 %v1375
    %2315 = vmatpush.bf16.msra.mxu0 %v1363
    %2316 = vmatmul.bf16.gmra.mxu0 %v102
    %v2317 = vpop.f32.mrf.mxu0
    %v2318 = vadd.f32 %v2304, %v2317
    %v2319 = vpop.f32.mrf.mxu0
    %v2320 = vadd.f32 %v2306, %v2319
    %2321 = vdwg.mxu0
    %2322 = vmatpush.bf16.msra.mxu0 %v1543
    %2323 = vmatpush.bf16.msra.mxu0 %v1531
    %2324 = vmatpush.bf16.msra.mxu0 %v1519
    %2325 = vmatpush.bf16.msra.mxu0 %v1507
    %2326 = vmatpush.bf16.msra.mxu0 %v1495
    %2327 = vmatpush.bf16.msra.mxu0 %v1483
    %2328 = vmatpush.bf16.msra.mxu0 %v1471
    %2329 = vmatpush.bf16.msra.mxu0 %v1459
    %2330 = vmatmul.bf16.gmra.mxu0 %v103
    %v2331 = vpop.f32.mrf.mxu0
    %v2332 = vadd.f32 %v2318, %v2331
    %v2333 = vpop.f32.mrf.mxu0
    %v2334 = vadd.f32 %v2320, %v2333
    %2335 = vdwg.mxu0
    %v2336 = vpack.c.bf16 %v1912, %v1870
    %v2337 = vpack.c.bf16 %v1996, %v1954
    %v2338 = vpack.c.bf16 %v2080, %v2038
    %v2339 = vpack.c.bf16 %v2164, %v2122
    %v2340 = vpack.c.bf16 %v2248, %v2206
    %v2341 = vpack.c.bf16 %v2332, %v2290
    %v2342 = vpack.c.bf16 %v1914, %v1872
    %v2343 = vpack.c.bf16 %v1998, %v1956
    %v2344 = vpack.c.bf16 %v2082, %v2040
    %v2345 = vpack.c.bf16 %v2166, %v2124
    %v2346 = vpack.c.bf16 %v2250, %v2208
    %v2347 = vpack.c.bf16 %v2334, %v2292
    %v2348 = vld [vmem:[#allocation7] sm:$0xff]
    %v2349 = vld [vmem:[#allocation7 + $0x8] sm:$0xf]
    %2351 = vst [vmem:[#allocation1] ss:$9 sm:$0xff] %v2348
    %v2352 = vld [vmem:[#allocation1] sm:$0xff]
    %v2353 = vld [vmem:[#allocation1 + $0x9] sm:$0xff]
    %v2354 = vld [vmem:[#allocation1 + $0x12] sm:$0xff]
    %v2355 = vld [vmem:[#allocation1 + $0x1b] sm:$0xff]
    %v2356 = vld [vmem:[#allocation1 + $0x24] sm:$0xff]
    %v2357 = vld [vmem:[#allocation1 + $0x2d] sm:$0xff]
    %v2358 = vld [vmem:[#allocation1 + $0x36] sm:$0xff]
    %v2359 = vld [vmem:[#allocation1 + $0x3f] sm:$0xff]
    %2361 = vst [vmem:[#allocation1] ss:$9 sm:$0xff] %v2349
    %v2362 = vld [vmem:[#allocation1] sm:$0xff]
    %v2363 = vld [vmem:[#allocation1 + $0x9] sm:$0xff]
    %v2364 = vld [vmem:[#allocation1 + $0x12] sm:$0xff]
    %v2365 = vld [vmem:[#allocation1 + $0x1b] sm:$0xff]
    %v2366 = vpack.i.b16 %v2352, %v2352
    %v2368 = vperm.slane %v2366, 0
    %v2369 = vpack.i.b16 %v2353, %v2353
    %v2371 = vperm.slane %v2369, 0
    %v2372 = vpack.i.b16 %v2354, %v2354
    %v2374 = vperm.slane %v2372, 0
    %v2375 = vpack.i.b16 %v2355, %v2355
    %v2377 = vperm.slane %v2375, 0
    %v2378 = vpack.i.b16 %v2356, %v2356
    %v2380 = vperm.slane %v2378, 0
    %v2381 = vpack.i.b16 %v2357, %v2357
    %v2383 = vperm.slane %v2381, 0
    %v2384 = vpack.i.b16 %v2358, %v2358
    %v2386 = vperm.slane %v2384, 0
    %v2387 = vpack.i.b16 %v2359, %v2359
    %v2389 = vperm.slane %v2387, 0
    %v2390 = vpack.i.b16 %v2362, %v2362
    %v2392 = vperm.slane %v2390, 0
    %v2393 = vpack.i.b16 %v2363, %v2363
    %v2395 = vperm.slane %v2393, 0
    %v2396 = vpack.i.b16 %v2364, %v2364
    %v2398 = vperm.slane %v2396, 0
    %v2399 = vpack.i.b16 %v2365, %v2365
    %v2401 = vperm.slane %v2399, 0
    %v2402 = vunpack.c.l.bf16 %v2336
    %v2403 = vunpack.c.h.bf16 %v2336
    %v2404 = vunpack.c.l.bf16 %v2337
    %v2405 = vunpack.c.h.bf16 %v2337
    %v2406 = vunpack.c.l.bf16 %v2338
    %v2407 = vunpack.c.h.bf16 %v2338
    %v2408 = vunpack.c.l.bf16 %v2339
    %v2409 = vunpack.c.h.bf16 %v2339
    %v2410 = vunpack.c.l.bf16 %v2340
    %v2411 = vunpack.c.h.bf16 %v2340
    %v2412 = vunpack.c.l.bf16 %v2341
    %v2413 = vunpack.c.h.bf16 %v2341
    %v2414 = vunpack.c.l.bf16 %v2342
    %v2415 = vunpack.c.h.bf16 %v2342
    %v2416 = vunpack.c.l.bf16 %v2343
    %v2417 = vunpack.c.h.bf16 %v2343
    %v2418 = vunpack.c.l.bf16 %v2344
    %v2419 = vunpack.c.h.bf16 %v2344
    %v2420 = vunpack.c.l.bf16 %v2345
    %v2421 = vunpack.c.h.bf16 %v2345
    %v2422 = vunpack.c.l.bf16 %v2346
    %v2423 = vunpack.c.h.bf16 %v2346
    %v2424 = vunpack.c.l.bf16 %v2347
    %v2425 = vunpack.c.h.bf16 %v2347
    %v2426 = vunpack.c.l.bf16 %v2368
    %v2427 = vunpack.c.l.bf16 %v2371
    %v2428 = vunpack.c.l.bf16 %v2374
    %v2429 = vunpack.c.l.bf16 %v2377
    %v2430 = vunpack.c.l.bf16 %v2380
    %v2431 = vunpack.c.l.bf16 %v2383
    %v2432 = vunpack.c.l.bf16 %v2386
    %v2433 = vunpack.c.l.bf16 %v2389
    %v2434 = vunpack.c.l.bf16 %v2392
    %v2435 = vunpack.c.l.bf16 %v2395
    %v2436 = vunpack.c.l.bf16 %v2398
    %v2437 = vunpack.c.l.bf16 %v2401
    %v2438 = vadd.f32 %v2402, %v2426
    %v2439 = vadd.f32 %v2403, %v2427
    %v2440 = vadd.f32 %v2404, %v2428
    %v2441 = vadd.f32 %v2405, %v2429
    %v2442 = vadd.f32 %v2406, %v2430
    %v2443 = vadd.f32 %v2407, %v2431
    %v2444 = vadd.f32 %v2408, %v2432
    %v2445 = vadd.f32 %v2409, %v2433
    %v2446 = vadd.f32 %v2410, %v2434
    %v2447 = vadd.f32 %v2411, %v2435
    %v2448 = vadd.f32 %v2412, %v2436
    %v2449 = vadd.f32 %v2413, %v2437
    %v2450 = vadd.f32 %v2414, %v2426
    %v2451 = vadd.f32 %v2415, %v2427
    %v2452 = vadd.f32 %v2416, %v2428
    %v2453 = vadd.f32 %v2417, %v2429
    %v2454 = vadd.f32 %v2418, %v2430
    %v2455 = vadd.f32 %v2419, %v2431
    %v2456 = vadd.f32 %v2420, %v2432
    %v2457 = vadd.f32 %v2421, %v2433
    %v2458 = vadd.f32 %v2422, %v2434
    %v2459 = vadd.f32 %v2423, %v2435
    %v2460 = vadd.f32 %v2424, %v2436
    %v2461 = vadd.f32 %v2425, %v2437
    %v2462 = vpack.c.bf16 %v2439, %v2438
    %v2463 = vpack.c.bf16 %v2441, %v2440
    %v2464 = vpack.c.bf16 %v2443, %v2442
    %v2465 = vpack.c.bf16 %v2445, %v2444
    %v2466 = vpack.c.bf16 %v2447, %v2446
    %v2467 = vpack.c.bf16 %v2449, %v2448
    %v2468 = vpack.c.bf16 %v2451, %v2450
    %v2469 = vpack.c.bf16 %v2453, %v2452
    %v2470 = vpack.c.bf16 %v2455, %v2454
    %v2471 = vpack.c.bf16 %v2457, %v2456
    %v2472 = vpack.c.bf16 %v2459, %v2458
    %v2473 = vpack.c.bf16 %v2461, %v2460
    %v2474 = vunpack.c.l.bf16 %v2462
    %v2475 = vunpack.c.h.bf16 %v2462
    %v2476 = vunpack.c.l.bf16 %v2463
    %v2477 = vunpack.c.h.bf16 %v2463
    %v2478 = vunpack.c.l.bf16 %v2464
    %v2479 = vunpack.c.h.bf16 %v2464
    %v2480 = vunpack.c.l.bf16 %v2465
    %v2481 = vunpack.c.h.bf16 %v2465
    %v2482 = vunpack.c.l.bf16 %v2466
    %v2483 = vunpack.c.h.bf16 %v2466
    %v2484 = vunpack.c.l.bf16 %v2467
    %v2485 = vunpack.c.h.bf16 %v2467
    %v2486 = vunpack.c.l.bf16 %v2468
    %v2487 = vunpack.c.h.bf16 %v2468
    %v2488 = vunpack.c.l.bf16 %v2469
    %v2489 = vunpack.c.h.bf16 %v2469
    %v2490 = vunpack.c.l.bf16 %v2470
    %v2491 = vunpack.c.h.bf16 %v2470
    %v2492 = vunpack.c.l.bf16 %v2471
    %v2493 = vunpack.c.h.bf16 %v2471
    %v2494 = vunpack.c.l.bf16 %v2472
    %v2495 = vunpack.c.h.bf16 %v2472
    %v2496 = vunpack.c.l.bf16 %v2473
    %v2497 = vunpack.c.h.bf16 %v2473
    %v2498 = vmax.f32 %v2474, 0.0
    %v2499 = vmax.f32 %v2475, 0.0
    %v2500 = vmax.f32 %v2476, 0.0
    %v2501 = vmax.f32 %v2477, 0.0
    %v2502 = vmax.f32 %v2478, 0.0
    %v2503 = vmax.f32 %v2479, 0.0
    %v2504 = vmax.f32 %v2480, 0.0
    %v2505 = vmax.f32 %v2481, 0.0
    %v2506 = vmax.f32 %v2482, 0.0
    %v2507 = vmax.f32 %v2483, 0.0
    %v2508 = vmax.f32 %v2484, 0.0
    %v2509 = vmax.f32 %v2485, 0.0
    %v2510 = vmax.f32 %v2486, 0.0
    %v2511 = vmax.f32 %v2487, 0.0
    %v2512 = vmax.f32 %v2488, 0.0
    %v2513 = vmax.f32 %v2489, 0.0
    %v2514 = vmax.f32 %v2490, 0.0
    %v2515 = vmax.f32 %v2491, 0.0
    %v2516 = vmax.f32 %v2492, 0.0
    %v2517 = vmax.f32 %v2493, 0.0
    %v2518 = vmax.f32 %v2494, 0.0
    %v2519 = vmax.f32 %v2495, 0.0
    %v2520 = vmax.f32 %v2496, 0.0
    %v2521 = vmax.f32 %v2497, 0.0
    %v2522 = vpack.c.bf16 %v2510, %v2498
    %v2523 = vpack.c.bf16 %v2511, %v2499
    %v2524 = vpack.c.bf16 %v2512, %v2500
    %v2525 = vpack.c.bf16 %v2513, %v2501
    %v2526 = vpack.c.bf16 %v2514, %v2502
    %v2527 = vpack.c.bf16 %v2515, %v2503
    %v2528 = vpack.c.bf16 %v2516, %v2504
    %v2529 = vpack.c.bf16 %v2517, %v2505
    %v2530 = vpack.c.bf16 %v2518, %v2506
    %v2531 = vpack.c.bf16 %v2519, %v2507
    %v2532 = vpack.c.bf16 %v2520, %v2508
    %v2533 = vpack.c.bf16 %v2521, %v2509
    %v2534 = vld [vmem:[#allocation8] sm:$0xff]
    %v2535 = vld [vmem:[#allocation8 + $0x8] sm:$0xf]
    %v2536 = vld [vmem:[#allocation8 + $0xc] sm:$0xff]
    %v2537 = vld [vmem:[#allocation8 + $0x14] sm:$0xf]
    %v2538 = vld [vmem:[#allocation8 + $0x18] sm:$0xff]
    %v2539 = vld [vmem:[#allocation8 + $0x20] sm:$0xf]
    %v2540 = vld [vmem:[#allocation8 + $0x24] sm:$0xff]
    %v2541 = vld [vmem:[#allocation8 + $0x2c] sm:$0xf]
    %v2542 = vld [vmem:[#allocation8 + $0x30] sm:$0xff]
    %v2543 = vld [vmem:[#allocation8 + $0x38] sm:$0xf]
    %v2544 = vld [vmem:[#allocation8 + $0x3c] sm:$0xff]
    %v2545 = vld [vmem:[#allocation8 + $0x44] sm:$0xf]
    %v2546 = vld [vmem:[#allocation8 + $0x48] sm:$0xff]
    %v2547 = vld [vmem:[#allocation8 + $0x50] sm:$0xf]
    %v2548 = vld [vmem:[#allocation8 + $0x54] sm:$0xff]
    %v2549 = vld [vmem:[#allocation8 + $0x5c] sm:$0xf]
    %v2550 = vld [vmem:[#allocation8 + $0x60] sm:$0xff]
    %v2551 = vld [vmem:[#allocation8 + $0x68] sm:$0xf]
    %v2552 = vld [vmem:[#allocation8 + $0x6c] sm:$0xff]
    %v2553 = vld [vmem:[#allocation8 + $0x74] sm:$0xf]
    %v2554 = vld [vmem:[#allocation8 + $0x78] sm:$0xff]
    %v2555 = vld [vmem:[#allocation8 + $0x80] sm:$0xf]
    %v2556 = vld [vmem:[#allocation8 + $0x84] sm:$0xff]
    %v2557 = vld [vmem:[#allocation8 + $0x8c] sm:$0xf]
    %v2558 = vld [vmem:[#allocation8 + $0x90] sm:$0xff]
    %v2559 = vld [vmem:[#allocation8 + $0x98] sm:$0xf]
    %v2560 = vld [vmem:[#allocation8 + $0x9c] sm:$0xff]
    %v2561 = vld [vmem:[#allocation8 + $0xa4] sm:$0xf]
    %v2562 = vld [vmem:[#allocation8 + $0xa8] sm:$0xff]
    %v2563 = vld [vmem:[#allocation8 + $0xb0] sm:$0xf]
    %v2564 = vld [vmem:[#allocation8 + $0xb4] sm:$0xff]
    %v2565 = vld [vmem:[#allocation8 + $0xbc] sm:$0xf]
    %v2566 = vld [vmem:[#allocation8 + $0xc0] sm:$0xff]
    %v2567 = vld [vmem:[#allocation8 + $0xc8] sm:$0xf]
    %v2568 = vld [vmem:[#allocation8 + $0xcc] sm:$0xff]
    %v2569 = vld [vmem:[#allocation8 + $0xd4] sm:$0xf]
    %v2570 = vld [vmem:[#allocation8 + $0xd8] sm:$0xff]
    %v2571 = vld [vmem:[#allocation8 + $0xe0] sm:$0xf]
    %v2572 = vld [vmem:[#allocation8 + $0xe4] sm:$0xff]
    %v2573 = vld [vmem:[#allocation8 + $0xec] sm:$0xf]
    %v2574 = vld [vmem:[#allocation8 + $0xf0] sm:$0xff]
    %v2575 = vld [vmem:[#allocation8 + $0xf8] sm:$0xf]
    %v2576 = vld [vmem:[#allocation8 + $0xfc] sm:$0xff]
    %v2577 = vld [vmem:[#allocation8 + $0x104] sm:$0xf]
    %v2578 = vld [vmem:[#allocation8 + $0x108] sm:$0xff]
    %v2579 = vld [vmem:[#allocation8 + $0x110] sm:$0xf]
    %v2580 = vld [vmem:[#allocation8 + $0x114] sm:$0xff]
    %v2581 = vld [vmem:[#allocation8 + $0x11c] sm:$0xf]
    %v2582 = vld [vmem:[#allocation8 + $0x120] sm:$0xff]
    %v2583 = vld [vmem:[#allocation8 + $0x128] sm:$0xf]
    %v2584 = vld [vmem:[#allocation8 + $0x12c] sm:$0xff]
    %v2585 = vld [vmem:[#allocation8 + $0x134] sm:$0xf]
    %v2586 = vld [vmem:[#allocation8 + $0x138] sm:$0xff]
    %v2587 = vld [vmem:[#allocation8 + $0x140] sm:$0xf]
    %v2588 = vld [vmem:[#allocation8 + $0x144] sm:$0xff]
    %v2589 = vld [vmem:[#allocation8 + $0x14c] sm:$0xf]
    %v2590 = vld [vmem:[#allocation8 + $0x150] sm:$0xff]
    %v2591 = vld [vmem:[#allocation8 + $0x158] sm:$0xf]
    %v2592 = vld [vmem:[#allocation8 + $0x15c] sm:$0xff]
    %v2593 = vld [vmem:[#allocation8 + $0x164] sm:$0xf]
    %v2594 = vld [vmem:[#allocation8 + $0x168] sm:$0xff]
    %v2595 = vld [vmem:[#allocation8 + $0x170] sm:$0xf]
    %v2596 = vld [vmem:[#allocation8 + $0x174] sm:$0xff]
    %v2597 = vld [vmem:[#allocation8 + $0x17c] sm:$0xf]
    %v2598 = vld [vmem:[#allocation8 + $0x180] sm:$0xff]
    %v2599 = vld [vmem:[#allocation8 + $0x188] sm:$0xf]
    %v2600 = vld [vmem:[#allocation8 + $0x18c] sm:$0xff]
    %v2601 = vld [vmem:[#allocation8 + $0x194] sm:$0xf]
    %v2602 = vld [vmem:[#allocation8 + $0x198] sm:$0xff]
    %v2603 = vld [vmem:[#allocation8 + $0x1a0] sm:$0xf]
    %v2604 = vld [vmem:[#allocation8 + $0x1a4] sm:$0xff]
    %v2605 = vld [vmem:[#allocation8 + $0x1ac] sm:$0xf]
    %v2606 = vld [vmem:[#allocation8 + $0x1b0] sm:$0xff]
    %v2607 = vld [vmem:[#allocation8 + $0x1b8] sm:$0xf]
    %v2608 = vld [vmem:[#allocation8 + $0x1bc] sm:$0xff]
    %v2609 = vld [vmem:[#allocation8 + $0x1c4] sm:$0xf]
    %v2610 = vld [vmem:[#allocation8 + $0x1c8] sm:$0xff]
    %v2611 = vld [vmem:[#allocation8 + $0x1d0] sm:$0xf]
    %v2612 = vld [vmem:[#allocation8 + $0x1d4] sm:$0xff]
    %v2613 = vld [vmem:[#allocation8 + $0x1dc] sm:$0xf]
    %v2614 = vld [vmem:[#allocation8 + $0x1e0] sm:$0xff]
    %v2615 = vld [vmem:[#allocation8 + $0x1e8] sm:$0xf]
    %v2616 = vld [vmem:[#allocation8 + $0x1ec] sm:$0xff]
    %v2617 = vld [vmem:[#allocation8 + $0x1f4] sm:$0xf]
    %v2618 = vld [vmem:[#allocation8 + $0x1f8] sm:$0xff]
    %v2619 = vld [vmem:[#allocation8 + $0x200] sm:$0xf]
    %v2620 = vld [vmem:[#allocation8 + $0x204] sm:$0xff]
    %v2621 = vld [vmem:[#allocation8 + $0x20c] sm:$0xf]
    %v2622 = vld [vmem:[#allocation8 + $0x210] sm:$0xff]
    %v2623 = vld [vmem:[#allocation8 + $0x218] sm:$0xf]
    %v2624 = vld [vmem:[#allocation8 + $0x21c] sm:$0xff]
    %v2625 = vld [vmem:[#allocation8 + $0x224] sm:$0xf]
    %v2626 = vld [vmem:[#allocation8 + $0x228] sm:$0xff]
    %v2627 = vld [vmem:[#allocation8 + $0x230] sm:$0xf]
    %v2628 = vld [vmem:[#allocation8 + $0x234] sm:$0xff]
    %v2629 = vld [vmem:[#allocation8 + $0x23c] sm:$0xf]
    %v2630 = vld [vmem:[#allocation8 + $0x240] sm:$0xff]
    %v2631 = vld [vmem:[#allocation8 + $0x248] sm:$0xf]
    %v2632 = vld [vmem:[#allocation8 + $0x24c] sm:$0xff]
    %v2633 = vld [vmem:[#allocation8 + $0x254] sm:$0xf]
    %v2634 = vld [vmem:[#allocation8 + $0x258] sm:$0xff]
    %v2635 = vld [vmem:[#allocation8 + $0x260] sm:$0xf]
    %v2636 = vld [vmem:[#allocation8 + $0x264] sm:$0xff]
    %v2637 = vld [vmem:[#allocation8 + $0x26c] sm:$0xf]
    %v2638 = vld [vmem:[#allocation8 + $0x270] sm:$0xff]
    %v2639 = vld [vmem:[#allocation8 + $0x278] sm:$0xf]
    %v2640 = vld [vmem:[#allocation8 + $0x27c] sm:$0xff]
    %v2641 = vld [vmem:[#allocation8 + $0x284] sm:$0xf]
    %v2642 = vld [vmem:[#allocation8 + $0x288] sm:$0xff]
    %v2643 = vld [vmem:[#allocation8 + $0x290] sm:$0xf]
    %v2644 = vld [vmem:[#allocation8 + $0x294] sm:$0xff]
    %v2645 = vld [vmem:[#allocation8 + $0x29c] sm:$0xf]
    %v2646 = vld [vmem:[#allocation8 + $0x2a0] sm:$0xff]
    %v2647 = vld [vmem:[#allocation8 + $0x2a8] sm:$0xf]
    %v2648 = vld [vmem:[#allocation8 + $0x2ac] sm:$0xff]
    %v2649 = vld [vmem:[#allocation8 + $0x2b4] sm:$0xf]
    %v2650 = vld [vmem:[#allocation8 + $0x2b8] sm:$0xff]
    %v2651 = vld [vmem:[#allocation8 + $0x2c0] sm:$0xf]
    %v2652 = vld [vmem:[#allocation8 + $0x2c4] sm:$0xff]
    %v2653 = vld [vmem:[#allocation8 + $0x2cc] sm:$0xf]
    %v2654 = vld [vmem:[#allocation8 + $0x2d0] sm:$0xff]
    %v2655 = vld [vmem:[#allocation8 + $0x2d8] sm:$0xf]
    %v2656 = vld [vmem:[#allocation8 + $0x2dc] sm:$0xff]
    %v2657 = vld [vmem:[#allocation8 + $0x2e4] sm:$0xf]
    %v2658 = vld [vmem:[#allocation8 + $0x2e8] sm:$0xff]
    %v2659 = vld [vmem:[#allocation8 + $0x2f0] sm:$0xf]
    %v2660 = vld [vmem:[#allocation8 + $0x2f4] sm:$0xff]
    %v2661 = vld [vmem:[#allocation8 + $0x2fc] sm:$0xf]
    %v2662 = vld [vmem:[#allocation8 + $0x300] sm:$0xff]
    %v2663 = vld [vmem:[#allocation8 + $0x308] sm:$0xf]
    %v2664 = vld [vmem:[#allocation8 + $0x30c] sm:$0xff]
    %v2665 = vld [vmem:[#allocation8 + $0x314] sm:$0xf]
    %v2666 = vld [vmem:[#allocation8 + $0x318] sm:$0xff]
    %v2667 = vld [vmem:[#allocation8 + $0x320] sm:$0xf]
    %v2668 = vld [vmem:[#allocation8 + $0x324] sm:$0xff]
    %v2669 = vld [vmem:[#allocation8 + $0x32c] sm:$0xf]
    %v2670 = vld [vmem:[#allocation8 + $0x330] sm:$0xff]
    %v2671 = vld [vmem:[#allocation8 + $0x338] sm:$0xf]
    %v2672 = vld [vmem:[#allocation8 + $0x33c] sm:$0xff]
    %v2673 = vld [vmem:[#allocation8 + $0x344] sm:$0xf]
    %v2674 = vld [vmem:[#allocation8 + $0x348] sm:$0xff]
    %v2675 = vld [vmem:[#allocation8 + $0x350] sm:$0xf]
    %v2676 = vld [vmem:[#allocation8 + $0x354] sm:$0xff]
    %v2677 = vld [vmem:[#allocation8 + $0x35c] sm:$0xf]
    %v2678 = vld [vmem:[#allocation8 + $0x360] sm:$0xff]
    %v2679 = vld [vmem:[#allocation8 + $0x368] sm:$0xf]
    %v2680 = vld [vmem:[#allocation8 + $0x36c] sm:$0xff]
    %v2681 = vld [vmem:[#allocation8 + $0x374] sm:$0xf]
    %v2682 = vld [vmem:[#allocation8 + $0x378] sm:$0xff]
    %v2683 = vld [vmem:[#allocation8 + $0x380] sm:$0xf]
    %v2684 = vld [vmem:[#allocation8 + $0x384] sm:$0xff]
    %v2685 = vld [vmem:[#allocation8 + $0x38c] sm:$0xf]
    %v2686 = vld [vmem:[#allocation8 + $0x390] sm:$0xff]
    %v2687 = vld [vmem:[#allocation8 + $0x398] sm:$0xf]
    %v2688 = vld [vmem:[#allocation8 + $0x39c] sm:$0xff]
    %v2689 = vld [vmem:[#allocation8 + $0x3a4] sm:$0xf]
    %v2690 = vld [vmem:[#allocation8 + $0x3a8] sm:$0xff]
    %v2691 = vld [vmem:[#allocation8 + $0x3b0] sm:$0xf]
    %v2692 = vld [vmem:[#allocation8 + $0x3b4] sm:$0xff]
    %v2693 = vld [vmem:[#allocation8 + $0x3bc] sm:$0xf]
    %v2694 = vld [vmem:[#allocation8 + $0x3c0] sm:$0xff]
    %v2695 = vld [vmem:[#allocation8 + $0x3c8] sm:$0xf]
    %v2696 = vld [vmem:[#allocation8 + $0x3cc] sm:$0xff]
    %v2697 = vld [vmem:[#allocation8 + $0x3d4] sm:$0xf]
    %v2698 = vld [vmem:[#allocation8 + $0x3d8] sm:$0xff]
    %v2699 = vld [vmem:[#allocation8 + $0x3e0] sm:$0xf]
    %v2700 = vld [vmem:[#allocation8 + $0x3e4] sm:$0xff]
    %v2701 = vld [vmem:[#allocation8 + $0x3ec] sm:$0xf]
    %v2702 = vld [vmem:[#allocation8 + $0x3f0] sm:$0xff]
    %v2703 = vld [vmem:[#allocation8 + $0x3f8] sm:$0xf]
    %v2704 = vld [vmem:[#allocation8 + $0x3fc] sm:$0xff]
    %v2705 = vld [vmem:[#allocation8 + $0x404] sm:$0xf]
    %v2706 = vld [vmem:[#allocation8 + $0x408] sm:$0xff]
    %v2707 = vld [vmem:[#allocation8 + $0x410] sm:$0xf]
    %v2708 = vld [vmem:[#allocation8 + $0x414] sm:$0xff]
    %v2709 = vld [vmem:[#allocation8 + $0x41c] sm:$0xf]
    %v2710 = vld [vmem:[#allocation8 + $0x420] sm:$0xff]
    %v2711 = vld [vmem:[#allocation8 + $0x428] sm:$0xf]
    %v2712 = vld [vmem:[#allocation8 + $0x42c] sm:$0xff]
    %v2713 = vld [vmem:[#allocation8 + $0x434] sm:$0xf]
    %v2714 = vld [vmem:[#allocation8 + $0x438] sm:$0xff]
    %v2715 = vld [vmem:[#allocation8 + $0x440] sm:$0xf]
    %v2716 = vld [vmem:[#allocation8 + $0x444] sm:$0xff]
    %v2717 = vld [vmem:[#allocation8 + $0x44c] sm:$0xf]
    %v2718 = vld [vmem:[#allocation8 + $0x450] sm:$0xff]
    %v2719 = vld [vmem:[#allocation8 + $0x458] sm:$0xf]
    %v2720 = vld [vmem:[#allocation8 + $0x45c] sm:$0xff]
    %v2721 = vld [vmem:[#allocation8 + $0x464] sm:$0xf]
    %v2722 = vld [vmem:[#allocation8 + $0x468] sm:$0xff]
    %v2723 = vld [vmem:[#allocation8 + $0x470] sm:$0xf]
    %v2724 = vld [vmem:[#allocation8 + $0x474] sm:$0xff]
    %v2725 = vld [vmem:[#allocation8 + $0x47c] sm:$0xf]
    %v2726 = vld [vmem:[#allocation8 + $0x480] sm:$0xff]
    %v2727 = vld [vmem:[#allocation8 + $0x488] sm:$0xf]
    %v2728 = vld [vmem:[#allocation8 + $0x48c] sm:$0xff]
    %v2729 = vld [vmem:[#allocation8 + $0x494] sm:$0xf]
    %v2730 = vld [vmem:[#allocation8 + $0x498] sm:$0xff]
    %v2731 = vld [vmem:[#allocation8 + $0x4a0] sm:$0xf]
    %v2732 = vld [vmem:[#allocation8 + $0x4a4] sm:$0xff]
    %v2733 = vld [vmem:[#allocation8 + $0x4ac] sm:$0xf]
    %v2734 = vld [vmem:[#allocation8 + $0x4b0] sm:$0xff]
    %v2735 = vld [vmem:[#allocation8 + $0x4b8] sm:$0xf]
    %v2736 = vld [vmem:[#allocation8 + $0x4bc] sm:$0xff]
    %v2737 = vld [vmem:[#allocation8 + $0x4c4] sm:$0xf]
    %v2738 = vld [vmem:[#allocation8 + $0x4c8] sm:$0xff]
    %v2739 = vld [vmem:[#allocation8 + $0x4d0] sm:$0xf]
    %v2740 = vld [vmem:[#allocation8 + $0x4d4] sm:$0xff]
    %v2741 = vld [vmem:[#allocation8 + $0x4dc] sm:$0xf]
    %v2742 = vld [vmem:[#allocation8 + $0x4e0] sm:$0xff]
    %v2743 = vld [vmem:[#allocation8 + $0x4e8] sm:$0xf]
    %v2744 = vld [vmem:[#allocation8 + $0x4ec] sm:$0xff]
    %v2745 = vld [vmem:[#allocation8 + $0x4f4] sm:$0xf]
    %v2746 = vld [vmem:[#allocation8 + $0x4f8] sm:$0xff]
    %v2747 = vld [vmem:[#allocation8 + $0x500] sm:$0xf]
    %v2748 = vld [vmem:[#allocation8 + $0x504] sm:$0xff]
    %v2749 = vld [vmem:[#allocation8 + $0x50c] sm:$0xf]
    %v2750 = vld [vmem:[#allocation8 + $0x510] sm:$0xff]
    %v2751 = vld [vmem:[#allocation8 + $0x518] sm:$0xf]
    %v2752 = vld [vmem:[#allocation8 + $0x51c] sm:$0xff]
    %v2753 = vld [vmem:[#allocation8 + $0x524] sm:$0xf]
    %v2754 = vld [vmem:[#allocation8 + $0x528] sm:$0xff]
    %v2755 = vld [vmem:[#allocation8 + $0x530] sm:$0xf]
    %v2756 = vld [vmem:[#allocation8 + $0x534] sm:$0xff]
    %v2757 = vld [vmem:[#allocation8 + $0x53c] sm:$0xf]
    %v2758 = vld [vmem:[#allocation8 + $0x540] sm:$0xff]
    %v2759 = vld [vmem:[#allocation8 + $0x548] sm:$0xf]
    %v2760 = vld [vmem:[#allocation8 + $0x54c] sm:$0xff]
    %v2761 = vld [vmem:[#allocation8 + $0x554] sm:$0xf]
    %v2762 = vld [vmem:[#allocation8 + $0x558] sm:$0xff]
    %v2763 = vld [vmem:[#allocation8 + $0x560] sm:$0xf]
    %v2764 = vld [vmem:[#allocation8 + $0x564] sm:$0xff]
    %v2765 = vld [vmem:[#allocation8 + $0x56c] sm:$0xf]
    %v2766 = vld [vmem:[#allocation8 + $0x570] sm:$0xff]
    %v2767 = vld [vmem:[#allocation8 + $0x578] sm:$0xf]
    %v2768 = vld [vmem:[#allocation8 + $0x57c] sm:$0xff]
    %v2769 = vld [vmem:[#allocation8 + $0x584] sm:$0xf]
    %v2770 = vld [vmem:[#allocation8 + $0x588] sm:$0xff]
    %v2771 = vld [vmem:[#allocation8 + $0x590] sm:$0xf]
    %v2772 = vld [vmem:[#allocation8 + $0x594] sm:$0xff]
    %v2773 = vld [vmem:[#allocation8 + $0x59c] sm:$0xf]
    %v2774 = vld [vmem:[#allocation8 + $0x5a0] sm:$0xff]
    %v2775 = vld [vmem:[#allocation8 + $0x5a8] sm:$0xf]
    %v2776 = vld [vmem:[#allocation8 + $0x5ac] sm:$0xff]
    %v2777 = vld [vmem:[#allocation8 + $0x5b4] sm:$0xf]
    %v2778 = vld [vmem:[#allocation8 + $0x5b8] sm:$0xff]
    %v2779 = vld [vmem:[#allocation8 + $0x5c0] sm:$0xf]
    %v2780 = vld [vmem:[#allocation8 + $0x5c4] sm:$0xff]
    %v2781 = vld [vmem:[#allocation8 + $0x5cc] sm:$0xf]
    %v2782 = vld [vmem:[#allocation8 + $0x5d0] sm:$0xff]
    %v2783 = vld [vmem:[#allocation8 + $0x5d8] sm:$0xf]
    %v2784 = vld [vmem:[#allocation8 + $0x5dc] sm:$0xff]
    %v2785 = vld [vmem:[#allocation8 + $0x5e4] sm:$0xf]
    %v2786 = vld [vmem:[#allocation8 + $0x5e8] sm:$0xff]
    %v2787 = vld [vmem:[#allocation8 + $0x5f0] sm:$0xf]
    %v2788 = vld [vmem:[#allocation8 + $0x5f4] sm:$0xff]
    %v2789 = vld [vmem:[#allocation8 + $0x5fc] sm:$0xf]
    %v2790 = vld [vmem:[#allocation8 + $0x600] sm:$0xff]
    %v2791 = vld [vmem:[#allocation8 + $0x608] sm:$0xf]
    %v2792 = vld [vmem:[#allocation8 + $0x60c] sm:$0xff]
    %v2793 = vld [vmem:[#allocation8 + $0x614] sm:$0xf]
    %v2794 = vld [vmem:[#allocation8 + $0x618] sm:$0xff]
    %v2795 = vld [vmem:[#allocation8 + $0x620] sm:$0xf]
    %v2796 = vld [vmem:[#allocation8 + $0x624] sm:$0xff]
    %v2797 = vld [vmem:[#allocation8 + $0x62c] sm:$0xf]
    %v2798 = vld [vmem:[#allocation8 + $0x630] sm:$0xff]
    %v2799 = vld [vmem:[#allocation8 + $0x638] sm:$0xf]
    %v2800 = vld [vmem:[#allocation8 + $0x63c] sm:$0xff]
    %v2801 = vld [vmem:[#allocation8 + $0x644] sm:$0xf]
    %v2802 = vld [vmem:[#allocation8 + $0x648] sm:$0xff]
    %v2803 = vld [vmem:[#allocation8 + $0x650] sm:$0xf]
    %v2804 = vld [vmem:[#allocation8 + $0x654] sm:$0xff]
    %v2805 = vld [vmem:[#allocation8 + $0x65c] sm:$0xf]
    %v2806 = vld [vmem:[#allocation8 + $0x660] sm:$0xff]
    %v2807 = vld [vmem:[#allocation8 + $0x668] sm:$0xf]
    %v2808 = vld [vmem:[#allocation8 + $0x66c] sm:$0xff]
    %v2809 = vld [vmem:[#allocation8 + $0x674] sm:$0xf]
    %v2810 = vld [vmem:[#allocation8 + $0x678] sm:$0xff]
    %v2811 = vld [vmem:[#allocation8 + $0x680] sm:$0xf]
    %v2812 = vld [vmem:[#allocation8 + $0x684] sm:$0xff]
    %v2813 = vld [vmem:[#allocation8 + $0x68c] sm:$0xf]
    %v2814 = vld [vmem:[#allocation8 + $0x690] sm:$0xff]
    %v2815 = vld [vmem:[#allocation8 + $0x698] sm:$0xf]
    %v2816 = vld [vmem:[#allocation8 + $0x69c] sm:$0xff]
    %v2817 = vld [vmem:[#allocation8 + $0x6a4] sm:$0xf]
    %v2818 = vld [vmem:[#allocation8 + $0x6a8] sm:$0xff]
    %v2819 = vld [vmem:[#allocation8 + $0x6b0] sm:$0xf]
    %v2820 = vld [vmem:[#allocation8 + $0x6b4] sm:$0xff]
    %v2821 = vld [vmem:[#allocation8 + $0x6bc] sm:$0xf]
    %v2822 = vld [vmem:[#allocation8 + $0x6c0] sm:$0xff]
    %v2823 = vld [vmem:[#allocation8 + $0x6c8] sm:$0xf]
    %v2824 = vld [vmem:[#allocation8 + $0x6cc] sm:$0xff]
    %v2825 = vld [vmem:[#allocation8 + $0x6d4] sm:$0xf]
    %v2826 = vld [vmem:[#allocation8 + $0x6d8] sm:$0xff]
    %v2827 = vld [vmem:[#allocation8 + $0x6e0] sm:$0xf]
    %v2828 = vld [vmem:[#allocation8 + $0x6e4] sm:$0xff]
    %v2829 = vld [vmem:[#allocation8 + $0x6ec] sm:$0xf]
    %v2830 = vld [vmem:[#allocation8 + $0x6f0] sm:$0xff]
    %v2831 = vld [vmem:[#allocation8 + $0x6f8] sm:$0xf]
    %v2832 = vld [vmem:[#allocation8 + $0x6fc] sm:$0xff]
    %v2833 = vld [vmem:[#allocation8 + $0x704] sm:$0xf]
    %v2834 = vld [vmem:[#allocation8 + $0x708] sm:$0xff]
    %v2835 = vld [vmem:[#allocation8 + $0x710] sm:$0xf]
    %v2836 = vld [vmem:[#allocation8 + $0x714] sm:$0xff]
    %v2837 = vld [vmem:[#allocation8 + $0x71c] sm:$0xf]
    %v2838 = vld [vmem:[#allocation8 + $0x720] sm:$0xff]
    %v2839 = vld [vmem:[#allocation8 + $0x728] sm:$0xf]
    %v2840 = vld [vmem:[#allocation8 + $0x72c] sm:$0xff]
    %v2841 = vld [vmem:[#allocation8 + $0x734] sm:$0xf]
    %v2842 = vld [vmem:[#allocation8 + $0x738] sm:$0xff]
    %v2843 = vld [vmem:[#allocation8 + $0x740] sm:$0xf]
    %v2844 = vld [vmem:[#allocation8 + $0x744] sm:$0xff]
    %v2845 = vld [vmem:[#allocation8 + $0x74c] sm:$0xf]
    %v2846 = vld [vmem:[#allocation8 + $0x750] sm:$0xff]
    %v2847 = vld [vmem:[#allocation8 + $0x758] sm:$0xf]
    %v2848 = vld [vmem:[#allocation8 + $0x75c] sm:$0xff]
    %v2849 = vld [vmem:[#allocation8 + $0x764] sm:$0xf]
    %v2850 = vld [vmem:[#allocation8 + $0x768] sm:$0xff]
    %v2851 = vld [vmem:[#allocation8 + $0x770] sm:$0xf]
    %v2852 = vld [vmem:[#allocation8 + $0x774] sm:$0xff]
    %v2853 = vld [vmem:[#allocation8 + $0x77c] sm:$0xf]
    %v2854 = vld [vmem:[#allocation8 + $0x780] sm:$0xff]
    %v2855 = vld [vmem:[#allocation8 + $0x788] sm:$0xf]
    %v2856 = vld [vmem:[#allocation8 + $0x78c] sm:$0xff]
    %v2857 = vld [vmem:[#allocation8 + $0x794] sm:$0xf]
    %v2858 = vld [vmem:[#allocation8 + $0x798] sm:$0xff]
    %v2859 = vld [vmem:[#allocation8 + $0x7a0] sm:$0xf]
    %v2860 = vld [vmem:[#allocation8 + $0x7a4] sm:$0xff]
    %v2861 = vld [vmem:[#allocation8 + $0x7ac] sm:$0xf]
    %v2862 = vld [vmem:[#allocation8 + $0x7b0] sm:$0xff]
    %v2863 = vld [vmem:[#allocation8 + $0x7b8] sm:$0xf]
    %v2864 = vld [vmem:[#allocation8 + $0x7bc] sm:$0xff]
    %v2865 = vld [vmem:[#allocation8 + $0x7c4] sm:$0xf]
    %v2866 = vld [vmem:[#allocation8 + $0x7c8] sm:$0xff]
    %v2867 = vld [vmem:[#allocation8 + $0x7d0] sm:$0xf]
    %v2868 = vld [vmem:[#allocation8 + $0x7d4] sm:$0xff]
    %v2869 = vld [vmem:[#allocation8 + $0x7dc] sm:$0xf]
    %v2870 = vld [vmem:[#allocation8 + $0x7e0] sm:$0xff]
    %v2871 = vld [vmem:[#allocation8 + $0x7e8] sm:$0xf]
    %v2872 = vld [vmem:[#allocation8 + $0x7ec] sm:$0xff]
    %v2873 = vld [vmem:[#allocation8 + $0x7f4] sm:$0xf]
    %v2874 = vld [vmem:[#allocation8 + $0x7f8] sm:$0xff]
    %v2875 = vld [vmem:[#allocation8 + $0x800] sm:$0xf]
    %v2876 = vld [vmem:[#allocation8 + $0x804] sm:$0xff]
    %v2877 = vld [vmem:[#allocation8 + $0x80c] sm:$0xf]
    %v2878 = vld [vmem:[#allocation8 + $0x810] sm:$0xff]
    %v2879 = vld [vmem:[#allocation8 + $0x818] sm:$0xf]
    %v2880 = vld [vmem:[#allocation8 + $0x81c] sm:$0xff]
    %v2881 = vld [vmem:[#allocation8 + $0x824] sm:$0xf]
    %v2882 = vld [vmem:[#allocation8 + $0x828] sm:$0xff]
    %v2883 = vld [vmem:[#allocation8 + $0x830] sm:$0xf]
    %v2884 = vld [vmem:[#allocation8 + $0x834] sm:$0xff]
    %v2885 = vld [vmem:[#allocation8 + $0x83c] sm:$0xf]
    %v2886 = vld [vmem:[#allocation8 + $0x840] sm:$0xff]
    %v2887 = vld [vmem:[#allocation8 + $0x848] sm:$0xf]
    %v2888 = vld [vmem:[#allocation8 + $0x84c] sm:$0xff]
    %v2889 = vld [vmem:[#allocation8 + $0x854] sm:$0xf]
    %v2890 = vld [vmem:[#allocation8 + $0x858] sm:$0xff]
    %v2891 = vld [vmem:[#allocation8 + $0x860] sm:$0xf]
    %v2892 = vld [vmem:[#allocation8 + $0x864] sm:$0xff]
    %v2893 = vld [vmem:[#allocation8 + $0x86c] sm:$0xf]
    %v2894 = vld [vmem:[#allocation8 + $0x870] sm:$0xff]
    %v2895 = vld [vmem:[#allocation8 + $0x878] sm:$0xf]
    %v2896 = vld [vmem:[#allocation8 + $0x87c] sm:$0xff]
    %v2897 = vld [vmem:[#allocation8 + $0x884] sm:$0xf]
    %v2898 = vld [vmem:[#allocation8 + $0x888] sm:$0xff]
    %v2899 = vld [vmem:[#allocation8 + $0x890] sm:$0xf]
    %v2900 = vld [vmem:[#allocation8 + $0x894] sm:$0xff]
    %v2901 = vld [vmem:[#allocation8 + $0x89c] sm:$0xf]
    %v2902 = vld [vmem:[#allocation8 + $0x8a0] sm:$0xff]
    %v2903 = vld [vmem:[#allocation8 + $0x8a8] sm:$0xf]
    %v2904 = vld [vmem:[#allocation8 + $0x8ac] sm:$0xff]
    %v2905 = vld [vmem:[#allocation8 + $0x8b4] sm:$0xf]
    %v2906 = vld [vmem:[#allocation8 + $0x8b8] sm:$0xff]
    %v2907 = vld [vmem:[#allocation8 + $0x8c0] sm:$0xf]
    %v2908 = vld [vmem:[#allocation8 + $0x8c4] sm:$0xff]
    %v2909 = vld [vmem:[#allocation8 + $0x8cc] sm:$0xf]
    %v2910 = vld [vmem:[#allocation8 + $0x8d0] sm:$0xff]
    %v2911 = vld [vmem:[#allocation8 + $0x8d8] sm:$0xf]
    %v2912 = vld [vmem:[#allocation8 + $0x8dc] sm:$0xff]
    %v2913 = vld [vmem:[#allocation8 + $0x8e4] sm:$0xf]
    %v2914 = vld [vmem:[#allocation8 + $0x8e8] sm:$0xff]
    %v2915 = vld [vmem:[#allocation8 + $0x8f0] sm:$0xf]
    %v2916 = vld [vmem:[#allocation8 + $0x8f4] sm:$0xff]
    %v2917 = vld [vmem:[#allocation8 + $0x8fc] sm:$0xf]
    %v2918 = vld [vmem:[#allocation10] sm:$0x7]
    %v2920 = vperm.slane %v2918, 0
    %v2921 = vperm.slane %v2918, 1
    %v2922 = vperm.slane %v2918, 2
    %v3310 = vunpack.c.l.b16 %v2534
    %v3311 = vunpack.c.h.b16 %v2534
    %v3312 = vunpack.c.l.b16 %v2535
    %v3313 = vunpack.c.l.b16 %v2536
    %v3314 = vunpack.c.h.b16 %v2536
    %v3315 = vunpack.c.l.b16 %v2537
    %v3316 = vunpack.c.l.b16 %v2538
    %v3317 = vunpack.c.h.b16 %v2538
    %v3318 = vunpack.c.l.b16 %v2539
    %v3319 = vunpack.c.l.b16 %v2540
    %v3320 = vunpack.c.h.b16 %v2540
    %v3321 = vunpack.c.l.b16 %v2541
    %v3322 = vunpack.c.l.b16 %v2542
    %v3323 = vunpack.c.h.b16 %v2542
    %v3324 = vunpack.c.l.b16 %v2543
    %v3325 = vunpack.c.l.b16 %v2544
    %v3326 = vunpack.c.h.b16 %v2544
    %v3327 = vunpack.c.l.b16 %v2545
    %v3328 = vunpack.c.l.b16 %v2546
    %v3329 = vunpack.c.h.b16 %v2546
    %v3330 = vunpack.c.l.b16 %v2547
    %v3331 = vunpack.c.l.b16 %v2548
    %v3332 = vunpack.c.h.b16 %v2548
    %v3333 = vunpack.c.l.b16 %v2549
    %v3334 = vunpack.c.l.b16 %v2550
    %v3335 = vunpack.c.h.b16 %v2550
    %v3336 = vunpack.c.l.b16 %v2551
    %v3337 = vunpack.c.l.b16 %v2552
    %v3338 = vunpack.c.h.b16 %v2552
    %v3339 = vunpack.c.l.b16 %v2553
    %v3340 = vunpack.c.l.b16 %v2554
    %v3341 = vunpack.c.h.b16 %v2554
    %v3342 = vunpack.c.l.b16 %v2555
    %v3343 = vunpack.c.l.b16 %v2556
    %v3344 = vunpack.c.h.b16 %v2556
    %v3345 = vunpack.c.l.b16 %v2557
    %v3346 = vunpack.c.l.b16 %v2558
    %v3347 = vunpack.c.h.b16 %v2558
    %v3348 = vunpack.c.l.b16 %v2559
    %v3349 = vunpack.c.l.b16 %v2560
    %v3350 = vunpack.c.h.b16 %v2560
    %v3351 = vunpack.c.l.b16 %v2561
    %v3352 = vunpack.c.l.b16 %v2562
    %v3353 = vunpack.c.h.b16 %v2562
    %v3354 = vunpack.c.l.b16 %v2563
    %v3355 = vunpack.c.l.b16 %v2564
    %v3356 = vunpack.c.h.b16 %v2564
    %v3357 = vunpack.c.l.b16 %v2565
    %v3358 = vunpack.c.l.b16 %v2566
    %v3359 = vunpack.c.h.b16 %v2566
    %v3360 = vunpack.c.l.b16 %v2567
    %v3361 = vunpack.c.l.b16 %v2568
    %v3362 = vunpack.c.h.b16 %v2568
    %v3363 = vunpack.c.l.b16 %v2569
    %v3364 = vunpack.c.l.b16 %v2570
    %v3365 = vunpack.c.h.b16 %v2570
    %v3366 = vunpack.c.l.b16 %v2571
    %v3367 = vunpack.c.l.b16 %v2572
    %v3368 = vunpack.c.h.b16 %v2572
    %v3369 = vunpack.c.l.b16 %v2573
    %v3370 = vunpack.c.l.b16 %v2574
    %v3371 = vunpack.c.h.b16 %v2574
    %v3372 = vunpack.c.l.b16 %v2575
    %v3373 = vunpack.c.l.b16 %v2576
    %v3374 = vunpack.c.h.b16 %v2576
    %v3375 = vunpack.c.l.b16 %v2577
    %v3376 = vunpack.c.l.b16 %v2578
    %v3377 = vunpack.c.h.b16 %v2578
    %v3378 = vunpack.c.l.b16 %v2579
    %v3379 = vunpack.c.l.b16 %v2580
    %v3380 = vunpack.c.h.b16 %v2580
    %v3381 = vunpack.c.l.b16 %v2581
    %v3382 = vunpack.c.l.b16 %v2582
    %v3383 = vunpack.c.h.b16 %v2582
    %v3384 = vunpack.c.l.b16 %v2583
    %v3385 = vunpack.c.l.b16 %v2584
    %v3386 = vunpack.c.h.b16 %v2584
    %v3387 = vunpack.c.l.b16 %v2585
    %v3388 = vunpack.c.l.b16 %v2586
    %v3389 = vunpack.c.h.b16 %v2586
    %v3390 = vunpack.c.l.b16 %v2587
    %v3391 = vunpack.c.l.b16 %v2588
    %v3392 = vunpack.c.h.b16 %v2588
    %v3393 = vunpack.c.l.b16 %v2589
    %v3394 = vunpack.c.l.b16 %v2590
    %v3395 = vunpack.c.h.b16 %v2590
    %v3396 = vunpack.c.l.b16 %v2591
    %v3397 = vunpack.c.l.b16 %v2592
    %v3398 = vunpack.c.h.b16 %v2592
    %v3399 = vunpack.c.l.b16 %v2593
    %v3400 = vunpack.c.l.b16 %v2594
    %v3401 = vunpack.c.h.b16 %v2594
    %v3402 = vunpack.c.l.b16 %v2595
    %v3403 = vunpack.c.l.b16 %v2596
    %v3404 = vunpack.c.h.b16 %v2596
    %v3405 = vunpack.c.l.b16 %v2597
    %v3406 = vunpack.c.l.b16 %v2598
    %v3407 = vunpack.c.h.b16 %v2598
    %v3408 = vunpack.c.l.b16 %v2599
    %v3409 = vunpack.c.l.b16 %v2600
    %v3410 = vunpack.c.h.b16 %v2600
    %v3411 = vunpack.c.l.b16 %v2601
    %v3412 = vunpack.c.l.b16 %v2602
    %v3413 = vunpack.c.h.b16 %v2602
    %v3414 = vunpack.c.l.b16 %v2603
    %v3415 = vunpack.c.l.b16 %v2604
    %v3416 = vunpack.c.h.b16 %v2604
    %v3417 = vunpack.c.l.b16 %v2605
    %v3418 = vunpack.c.l.b16 %v2606
    %v3419 = vunpack.c.h.b16 %v2606
    %v3420 = vunpack.c.l.b16 %v2607
    %v3421 = vunpack.c.l.b16 %v2608
    %v3422 = vunpack.c.h.b16 %v2608
    %v3423 = vunpack.c.l.b16 %v2609
    %v3424 = vunpack.c.l.b16 %v2610
    %v3425 = vunpack.c.h.b16 %v2610
    %v3426 = vunpack.c.l.b16 %v2611
    %v3427 = vunpack.c.l.b16 %v2612
    %v3428 = vunpack.c.h.b16 %v2612
    %v3429 = vunpack.c.l.b16 %v2613
    %v3430 = vunpack.c.l.b16 %v2614
    %v3431 = vunpack.c.h.b16 %v2614
    %v3432 = vunpack.c.l.b16 %v2615
    %v3433 = vunpack.c.l.b16 %v2616
    %v3434 = vunpack.c.h.b16 %v2616
    %v3435 = vunpack.c.l.b16 %v2617
    %v3436 = vunpack.c.l.b16 %v2618
    %v3437 = vunpack.c.h.b16 %v2618
    %v3438 = vunpack.c.l.b16 %v2619
    %v3439 = vunpack.c.l.b16 %v2620
    %v3440 = vunpack.c.h.b16 %v2620
    %v3441 = vunpack.c.l.b16 %v2621
    %v3442 = vunpack.c.l.b16 %v2622
    %v3443 = vunpack.c.h.b16 %v2622
    %v3444 = vunpack.c.l.b16 %v2623
    %v3445 = vunpack.c.l.b16 %v2624
    %v3446 = vunpack.c.h.b16 %v2624
    %v3447 = vunpack.c.l.b16 %v2625
    %v3448 = vunpack.c.l.b16 %v2626
    %v3449 = vunpack.c.h.b16 %v2626
    %v3450 = vunpack.c.l.b16 %v2627
    %v3451 = vunpack.c.l.b16 %v2628
    %v3452 = vunpack.c.h.b16 %v2628
    %v3453 = vunpack.c.l.b16 %v2629
    %v3454 = vunpack.c.l.b16 %v2630
    %v3455 = vunpack.c.h.b16 %v2630
    %v3456 = vunpack.c.l.b16 %v2631
    %v3457 = vunpack.c.l.b16 %v2632
    %v3458 = vunpack.c.h.b16 %v2632
    %v3459 = vunpack.c.l.b16 %v2633
    %v3460 = vunpack.c.l.b16 %v2634
    %v3461 = vunpack.c.h.b16 %v2634
    %v3462 = vunpack.c.l.b16 %v2635
    %v3463 = vunpack.c.l.b16 %v2636
    %v3464 = vunpack.c.h.b16 %v2636
    %v3465 = vunpack.c.l.b16 %v2637
    %v3466 = vunpack.c.l.b16 %v2638
    %v3467 = vunpack.c.h.b16 %v2638
    %v3468 = vunpack.c.l.b16 %v2639
    %v3469 = vunpack.c.l.b16 %v2640
    %v3470 = vunpack.c.h.b16 %v2640
    %v3471 = vunpack.c.l.b16 %v2641
    %v3472 = vunpack.c.l.b16 %v2642
    %v3473 = vunpack.c.h.b16 %v2642
    %v3474 = vunpack.c.l.b16 %v2643
    %v3475 = vunpack.c.l.b16 %v2644
    %v3476 = vunpack.c.h.b16 %v2644
    %v3477 = vunpack.c.l.b16 %v2645
    %v3478 = vunpack.c.l.b16 %v2646
    %v3479 = vunpack.c.h.b16 %v2646
    %v3480 = vunpack.c.l.b16 %v2647
    %v3481 = vunpack.c.l.b16 %v2648
    %v3482 = vunpack.c.h.b16 %v2648
    %v3483 = vunpack.c.l.b16 %v2649
    %v3484 = vunpack.c.l.b16 %v2650
    %v3485 = vunpack.c.h.b16 %v2650
    %v3486 = vunpack.c.l.b16 %v2651
    %v3487 = vunpack.c.l.b16 %v2652
    %v3488 = vunpack.c.h.b16 %v2652
    %v3489 = vunpack.c.l.b16 %v2653
    %v3490 = vunpack.c.l.b16 %v2654
    %v3491 = vunpack.c.h.b16 %v2654
    %v3492 = vunpack.c.l.b16 %v2655
    %v3493 = vunpack.c.l.b16 %v2656
    %v3494 = vunpack.c.h.b16 %v2656
    %v3495 = vunpack.c.l.b16 %v2657
    %v3496 = vunpack.c.l.b16 %v2658
    %v3497 = vunpack.c.h.b16 %v2658
    %v3498 = vunpack.c.l.b16 %v2659
    %v3499 = vunpack.c.l.b16 %v2660
    %v3500 = vunpack.c.h.b16 %v2660
    %v3501 = vunpack.c.l.b16 %v2661
    %v3502 = vunpack.c.l.b16 %v2662
    %v3503 = vunpack.c.h.b16 %v2662
    %v3504 = vunpack.c.l.b16 %v2663
    %v3505 = vunpack.c.l.b16 %v2664
    %v3506 = vunpack.c.h.b16 %v2664
    %v3507 = vunpack.c.l.b16 %v2665
    %v3508 = vunpack.c.l.b16 %v2666
    %v3509 = vunpack.c.h.b16 %v2666
    %v3510 = vunpack.c.l.b16 %v2667
    %v3511 = vunpack.c.l.b16 %v2668
    %v3512 = vunpack.c.h.b16 %v2668
    %v3513 = vunpack.c.l.b16 %v2669
    %v3514 = vunpack.c.l.b16 %v2670
    %v3515 = vunpack.c.h.b16 %v2670
    %v3516 = vunpack.c.l.b16 %v2671
    %v3517 = vunpack.c.l.b16 %v2672
    %v3518 = vunpack.c.h.b16 %v2672
    %v3519 = vunpack.c.l.b16 %v2673
    %v3520 = vunpack.c.l.b16 %v2674
    %v3521 = vunpack.c.h.b16 %v2674
    %v3522 = vunpack.c.l.b16 %v2675
    %v3523 = vunpack.c.l.b16 %v2676
    %v3524 = vunpack.c.h.b16 %v2676
    %v3525 = vunpack.c.l.b16 %v2677
    %v3526 = vunpack.c.l.b16 %v2678
    %v3527 = vunpack.c.h.b16 %v2678
    %v3528 = vunpack.c.l.b16 %v2679
    %v3529 = vunpack.c.l.b16 %v2680
    %v3530 = vunpack.c.h.b16 %v2680
    %v3531 = vunpack.c.l.b16 %v2681
    %v3532 = vunpack.c.l.b16 %v2682
    %v3533 = vunpack.c.h.b16 %v2682
    %v3534 = vunpack.c.l.b16 %v2683
    %v3535 = vunpack.c.l.b16 %v2684
    %v3536 = vunpack.c.h.b16 %v2684
    %v3537 = vunpack.c.l.b16 %v2685
    %v3538 = vunpack.c.l.b16 %v2686
    %v3539 = vunpack.c.h.b16 %v2686
    %v3540 = vunpack.c.l.b16 %v2687
    %v3541 = vunpack.c.l.b16 %v2688
    %v3542 = vunpack.c.h.b16 %v2688
    %v3543 = vunpack.c.l.b16 %v2689
    %v3544 = vunpack.c.l.b16 %v2690
    %v3545 = vunpack.c.h.b16 %v2690
    %v3546 = vunpack.c.l.b16 %v2691
    %v3547 = vunpack.c.l.b16 %v2692
    %v3548 = vunpack.c.h.b16 %v2692
    %v3549 = vunpack.c.l.b16 %v2693
    %v3550 = vunpack.c.l.b16 %v2694
    %v3551 = vunpack.c.h.b16 %v2694
    %v3552 = vunpack.c.l.b16 %v2695
    %v3553 = vunpack.c.l.b16 %v2696
    %v3554 = vunpack.c.h.b16 %v2696
    %v3555 = vunpack.c.l.b16 %v2697
    %v3556 = vunpack.c.l.b16 %v2698
    %v3557 = vunpack.c.h.b16 %v2698
    %v3558 = vunpack.c.l.b16 %v2699
    %v3559 = vunpack.c.l.b16 %v2700
    %v3560 = vunpack.c.h.b16 %v2700
    %v3561 = vunpack.c.l.b16 %v2701
    %v3562 = vunpack.c.l.b16 %v2702
    %v3563 = vunpack.c.h.b16 %v2702
    %v3564 = vunpack.c.l.b16 %v2703
    %v3565 = vunpack.c.l.b16 %v2704
    %v3566 = vunpack.c.h.b16 %v2704
    %v3567 = vunpack.c.l.b16 %v2705
    %v3568 = vunpack.c.l.b16 %v2706
    %v3569 = vunpack.c.h.b16 %v2706
    %v3570 = vunpack.c.l.b16 %v2707
    %v3571 = vunpack.c.l.b16 %v2708
    %v3572 = vunpack.c.h.b16 %v2708
    %v3573 = vunpack.c.l.b16 %v2709
    %v3574 = vunpack.c.l.b16 %v2710
    %v3575 = vunpack.c.h.b16 %v2710
    %v3576 = vunpack.c.l.b16 %v2711
    %v3577 = vunpack.c.l.b16 %v2712
    %v3578 = vunpack.c.h.b16 %v2712
    %v3579 = vunpack.c.l.b16 %v2713
    %v3580 = vunpack.c.l.b16 %v2714
    %v3581 = vunpack.c.h.b16 %v2714
    %v3582 = vunpack.c.l.b16 %v2715
    %v3583 = vunpack.c.l.b16 %v2716
    %v3584 = vunpack.c.h.b16 %v2716
    %v3585 = vunpack.c.l.b16 %v2717
    %v3586 = vunpack.c.l.b16 %v2718
    %v3587 = vunpack.c.h.b16 %v2718
    %v3588 = vunpack.c.l.b16 %v2719
    %v3589 = vunpack.c.l.b16 %v2720
    %v3590 = vunpack.c.h.b16 %v2720
    %v3591 = vunpack.c.l.b16 %v2721
    %v3592 = vunpack.c.l.b16 %v2722
    %v3593 = vunpack.c.h.b16 %v2722
    %v3594 = vunpack.c.l.b16 %v2723
    %v3595 = vunpack.c.l.b16 %v2724
    %v3596 = vunpack.c.h.b16 %v2724
    %v3597 = vunpack.c.l.b16 %v2725
    %v3598 = vunpack.c.l.b16 %v2726
    %v3599 = vunpack.c.h.b16 %v2726
    %v3600 = vunpack.c.l.b16 %v2727
    %v3601 = vunpack.c.l.b16 %v2728
    %v3602 = vunpack.c.h.b16 %v2728
    %v3603 = vunpack.c.l.b16 %v2729
    %v3604 = vunpack.c.l.b16 %v2730
    %v3605 = vunpack.c.h.b16 %v2730
    %v3606 = vunpack.c.l.b16 %v2731
    %v3607 = vunpack.c.l.b16 %v2732
    %v3608 = vunpack.c.h.b16 %v2732
    %v3609 = vunpack.c.l.b16 %v2733
    %v3610 = vunpack.c.l.b16 %v2734
    %v3611 = vunpack.c.h.b16 %v2734
    %v3612 = vunpack.c.l.b16 %v2735
    %v3613 = vunpack.c.l.b16 %v2736
    %v3614 = vunpack.c.h.b16 %v2736
    %v3615 = vunpack.c.l.b16 %v2737
    %v3616 = vunpack.c.l.b16 %v2738
    %v3617 = vunpack.c.h.b16 %v2738
    %v3618 = vunpack.c.l.b16 %v2739
    %v3619 = vunpack.c.l.b16 %v2740
    %v3620 = vunpack.c.h.b16 %v2740
    %v3621 = vunpack.c.l.b16 %v2741
    %v3622 = vunpack.c.l.b16 %v2742
    %v3623 = vunpack.c.h.b16 %v2742
    %v3624 = vunpack.c.l.b16 %v2743
    %v3625 = vunpack.c.l.b16 %v2744
    %v3626 = vunpack.c.h.b16 %v2744
    %v3627 = vunpack.c.l.b16 %v2745
    %v3628 = vunpack.c.l.b16 %v2746
    %v3629 = vunpack.c.h.b16 %v2746
    %v3630 = vunpack.c.l.b16 %v2747
    %v3631 = vunpack.c.l.b16 %v2748
    %v3632 = vunpack.c.h.b16 %v2748
    %v3633 = vunpack.c.l.b16 %v2749
    %v3634 = vunpack.c.l.b16 %v2750
    %v3635 = vunpack.c.h.b16 %v2750
    %v3636 = vunpack.c.l.b16 %v2751
    %v3637 = vunpack.c.l.b16 %v2752
    %v3638 = vunpack.c.h.b16 %v2752
    %v3639 = vunpack.c.l.b16 %v2753
    %v3640 = vunpack.c.l.b16 %v2754
    %v3641 = vunpack.c.h.b16 %v2754
    %v3642 = vunpack.c.l.b16 %v2755
    %v3643 = vunpack.c.l.b16 %v2756
    %v3644 = vunpack.c.h.b16 %v2756
    %v3645 = vunpack.c.l.b16 %v2757
    %v3646 = vunpack.c.l.b16 %v2758
    %v3647 = vunpack.c.h.b16 %v2758
    %v3648 = vunpack.c.l.b16 %v2759
    %v3649 = vunpack.c.l.b16 %v2760
    %v3650 = vunpack.c.h.b16 %v2760
    %v3651 = vunpack.c.l.b16 %v2761
    %v3652 = vunpack.c.l.b16 %v2762
    %v3653 = vunpack.c.h.b16 %v2762
    %v3654 = vunpack.c.l.b16 %v2763
    %v3655 = vunpack.c.l.b16 %v2764
    %v3656 = vunpack.c.h.b16 %v2764
    %v3657 = vunpack.c.l.b16 %v2765
    %v3658 = vunpack.c.l.b16 %v2766
    %v3659 = vunpack.c.h.b16 %v2766
    %v3660 = vunpack.c.l.b16 %v2767
    %v3661 = vunpack.c.l.b16 %v2768
    %v3662 = vunpack.c.h.b16 %v2768
    %v3663 = vunpack.c.l.b16 %v2769
    %v3664 = vunpack.c.l.b16 %v2770
    %v3665 = vunpack.c.h.b16 %v2770
    %v3666 = vunpack.c.l.b16 %v2771
    %v3667 = vunpack.c.l.b16 %v2772
    %v3668 = vunpack.c.h.b16 %v2772
    %v3669 = vunpack.c.l.b16 %v2773
    %v3670 = vunpack.c.l.b16 %v2774
    %v3671 = vunpack.c.h.b16 %v2774
    %v3672 = vunpack.c.l.b16 %v2775
    %v3673 = vunpack.c.l.b16 %v2776
    %v3674 = vunpack.c.h.b16 %v2776
    %v3675 = vunpack.c.l.b16 %v2777
    %v3676 = vunpack.c.l.b16 %v2778
    %v3677 = vunpack.c.h.b16 %v2778
    %v3678 = vunpack.c.l.b16 %v2779
    %v3679 = vunpack.c.l.b16 %v2780
    %v3680 = vunpack.c.h.b16 %v2780
    %v3681 = vunpack.c.l.b16 %v2781
    %v3682 = vunpack.c.l.b16 %v2782
    %v3683 = vunpack.c.h.b16 %v2782
    %v3684 = vunpack.c.l.b16 %v2783
    %v3685 = vunpack.c.l.b16 %v2784
    %v3686 = vunpack.c.h.b16 %v2784
    %v3687 = vunpack.c.l.b16 %v2785
    %v3688 = vunpack.c.l.b16 %v2786
    %v3689 = vunpack.c.h.b16 %v2786
    %v3690 = vunpack.c.l.b16 %v2787
    %v3691 = vunpack.c.l.b16 %v2788
    %v3692 = vunpack.c.h.b16 %v2788
    %v3693 = vunpack.c.l.b16 %v2789
    %v3694 = vunpack.c.l.b16 %v2790
    %v3695 = vunpack.c.h.b16 %v2790
    %v3696 = vunpack.c.l.b16 %v2791
    %v3697 = vunpack.c.l.b16 %v2792
    %v3698 = vunpack.c.h.b16 %v2792
    %v3699 = vunpack.c.l.b16 %v2793
    %v3700 = vunpack.c.l.b16 %v2794
    %v3701 = vunpack.c.h.b16 %v2794
    %v3702 = vunpack.c.l.b16 %v2795
    %v3703 = vunpack.c.l.b16 %v2796
    %v3704 = vunpack.c.h.b16 %v2796
    %v3705 = vunpack.c.l.b16 %v2797
    %v3706 = vunpack.c.l.b16 %v2798
    %v3707 = vunpack.c.h.b16 %v2798
    %v3708 = vunpack.c.l.b16 %v2799
    %v3709 = vunpack.c.l.b16 %v2800
    %v3710 = vunpack.c.h.b16 %v2800
    %v3711 = vunpack.c.l.b16 %v2801
    %v3712 = vunpack.c.l.b16 %v2802
    %v3713 = vunpack.c.h.b16 %v2802
    %v3714 = vunpack.c.l.b16 %v2803
    %v3715 = vunpack.c.l.b16 %v2804
    %v3716 = vunpack.c.h.b16 %v2804
    %v3717 = vunpack.c.l.b16 %v2805
    %v3718 = vunpack.c.l.b16 %v2806
    %v3719 = vunpack.c.h.b16 %v2806
    %v3720 = vunpack.c.l.b16 %v2807
    %v3721 = vunpack.c.l.b16 %v2808
    %v3722 = vunpack.c.h.b16 %v2808
    %v3723 = vunpack.c.l.b16 %v2809
    %v3724 = vunpack.c.l.b16 %v2810
    %v3725 = vunpack.c.h.b16 %v2810
    %v3726 = vunpack.c.l.b16 %v2811
    %v3727 = vunpack.c.l.b16 %v2812
    %v3728 = vunpack.c.h.b16 %v2812
    %v3729 = vunpack.c.l.b16 %v2813
    %v3730 = vunpack.c.l.b16 %v2814
    %v3731 = vunpack.c.h.b16 %v2814
    %v3732 = vunpack.c.l.b16 %v2815
    %v3733 = vunpack.c.l.b16 %v2816
    %v3734 = vunpack.c.h.b16 %v2816
    %v3735 = vunpack.c.l.b16 %v2817
    %v3736 = vunpack.c.l.b16 %v2818
    %v3737 = vunpack.c.h.b16 %v2818
    %v3738 = vunpack.c.l.b16 %v2819
    %v3739 = vunpack.c.l.b16 %v2820
    %v3740 = vunpack.c.h.b16 %v2820
    %v3741 = vunpack.c.l.b16 %v2821
    %v3742 = vunpack.c.l.b16 %v2822
    %v3743 = vunpack.c.h.b16 %v2822
    %v3744 = vunpack.c.l.b16 %v2823
    %v3745 = vunpack.c.l.b16 %v2824
    %v3746 = vunpack.c.h.b16 %v2824
    %v3747 = vunpack.c.l.b16 %v2825
    %v3748 = vunpack.c.l.b16 %v2826
    %v3749 = vunpack.c.h.b16 %v2826
    %v3750 = vunpack.c.l.b16 %v2827
    %v3751 = vunpack.c.l.b16 %v2828
    %v3752 = vunpack.c.h.b16 %v2828
    %v3753 = vunpack.c.l.b16 %v2829
    %v3754 = vunpack.c.l.b16 %v2830
    %v3755 = vunpack.c.h.b16 %v2830
    %v3756 = vunpack.c.l.b16 %v2831
    %v3757 = vunpack.c.l.b16 %v2832
    %v3758 = vunpack.c.h.b16 %v2832
    %v3759 = vunpack.c.l.b16 %v2833
    %v3760 = vunpack.c.l.b16 %v2834
    %v3761 = vunpack.c.h.b16 %v2834
    %v3762 = vunpack.c.l.b16 %v2835
    %v3763 = vunpack.c.l.b16 %v2836
    %v3764 = vunpack.c.h.b16 %v2836
    %v3765 = vunpack.c.l.b16 %v2837
    %v3766 = vunpack.c.l.b16 %v2838
    %v3767 = vunpack.c.h.b16 %v2838
    %v3768 = vunpack.c.l.b16 %v2839
    %v3769 = vunpack.c.l.b16 %v2840
    %v3770 = vunpack.c.h.b16 %v2840
    %v3771 = vunpack.c.l.b16 %v2841
    %v3772 = vunpack.c.l.b16 %v2842
    %v3773 = vunpack.c.h.b16 %v2842
    %v3774 = vunpack.c.l.b16 %v2843
    %v3775 = vunpack.c.l.b16 %v2844
    %v3776 = vunpack.c.h.b16 %v2844
    %v3777 = vunpack.c.l.b16 %v2845
    %v3778 = vunpack.c.l.b16 %v2846
    %v3779 = vunpack.c.h.b16 %v2846
    %v3780 = vunpack.c.l.b16 %v2847
    %v3781 = vunpack.c.l.b16 %v2848
    %v3782 = vunpack.c.h.b16 %v2848
    %v3783 = vunpack.c.l.b16 %v2849
    %v3784 = vunpack.c.l.b16 %v2850
    %v3785 = vunpack.c.h.b16 %v2850
    %v3786 = vunpack.c.l.b16 %v2851
    %v3787 = vunpack.c.l.b16 %v2852
    %v3788 = vunpack.c.h.b16 %v2852
    %v3789 = vunpack.c.l.b16 %v2853
    %v3790 = vunpack.c.l.b16 %v2854
    %v3791 = vunpack.c.h.b16 %v2854
    %v3792 = vunpack.c.l.b16 %v2855
    %v3793 = vunpack.c.l.b16 %v2856
    %v3794 = vunpack.c.h.b16 %v2856
    %v3795 = vunpack.c.l.b16 %v2857
    %v3796 = vunpack.c.l.b16 %v2858
    %v3797 = vunpack.c.h.b16 %v2858
    %v3798 = vunpack.c.l.b16 %v2859
    %v3799 = vunpack.c.l.b16 %v2860
    %v3800 = vunpack.c.h.b16 %v2860
    %v3801 = vunpack.c.l.b16 %v2861
    %v3802 = vunpack.c.l.b16 %v2862
    %v3803 = vunpack.c.h.b16 %v2862
    %v3804 = vunpack.c.l.b16 %v2863
    %v3805 = vunpack.c.l.b16 %v2864
    %v3806 = vunpack.c.h.b16 %v2864
    %v3807 = vunpack.c.l.b16 %v2865
    %v3808 = vunpack.c.l.b16 %v2866
    %v3809 = vunpack.c.h.b16 %v2866
    %v3810 = vunpack.c.l.b16 %v2867
    %v3811 = vunpack.c.l.b16 %v2868
    %v3812 = vunpack.c.h.b16 %v2868
    %v3813 = vunpack.c.l.b16 %v2869
    %v3814 = vunpack.c.l.b16 %v2870
    %v3815 = vunpack.c.h.b16 %v2870
    %v3816 = vunpack.c.l.b16 %v2871
    %v3817 = vunpack.c.l.b16 %v2872
    %v3818 = vunpack.c.h.b16 %v2872
    %v3819 = vunpack.c.l.b16 %v2873
    %v3820 = vunpack.c.l.b16 %v2874
    %v3821 = vunpack.c.h.b16 %v2874
    %v3822 = vunpack.c.l.b16 %v2875
    %v3823 = vunpack.c.l.b16 %v2876
    %v3824 = vunpack.c.h.b16 %v2876
    %v3825 = vunpack.c.l.b16 %v2877
    %v3826 = vunpack.c.l.b16 %v2878
    %v3827 = vunpack.c.h.b16 %v2878
    %v3828 = vunpack.c.l.b16 %v2879
    %v3829 = vunpack.c.l.b16 %v2880
    %v3830 = vunpack.c.h.b16 %v2880
    %v3831 = vunpack.c.l.b16 %v2881
    %v3832 = vunpack.c.l.b16 %v2882
    %v3833 = vunpack.c.h.b16 %v2882
    %v3834 = vunpack.c.l.b16 %v2883
    %v3835 = vunpack.c.l.b16 %v2884
    %v3836 = vunpack.c.h.b16 %v2884
    %v3837 = vunpack.c.l.b16 %v2885
    %v3838 = vunpack.c.l.b16 %v2886
    %v3839 = vunpack.c.h.b16 %v2886
    %v3840 = vunpack.c.l.b16 %v2887
    %v3841 = vunpack.c.l.b16 %v2888
    %v3842 = vunpack.c.h.b16 %v2888
    %v3843 = vunpack.c.l.b16 %v2889
    %v3844 = vunpack.c.l.b16 %v2890
    %v3845 = vunpack.c.h.b16 %v2890
    %v3846 = vunpack.c.l.b16 %v2891
    %v3847 = vunpack.c.l.b16 %v2892
    %v3848 = vunpack.c.h.b16 %v2892
    %v3849 = vunpack.c.l.b16 %v2893
    %v3850 = vunpack.c.l.b16 %v2894
    %v3851 = vunpack.c.h.b16 %v2894
    %v3852 = vunpack.c.l.b16 %v2895
    %v3853 = vunpack.c.l.b16 %v2896
    %v3854 = vunpack.c.h.b16 %v2896
    %v3855 = vunpack.c.l.b16 %v2897
    %v3856 = vunpack.c.l.b16 %v2898
    %v3857 = vunpack.c.h.b16 %v2898
    %v3858 = vunpack.c.l.b16 %v2899
    %v3859 = vunpack.c.l.b16 %v2900
    %v3860 = vunpack.c.h.b16 %v2900
    %v3861 = vunpack.c.l.b16 %v2901
    %v3862 = vunpack.c.l.b16 %v2902
    %v3863 = vunpack.c.h.b16 %v2902
    %v3864 = vunpack.c.l.b16 %v2903
    %v3865 = vunpack.c.l.b16 %v2904
    %v3866 = vunpack.c.h.b16 %v2904
    %v3867 = vunpack.c.l.b16 %v2905
    %v3868 = vunpack.c.l.b16 %v2906
    %v3869 = vunpack.c.h.b16 %v2906
    %v3870 = vunpack.c.l.b16 %v2907
    %v3871 = vunpack.c.l.b16 %v2908
    %v3872 = vunpack.c.h.b16 %v2908
    %v3873 = vunpack.c.l.b16 %v2909
    %v3874 = vunpack.c.l.b16 %v2910
    %v3875 = vunpack.c.h.b16 %v2910
    %v3876 = vunpack.c.l.b16 %v2911
    %v3877 = vunpack.c.l.b16 %v2912
    %v3878 = vunpack.c.h.b16 %v2912
    %v3879 = vunpack.c.l.b16 %v2913
    %v3880 = vunpack.c.l.b16 %v2914
    %v3881 = vunpack.c.h.b16 %v2914
    %v3882 = vunpack.c.l.b16 %v2915
    %v3883 = vunpack.c.l.b16 %v2916
    %v3884 = vunpack.c.h.b16 %v2916
    %v3885 = vunpack.c.l.b16 %v2917
    %v3886 = vpack.c.b16 %v3313, %v3310
    %v3887 = vpack.c.b16 %v3314, %v3311
    %v3888 = vpack.c.b16 %v3315, %v3312
    %v3889 = vpack.c.b16 %v3319, %v3316
    %v3890 = vpack.c.b16 %v3320, %v3317
    %v3891 = vpack.c.b16 %v3321, %v3318
    %v3892 = vpack.c.b16 %v3325, %v3322
    %v3893 = vpack.c.b16 %v3326, %v3323
    %v3894 = vpack.c.b16 %v3327, %v3324
    %v3895 = vpack.c.b16 %v3331, %v3328
    %v3896 = vpack.c.b16 %v3332, %v3329
    %v3897 = vpack.c.b16 %v3333, %v3330
    %v3898 = vpack.c.b16 %v3337, %v3334
    %v3899 = vpack.c.b16 %v3338, %v3335
    %v3900 = vpack.c.b16 %v3339, %v3336
    %v3901 = vpack.c.b16 %v3343, %v3340
    %v3902 = vpack.c.b16 %v3344, %v3341
    %v3903 = vpack.c.b16 %v3345, %v3342
    %v3904 = vpack.c.b16 %v3349, %v3346
    %v3905 = vpack.c.b16 %v3350, %v3347
    %v3906 = vpack.c.b16 %v3351, %v3348
    %v3907 = vpack.c.b16 %v3355, %v3352
    %v3908 = vpack.c.b16 %v3356, %v3353
    %v3909 = vpack.c.b16 %v3357, %v3354
    %v3910 = vpack.c.b16 %v3361, %v3358
    %v3911 = vpack.c.b16 %v3362, %v3359
    %v3912 = vpack.c.b16 %v3363, %v3360
    %v3913 = vpack.c.b16 %v3367, %v3364
    %v3914 = vpack.c.b16 %v3368, %v3365
    %v3915 = vpack.c.b16 %v3369, %v3366
    %v3916 = vpack.c.b16 %v3373, %v3370
    %v3917 = vpack.c.b16 %v3374, %v3371
    %v3918 = vpack.c.b16 %v3375, %v3372
    %v3919 = vpack.c.b16 %v3379, %v3376
    %v3920 = vpack.c.b16 %v3380, %v3377
    %v3921 = vpack.c.b16 %v3381, %v3378
    %v3922 = vpack.c.b16 %v3385, %v3382
    %v3923 = vpack.c.b16 %v3386, %v3383
    %v3924 = vpack.c.b16 %v3387, %v3384
    %v3925 = vpack.c.b16 %v3391, %v3388
    %v3926 = vpack.c.b16 %v3392, %v3389
    %v3927 = vpack.c.b16 %v3393, %v3390
    %v3928 = vpack.c.b16 %v3397, %v3394
    %v3929 = vpack.c.b16 %v3398, %v3395
    %v3930 = vpack.c.b16 %v3399, %v3396
    %v3931 = vpack.c.b16 %v3403, %v3400
    %v3932 = vpack.c.b16 %v3404, %v3401
    %v3933 = vpack.c.b16 %v3405, %v3402
    %v3934 = vpack.c.b16 %v3409, %v3406
    %v3935 = vpack.c.b16 %v3410, %v3407
    %v3936 = vpack.c.b16 %v3411, %v3408
    %v3937 = vpack.c.b16 %v3415, %v3412
    %v3938 = vpack.c.b16 %v3416, %v3413
    %v3939 = vpack.c.b16 %v3417, %v3414
    %v3940 = vpack.c.b16 %v3421, %v3418
    %v3941 = vpack.c.b16 %v3422, %v3419
    %v3942 = vpack.c.b16 %v3423, %v3420
    %v3943 = vpack.c.b16 %v3427, %v3424
    %v3944 = vpack.c.b16 %v3428, %v3425
    %v3945 = vpack.c.b16 %v3429, %v3426
    %v3946 = vpack.c.b16 %v3433, %v3430
    %v3947 = vpack.c.b16 %v3434, %v3431
    %v3948 = vpack.c.b16 %v3435, %v3432
    %v3949 = vpack.c.b16 %v3439, %v3436
    %v3950 = vpack.c.b16 %v3440, %v3437
    %v3951 = vpack.c.b16 %v3441, %v3438
    %v3952 = vpack.c.b16 %v3445, %v3442
    %v3953 = vpack.c.b16 %v3446, %v3443
    %v3954 = vpack.c.b16 %v3447, %v3444
    %v3955 = vpack.c.b16 %v3451, %v3448
    %v3956 = vpack.c.b16 %v3452, %v3449
    %v3957 = vpack.c.b16 %v3453, %v3450
    %v3958 = vpack.c.b16 %v3457, %v3454
    %v3959 = vpack.c.b16 %v3458, %v3455
    %v3960 = vpack.c.b16 %v3459, %v3456
    %v3961 = vpack.c.b16 %v3463, %v3460
    %v3962 = vpack.c.b16 %v3464, %v3461
    %v3963 = vpack.c.b16 %v3465, %v3462
    %v3964 = vpack.c.b16 %v3469, %v3466
    %v3965 = vpack.c.b16 %v3470, %v3467
    %v3966 = vpack.c.b16 %v3471, %v3468
    %v3967 = vpack.c.b16 %v3475, %v3472
    %v3968 = vpack.c.b16 %v3476, %v3473
    %v3969 = vpack.c.b16 %v3477, %v3474
    %v3970 = vpack.c.b16 %v3481, %v3478
    %v3971 = vpack.c.b16 %v3482, %v3479
    %v3972 = vpack.c.b16 %v3483, %v3480
    %v3973 = vpack.c.b16 %v3487, %v3484
    %v3974 = vpack.c.b16 %v3488, %v3485
    %v3975 = vpack.c.b16 %v3489, %v3486
    %v3976 = vpack.c.b16 %v3493, %v3490
    %v3977 = vpack.c.b16 %v3494, %v3491
    %v3978 = vpack.c.b16 %v3495, %v3492
    %v3979 = vpack.c.b16 %v3499, %v3496
    %v3980 = vpack.c.b16 %v3500, %v3497
    %v3981 = vpack.c.b16 %v3501, %v3498
    %v3982 = vpack.c.b16 %v3505, %v3502
    %v3983 = vpack.c.b16 %v3506, %v3503
    %v3984 = vpack.c.b16 %v3507, %v3504
    %v3985 = vpack.c.b16 %v3511, %v3508
    %v3986 = vpack.c.b16 %v3512, %v3509
    %v3987 = vpack.c.b16 %v3513, %v3510
    %v3988 = vpack.c.b16 %v3517, %v3514
    %v3989 = vpack.c.b16 %v3518, %v3515
    %v3990 = vpack.c.b16 %v3519, %v3516
    %v3991 = vpack.c.b16 %v3523, %v3520
    %v3992 = vpack.c.b16 %v3524, %v3521
    %v3993 = vpack.c.b16 %v3525, %v3522
    %v3994 = vpack.c.b16 %v3529, %v3526
    %v3995 = vpack.c.b16 %v3530, %v3527
    %v3996 = vpack.c.b16 %v3531, %v3528
    %v3997 = vpack.c.b16 %v3535, %v3532
    %v3998 = vpack.c.b16 %v3536, %v3533
    %v3999 = vpack.c.b16 %v3537, %v3534
    %v4000 = vpack.c.b16 %v3541, %v3538
    %v4001 = vpack.c.b16 %v3542, %v3539
    %v4002 = vpack.c.b16 %v3543, %v3540
    %v4003 = vpack.c.b16 %v3547, %v3544
    %v4004 = vpack.c.b16 %v3548, %v3545
    %v4005 = vpack.c.b16 %v3549, %v3546
    %v4006 = vpack.c.b16 %v3553, %v3550
    %v4007 = vpack.c.b16 %v3554, %v3551
    %v4008 = vpack.c.b16 %v3555, %v3552
    %v4009 = vpack.c.b16 %v3559, %v3556
    %v4010 = vpack.c.b16 %v3560, %v3557
    %v4011 = vpack.c.b16 %v3561, %v3558
    %v4012 = vpack.c.b16 %v3565, %v3562
    %v4013 = vpack.c.b16 %v3566, %v3563
    %v4014 = vpack.c.b16 %v3567, %v3564
    %v4015 = vpack.c.b16 %v3571, %v3568
    %v4016 = vpack.c.b16 %v3572, %v3569
    %v4017 = vpack.c.b16 %v3573, %v3570
    %v4018 = vpack.c.b16 %v3577, %v3574
    %v4019 = vpack.c.b16 %v3578, %v3575
    %v4020 = vpack.c.b16 %v3579, %v3576
    %v4021 = vpack.c.b16 %v3583, %v3580
    %v4022 = vpack.c.b16 %v3584, %v3581
    %v4023 = vpack.c.b16 %v3585, %v3582
    %v4024 = vpack.c.b16 %v3589, %v3586
    %v4025 = vpack.c.b16 %v3590, %v3587
    %v4026 = vpack.c.b16 %v3591, %v3588
    %v4027 = vpack.c.b16 %v3595, %v3592
    %v4028 = vpack.c.b16 %v3596, %v3593
    %v4029 = vpack.c.b16 %v3597, %v3594
    %v4030 = vpack.c.b16 %v3601, %v3598
    %v4031 = vpack.c.b16 %v3602, %v3599
    %v4032 = vpack.c.b16 %v3603, %v3600
    %v4033 = vpack.c.b16 %v3607, %v3604
    %v4034 = vpack.c.b16 %v3608, %v3605
    %v4035 = vpack.c.b16 %v3609, %v3606
    %v4036 = vpack.c.b16 %v3613, %v3610
    %v4037 = vpack.c.b16 %v3614, %v3611
    %v4038 = vpack.c.b16 %v3615, %v3612
    %v4039 = vpack.c.b16 %v3619, %v3616
    %v4040 = vpack.c.b16 %v3620, %v3617
    %v4041 = vpack.c.b16 %v3621, %v3618
    %v4042 = vpack.c.b16 %v3625, %v3622
    %v4043 = vpack.c.b16 %v3626, %v3623
    %v4044 = vpack.c.b16 %v3627, %v3624
    %v4045 = vpack.c.b16 %v3631, %v3628
    %v4046 = vpack.c.b16 %v3632, %v3629
    %v4047 = vpack.c.b16 %v3633, %v3630
    %v4048 = vpack.c.b16 %v3637, %v3634
    %v4049 = vpack.c.b16 %v3638, %v3635
    %v4050 = vpack.c.b16 %v3639, %v3636
    %v4051 = vpack.c.b16 %v3643, %v3640
    %v4052 = vpack.c.b16 %v3644, %v3641
    %v4053 = vpack.c.b16 %v3645, %v3642
    %v4054 = vpack.c.b16 %v3649, %v3646
    %v4055 = vpack.c.b16 %v3650, %v3647
    %v4056 = vpack.c.b16 %v3651, %v3648
    %v4057 = vpack.c.b16 %v3655, %v3652
    %v4058 = vpack.c.b16 %v3656, %v3653
    %v4059 = vpack.c.b16 %v3657, %v3654
    %v4060 = vpack.c.b16 %v3661, %v3658
    %v4061 = vpack.c.b16 %v3662, %v3659
    %v4062 = vpack.c.b16 %v3663, %v3660
    %v4063 = vpack.c.b16 %v3667, %v3664
    %v4064 = vpack.c.b16 %v3668, %v3665
    %v4065 = vpack.c.b16 %v3669, %v3666
    %v4066 = vpack.c.b16 %v3673, %v3670
    %v4067 = vpack.c.b16 %v3674, %v3671
    %v4068 = vpack.c.b16 %v3675, %v3672
    %v4069 = vpack.c.b16 %v3679, %v3676
    %v4070 = vpack.c.b16 %v3680, %v3677
    %v4071 = vpack.c.b16 %v3681, %v3678
    %v4072 = vpack.c.b16 %v3685, %v3682
    %v4073 = vpack.c.b16 %v3686, %v3683
    %v4074 = vpack.c.b16 %v3687, %v3684
    %v4075 = vpack.c.b16 %v3691, %v3688
    %v4076 = vpack.c.b16 %v3692, %v3689
    %v4077 = vpack.c.b16 %v3693, %v3690
    %v4078 = vpack.c.b16 %v3697, %v3694
    %v4079 = vpack.c.b16 %v3698, %v3695
    %v4080 = vpack.c.b16 %v3699, %v3696
    %v4081 = vpack.c.b16 %v3703, %v3700
    %v4082 = vpack.c.b16 %v3704, %v3701
    %v4083 = vpack.c.b16 %v3705, %v3702
    %v4084 = vpack.c.b16 %v3709, %v3706
    %v4085 = vpack.c.b16 %v3710, %v3707
    %v4086 = vpack.c.b16 %v3711, %v3708
    %v4087 = vpack.c.b16 %v3715, %v3712
    %v4088 = vpack.c.b16 %v3716, %v3713
    %v4089 = vpack.c.b16 %v3717, %v3714
    %v4090 = vpack.c.b16 %v3721, %v3718
    %v4091 = vpack.c.b16 %v3722, %v3719
    %v4092 = vpack.c.b16 %v3723, %v3720
    %v4093 = vpack.c.b16 %v3727, %v3724
    %v4094 = vpack.c.b16 %v3728, %v3725
    %v4095 = vpack.c.b16 %v3729, %v3726
    %v4096 = vpack.c.b16 %v3733, %v3730
    %v4097 = vpack.c.b16 %v3734, %v3731
    %v4098 = vpack.c.b16 %v3735, %v3732
    %v4099 = vpack.c.b16 %v3739, %v3736
    %v4100 = vpack.c.b16 %v3740, %v3737
    %v4101 = vpack.c.b16 %v3741, %v3738
    %v4102 = vpack.c.b16 %v3745, %v3742
    %v4103 = vpack.c.b16 %v3746, %v3743
    %v4104 = vpack.c.b16 %v3747, %v3744
    %v4105 = vpack.c.b16 %v3751, %v3748
    %v4106 = vpack.c.b16 %v3752, %v3749
    %v4107 = vpack.c.b16 %v3753, %v3750
    %v4108 = vpack.c.b16 %v3757, %v3754
    %v4109 = vpack.c.b16 %v3758, %v3755
    %v4110 = vpack.c.b16 %v3759, %v3756
    %v4111 = vpack.c.b16 %v3763, %v3760
    %v4112 = vpack.c.b16 %v3764, %v3761
    %v4113 = vpack.c.b16 %v3765, %v3762
    %v4114 = vpack.c.b16 %v3769, %v3766
    %v4115 = vpack.c.b16 %v3770, %v3767
    %v4116 = vpack.c.b16 %v3771, %v3768
    %v4117 = vpack.c.b16 %v3775, %v3772
    %v4118 = vpack.c.b16 %v3776, %v3773
    %v4119 = vpack.c.b16 %v3777, %v3774
    %v4120 = vpack.c.b16 %v3781, %v3778
    %v4121 = vpack.c.b16 %v3782, %v3779
    %v4122 = vpack.c.b16 %v3783, %v3780
    %v4123 = vpack.c.b16 %v3787, %v3784
    %v4124 = vpack.c.b16 %v3788, %v3785
    %v4125 = vpack.c.b16 %v3789, %v3786
    %v4126 = vpack.c.b16 %v3793, %v3790
    %v4127 = vpack.c.b16 %v3794, %v3791
    %v4128 = vpack.c.b16 %v3795, %v3792
    %v4129 = vpack.c.b16 %v3799, %v3796
    %v4130 = vpack.c.b16 %v3800, %v3797
    %v4131 = vpack.c.b16 %v3801, %v3798
    %v4132 = vpack.c.b16 %v3805, %v3802
    %v4133 = vpack.c.b16 %v3806, %v3803
    %v4134 = vpack.c.b16 %v3807, %v3804
    %v4135 = vpack.c.b16 %v3811, %v3808
    %v4136 = vpack.c.b16 %v3812, %v3809
    %v4137 = vpack.c.b16 %v3813, %v3810
    %v4138 = vpack.c.b16 %v3817, %v3814
    %v4139 = vpack.c.b16 %v3818, %v3815
    %v4140 = vpack.c.b16 %v3819, %v3816
    %v4141 = vpack.c.b16 %v3823, %v3820
    %v4142 = vpack.c.b16 %v3824, %v3821
    %v4143 = vpack.c.b16 %v3825, %v3822
    %v4144 = vpack.c.b16 %v3829, %v3826
    %v4145 = vpack.c.b16 %v3830, %v3827
    %v4146 = vpack.c.b16 %v3831, %v3828
    %v4147 = vpack.c.b16 %v3835, %v3832
    %v4148 = vpack.c.b16 %v3836, %v3833
    %v4149 = vpack.c.b16 %v3837, %v3834
    %v4150 = vpack.c.b16 %v3841, %v3838
    %v4151 = vpack.c.b16 %v3842, %v3839
    %v4152 = vpack.c.b16 %v3843, %v3840
    %v4153 = vpack.c.b16 %v3847, %v3844
    %v4154 = vpack.c.b16 %v3848, %v3845
    %v4155 = vpack.c.b16 %v3849, %v3846
    %v4156 = vpack.c.b16 %v3853, %v3850
    %v4157 = vpack.c.b16 %v3854, %v3851
    %v4158 = vpack.c.b16 %v3855, %v3852
    %v4159 = vpack.c.b16 %v3859, %v3856
    %v4160 = vpack.c.b16 %v3860, %v3857
    %v4161 = vpack.c.b16 %v3861, %v3858
    %v4162 = vpack.c.b16 %v3865, %v3862
    %v4163 = vpack.c.b16 %v3866, %v3863
    %v4164 = vpack.c.b16 %v3867, %v3864
    %v4165 = vpack.c.b16 %v3871, %v3868
    %v4166 = vpack.c.b16 %v3872, %v3869
    %v4167 = vpack.c.b16 %v3873, %v3870
    %v4168 = vpack.c.b16 %v3877, %v3874
    %v4169 = vpack.c.b16 %v3878, %v3875
    %v4170 = vpack.c.b16 %v3879, %v3876
    %v4171 = vpack.c.b16 %v3883, %v3880
    %v4172 = vpack.c.b16 %v3884, %v3881
    %v4173 = vpack.c.b16 %v3885, %v3882
    %4462 = vmatpush.bf16.msra.mxu0 %v3907
    %4463 = vmatpush.bf16.msra.mxu0 %v3904
    %4464 = vmatpush.bf16.msra.mxu0 %v3901
    %4465 = vmatpush.bf16.msra.mxu0 %v3898
    %4466 = vmatpush.bf16.msra.mxu0 %v3895
    %4467 = vmatpush.bf16.msra.mxu0 %v3892
    %4468 = vmatpush.bf16.msra.mxu0 %v3889
    %4469 = vmatpush.bf16.msra.mxu0 %v3886
    %4470 = vmatmul.bf16.gmra.mxu0 %v2522
    %v4471 = vpop.f32.mrf.mxu0
    %v4472 = vadd.f32 %v2920, %v4471
    %v4473 = vpop.f32.mrf.mxu0
    %v4474 = vadd.f32 %v2920, %v4473
    %4475 = vdwg.mxu0
    %4476 = vmatpush.bf16.msra.mxu0 %v3931
    %4477 = vmatpush.bf16.msra.mxu0 %v3928
    %4478 = vmatpush.bf16.msra.mxu0 %v3925
    %4479 = vmatpush.bf16.msra.mxu0 %v3922
    %4480 = vmatpush.bf16.msra.mxu0 %v3919
    %4481 = vmatpush.bf16.msra.mxu0 %v3916
    %4482 = vmatpush.bf16.msra.mxu0 %v3913
    %4483 = vmatpush.bf16.msra.mxu0 %v3910
    %4484 = vmatmul.bf16.gmra.mxu0 %v2523
    %v4485 = vpop.f32.mrf.mxu0
    %v4486 = vadd.f32 %v4472, %v4485
    %v4487 = vpop.f32.mrf.mxu0
    %v4488 = vadd.f32 %v4474, %v4487
    %4489 = vdwg.mxu0
    %4490 = vmatpush.bf16.msra.mxu0 %v3955
    %4491 = vmatpush.bf16.msra.mxu0 %v3952
    %4492 = vmatpush.bf16.msra.mxu0 %v3949
    %4493 = vmatpush.bf16.msra.mxu0 %v3946
    %4494 = vmatpush.bf16.msra.mxu0 %v3943
    %4495 = vmatpush.bf16.msra.mxu0 %v3940
    %4496 = vmatpush.bf16.msra.mxu0 %v3937
    %4497 = vmatpush.bf16.msra.mxu0 %v3934
    %4498 = vmatmul.bf16.gmra.mxu0 %v2524
    %v4499 = vpop.f32.mrf.mxu0
    %v4500 = vadd.f32 %v4486, %v4499
    %v4501 = vpop.f32.mrf.mxu0
    %v4502 = vadd.f32 %v4488, %v4501
    %4503 = vdwg.mxu0
    %4504 = vmatpush.bf16.msra.mxu0 %v3979
    %4505 = vmatpush.bf16.msra.mxu0 %v3976
    %4506 = vmatpush.bf16.msra.mxu0 %v3973
    %4507 = vmatpush.bf16.msra.mxu0 %v3970
    %4508 = vmatpush.bf16.msra.mxu0 %v3967
    %4509 = vmatpush.bf16.msra.mxu0 %v3964
    %4510 = vmatpush.bf16.msra.mxu0 %v3961
    %4511 = vmatpush.bf16.msra.mxu0 %v3958
    %4512 = vmatmul.bf16.gmra.mxu0 %v2525
    %v4513 = vpop.f32.mrf.mxu0
    %v4514 = vadd.f32 %v4500, %v4513
    %v4515 = vpop.f32.mrf.mxu0
    %v4516 = vadd.f32 %v4502, %v4515
    %4517 = vdwg.mxu0
    %4518 = vmatpush.bf16.msra.mxu0 %v4003
    %4519 = vmatpush.bf16.msra.mxu0 %v4000
    %4520 = vmatpush.bf16.msra.mxu0 %v3997
    %4521 = vmatpush.bf16.msra.mxu0 %v3994
    %4522 = vmatpush.bf16.msra.mxu0 %v3991
    %4523 = vmatpush.bf16.msra.mxu0 %v3988
    %4524 = vmatpush.bf16.msra.mxu0 %v3985
    %4525 = vmatpush.bf16.msra.mxu0 %v3982
    %4526 = vmatmul.bf16.gmra.mxu0 %v2526
    %v4527 = vpop.f32.mrf.mxu0
    %v4528 = vadd.f32 %v4514, %v4527
    %v4529 = vpop.f32.mrf.mxu0
    %v4530 = vadd.f32 %v4516, %v4529
    %4531 = vdwg.mxu0
    %4532 = vmatpush.bf16.msra.mxu0 %v4027
    %4533 = vmatpush.bf16.msra.mxu0 %v4024
    %4534 = vmatpush.bf16.msra.mxu0 %v4021
    %4535 = vmatpush.bf16.msra.mxu0 %v4018
    %4536 = vmatpush.bf16.msra.mxu0 %v4015
    %4537 = vmatpush.bf16.msra.mxu0 %v4012
    %4538 = vmatpush.bf16.msra.mxu0 %v4009
    %4539 = vmatpush.bf16.msra.mxu0 %v4006
    %4540 = vmatmul.bf16.gmra.mxu0 %v2527
    %v4541 = vpop.f32.mrf.mxu0
    %v4542 = vadd.f32 %v4528, %v4541
    %v4543 = vpop.f32.mrf.mxu0
    %v4544 = vadd.f32 %v4530, %v4543
    %4545 = vdwg.mxu0
    %4546 = vmatpush.bf16.msra.mxu0 %v4051
    %4547 = vmatpush.bf16.msra.mxu0 %v4048
    %4548 = vmatpush.bf16.msra.mxu0 %v4045
    %4549 = vmatpush.bf16.msra.mxu0 %v4042
    %4550 = vmatpush.bf16.msra.mxu0 %v4039
    %4551 = vmatpush.bf16.msra.mxu0 %v4036
    %4552 = vmatpush.bf16.msra.mxu0 %v4033
    %4553 = vmatpush.bf16.msra.mxu0 %v4030
    %4554 = vmatmul.bf16.gmra.mxu0 %v2528
    %v4555 = vpop.f32.mrf.mxu0
    %v4556 = vadd.f32 %v4542, %v4555
    %v4557 = vpop.f32.mrf.mxu0
    %v4558 = vadd.f32 %v4544, %v4557
    %4559 = vdwg.mxu0
    %4560 = vmatpush.bf16.msra.mxu0 %v4075
    %4561 = vmatpush.bf16.msra.mxu0 %v4072
    %4562 = vmatpush.bf16.msra.mxu0 %v4069
    %4563 = vmatpush.bf16.msra.mxu0 %v4066
    %4564 = vmatpush.bf16.msra.mxu0 %v4063
    %4565 = vmatpush.bf16.msra.mxu0 %v4060
    %4566 = vmatpush.bf16.msra.mxu0 %v4057
    %4567 = vmatpush.bf16.msra.mxu0 %v4054
    %4568 = vmatmul.bf16.gmra.mxu0 %v2529
    %v4569 = vpop.f32.mrf.mxu0
    %v4570 = vadd.f32 %v4556, %v4569
    %v4571 = vpop.f32.mrf.mxu0
    %v4572 = vadd.f32 %v4558, %v4571
    %4573 = vdwg.mxu0
    %4574 = vmatpush.bf16.msra.mxu0 %v4099
    %4575 = vmatpush.bf16.msra.mxu0 %v4096
    %4576 = vmatpush.bf16.msra.mxu0 %v4093
    %4577 = vmatpush.bf16.msra.mxu0 %v4090
    %4578 = vmatpush.bf16.msra.mxu0 %v4087
    %4579 = vmatpush.bf16.msra.mxu0 %v4084
    %4580 = vmatpush.bf16.msra.mxu0 %v4081
    %4581 = vmatpush.bf16.msra.mxu0 %v4078
    %4582 = vmatmul.bf16.gmra.mxu0 %v2530
    %v4583 = vpop.f32.mrf.mxu0
    %v4584 = vadd.f32 %v4570, %v4583
    %v4585 = vpop.f32.mrf.mxu0
    %v4586 = vadd.f32 %v4572, %v4585
    %4587 = vdwg.mxu0
    %4588 = vmatpush.bf16.msra.mxu0 %v4123
    %4589 = vmatpush.bf16.msra.mxu0 %v4120
    %4590 = vmatpush.bf16.msra.mxu0 %v4117
    %4591 = vmatpush.bf16.msra.mxu0 %v4114
    %4592 = vmatpush.bf16.msra.mxu0 %v4111
    %4593 = vmatpush.bf16.msra.mxu0 %v4108
    %4594 = vmatpush.bf16.msra.mxu0 %v4105
    %4595 = vmatpush.bf16.msra.mxu0 %v4102
    %4596 = vmatmul.bf16.gmra.mxu0 %v2531
    %v4597 = vpop.f32.mrf.mxu0
    %v4598 = vadd.f32 %v4584, %v4597
    %v4599 = vpop.f32.mrf.mxu0
    %v4600 = vadd.f32 %v4586, %v4599
    %4601 = vdwg.mxu0
    %4602 = vmatpush.bf16.msra.mxu0 %v4147
    %4603 = vmatpush.bf16.msra.mxu0 %v4144
    %4604 = vmatpush.bf16.msra.mxu0 %v4141
    %4605 = vmatpush.bf16.msra.mxu0 %v4138
    %4606 = vmatpush.bf16.msra.mxu0 %v4135
    %4607 = vmatpush.bf16.msra.mxu0 %v4132
    %4608 = vmatpush.bf16.msra.mxu0 %v4129
    %4609 = vmatpush.bf16.msra.mxu0 %v4126
    %4610 = vmatmul.bf16.gmra.mxu0 %v2532
    %v4611 = vpop.f32.mrf.mxu0
    %v4612 = vadd.f32 %v4598, %v4611
    %v4613 = vpop.f32.mrf.mxu0
    %v4614 = vadd.f32 %v4600, %v4613
    %4615 = vdwg.mxu0
    %4616 = vmatpush.bf16.msra.mxu0 %v4171
    %4617 = vmatpush.bf16.msra.mxu0 %v4168
    %4618 = vmatpush.bf16.msra.mxu0 %v4165
    %4619 = vmatpush.bf16.msra.mxu0 %v4162
    %4620 = vmatpush.bf16.msra.mxu0 %v4159
    %4621 = vmatpush.bf16.msra.mxu0 %v4156
    %4622 = vmatpush.bf16.msra.mxu0 %v4153
    %4623 = vmatpush.bf16.msra.mxu0 %v4150
    %4624 = vmatmul.bf16.gmra.mxu0 %v2533
    %v4625 = vpop.f32.mrf.mxu0
    %v4626 = vadd.f32 %v4612, %v4625
    %v4627 = vpop.f32.mrf.mxu0
    %v4628 = vadd.f32 %v4614, %v4627
    %4629 = vdwg.mxu0
    %4630 = vmatpush.bf16.msra.mxu0 %v3908
    %4631 = vmatpush.bf16.msra.mxu0 %v3905
    %4632 = vmatpush.bf16.msra.mxu0 %v3902
    %4633 = vmatpush.bf16.msra.mxu0 %v3899
    %4634 = vmatpush.bf16.msra.mxu0 %v3896
    %4635 = vmatpush.bf16.msra.mxu0 %v3893
    %4636 = vmatpush.bf16.msra.mxu0 %v3890
    %4637 = vmatpush.bf16.msra.mxu0 %v3887
    %4638 = vmatmul.bf16.gmra.mxu0 %v2522
    %v4639 = vpop.f32.mrf.mxu0
    %v4640 = vadd.f32 %v2921, %v4639
    %v4641 = vpop.f32.mrf.mxu0
    %v4642 = vadd.f32 %v2921, %v4641
    %4643 = vdwg.mxu0
    %4644 = vmatpush.bf16.msra.mxu0 %v3932
    %4645 = vmatpush.bf16.msra.mxu0 %v3929
    %4646 = vmatpush.bf16.msra.mxu0 %v3926
    %4647 = vmatpush.bf16.msra.mxu0 %v3923
    %4648 = vmatpush.bf16.msra.mxu0 %v3920
    %4649 = vmatpush.bf16.msra.mxu0 %v3917
    %4650 = vmatpush.bf16.msra.mxu0 %v3914
    %4651 = vmatpush.bf16.msra.mxu0 %v3911
    %4652 = vmatmul.bf16.gmra.mxu0 %v2523
    %v4653 = vpop.f32.mrf.mxu0
    %v4654 = vadd.f32 %v4640, %v4653
    %v4655 = vpop.f32.mrf.mxu0
    %v4656 = vadd.f32 %v4642, %v4655
    %4657 = vdwg.mxu0
    %4658 = vmatpush.bf16.msra.mxu0 %v3956
    %4659 = vmatpush.bf16.msra.mxu0 %v3953
    %4660 = vmatpush.bf16.msra.mxu0 %v3950
    %4661 = vmatpush.bf16.msra.mxu0 %v3947
    %4662 = vmatpush.bf16.msra.mxu0 %v3944
    %4663 = vmatpush.bf16.msra.mxu0 %v3941
    %4664 = vmatpush.bf16.msra.mxu0 %v3938
    %4665 = vmatpush.bf16.msra.mxu0 %v3935
    %4666 = vmatmul.bf16.gmra.mxu0 %v2524
    %v4667 = vpop.f32.mrf.mxu0
    %v4668 = vadd.f32 %v4654, %v4667
    %v4669 = vpop.f32.mrf.mxu0
    %v4670 = vadd.f32 %v4656, %v4669
    %4671 = vdwg.mxu0
    %4672 = vmatpush.bf16.msra.mxu0 %v3980
    %4673 = vmatpush.bf16.msra.mxu0 %v3977
    %4674 = vmatpush.bf16.msra.mxu0 %v3974
    %4675 = vmatpush.bf16.msra.mxu0 %v3971
    %4676 = vmatpush.bf16.msra.mxu0 %v3968
    %4677 = vmatpush.bf16.msra.mxu0 %v3965
    %4678 = vmatpush.bf16.msra.mxu0 %v3962
    %4679 = vmatpush.bf16.msra.mxu0 %v3959
    %4680 = vmatmul.bf16.gmra.mxu0 %v2525
    %v4681 = vpop.f32.mrf.mxu0
    %v4682 = vadd.f32 %v4668, %v4681
    %v4683 = vpop.f32.mrf.mxu0
    %v4684 = vadd.f32 %v4670, %v4683
    %4685 = vdwg.mxu0
    %4686 = vmatpush.bf16.msra.mxu0 %v4004
    %4687 = vmatpush.bf16.msra.mxu0 %v4001
    %4688 = vmatpush.bf16.msra.mxu0 %v3998
    %4689 = vmatpush.bf16.msra.mxu0 %v3995
    %4690 = vmatpush.bf16.msra.mxu0 %v3992
    %4691 = vmatpush.bf16.msra.mxu0 %v3989
    %4692 = vmatpush.bf16.msra.mxu0 %v3986
    %4693 = vmatpush.bf16.msra.mxu0 %v3983
    %4694 = vmatmul.bf16.gmra.mxu0 %v2526
    %v4695 = vpop.f32.mrf.mxu0
    %v4696 = vadd.f32 %v4682, %v4695
    %v4697 = vpop.f32.mrf.mxu0
    %v4698 = vadd.f32 %v4684, %v4697
    %4699 = vdwg.mxu0
    %4700 = vmatpush.bf16.msra.mxu0 %v4028
    %4701 = vmatpush.bf16.msra.mxu0 %v4025
    %4702 = vmatpush.bf16.msra.mxu0 %v4022
    %4703 = vmatpush.bf16.msra.mxu0 %v4019
    %4704 = vmatpush.bf16.msra.mxu0 %v4016
    %4705 = vmatpush.bf16.msra.mxu0 %v4013
    %4706 = vmatpush.bf16.msra.mxu0 %v4010
    %4707 = vmatpush.bf16.msra.mxu0 %v4007
    %4708 = vmatmul.bf16.gmra.mxu0 %v2527
    %v4709 = vpop.f32.mrf.mxu0
    %v4710 = vadd.f32 %v4696, %v4709
    %v4711 = vpop.f32.mrf.mxu0
    %v4712 = vadd.f32 %v4698, %v4711
    %4713 = vdwg.mxu0
    %4714 = vmatpush.bf16.msra.mxu0 %v4052
    %4715 = vmatpush.bf16.msra.mxu0 %v4049
    %4716 = vmatpush.bf16.msra.mxu0 %v4046
    %4717 = vmatpush.bf16.msra.mxu0 %v4043
    %4718 = vmatpush.bf16.msra.mxu0 %v4040
    %4719 = vmatpush.bf16.msra.mxu0 %v4037
    %4720 = vmatpush.bf16.msra.mxu0 %v4034
    %4721 = vmatpush.bf16.msra.mxu0 %v4031
    %4722 = vmatmul.bf16.gmra.mxu0 %v2528
    %v4723 = vpop.f32.mrf.mxu0
    %v4724 = vadd.f32 %v4710, %v4723
    %v4725 = vpop.f32.mrf.mxu0
    %v4726 = vadd.f32 %v4712, %v4725
    %4727 = vdwg.mxu0
    %4728 = vmatpush.bf16.msra.mxu0 %v4076
    %4729 = vmatpush.bf16.msra.mxu0 %v4073
    %4730 = vmatpush.bf16.msra.mxu0 %v4070
    %4731 = vmatpush.bf16.msra.mxu0 %v4067
    %4732 = vmatpush.bf16.msra.mxu0 %v4064
    %4733 = vmatpush.bf16.msra.mxu0 %v4061
    %4734 = vmatpush.bf16.msra.mxu0 %v4058
    %4735 = vmatpush.bf16.msra.mxu0 %v4055
    %4736 = vmatmul.bf16.gmra.mxu0 %v2529
    %v4737 = vpop.f32.mrf.mxu0
    %v4738 = vadd.f32 %v4724, %v4737
    %v4739 = vpop.f32.mrf.mxu0
    %v4740 = vadd.f32 %v4726, %v4739
    %4741 = vdwg.mxu0
    %4742 = vmatpush.bf16.msra.mxu0 %v4100
    %4743 = vmatpush.bf16.msra.mxu0 %v4097
    %4744 = vmatpush.bf16.msra.mxu0 %v4094
    %4745 = vmatpush.bf16.msra.mxu0 %v4091
    %4746 = vmatpush.bf16.msra.mxu0 %v4088
    %4747 = vmatpush.bf16.msra.mxu0 %v4085
    %4748 = vmatpush.bf16.msra.mxu0 %v4082
    %4749 = vmatpush.bf16.msra.mxu0 %v4079
    %4750 = vmatmul.bf16.gmra.mxu0 %v2530
    %v4751 = vpop.f32.mrf.mxu0
    %v4752 = vadd.f32 %v4738, %v4751
    %v4753 = vpop.f32.mrf.mxu0
    %v4754 = vadd.f32 %v4740, %v4753
    %4755 = vdwg.mxu0
    %4756 = vmatpush.bf16.msra.mxu0 %v4124
    %4757 = vmatpush.bf16.msra.mxu0 %v4121
    %4758 = vmatpush.bf16.msra.mxu0 %v4118
    %4759 = vmatpush.bf16.msra.mxu0 %v4115
    %4760 = vmatpush.bf16.msra.mxu0 %v4112
    %4761 = vmatpush.bf16.msra.mxu0 %v4109
    %4762 = vmatpush.bf16.msra.mxu0 %v4106
    %4763 = vmatpush.bf16.msra.mxu0 %v4103
    %4764 = vmatmul.bf16.gmra.mxu0 %v2531
    %v4765 = vpop.f32.mrf.mxu0
    %v4766 = vadd.f32 %v4752, %v4765
    %v4767 = vpop.f32.mrf.mxu0
    %v4768 = vadd.f32 %v4754, %v4767
    %4769 = vdwg.mxu0
    %4770 = vmatpush.bf16.msra.mxu0 %v4148
    %4771 = vmatpush.bf16.msra.mxu0 %v4145
    %4772 = vmatpush.bf16.msra.mxu0 %v4142
    %4773 = vmatpush.bf16.msra.mxu0 %v4139
    %4774 = vmatpush.bf16.msra.mxu0 %v4136
    %4775 = vmatpush.bf16.msra.mxu0 %v4133
    %4776 = vmatpush.bf16.msra.mxu0 %v4130
    %4777 = vmatpush.bf16.msra.mxu0 %v4127
    %4778 = vmatmul.bf16.gmra.mxu0 %v2532
    %v4779 = vpop.f32.mrf.mxu0
    %v4780 = vadd.f32 %v4766, %v4779
    %v4781 = vpop.f32.mrf.mxu0
    %v4782 = vadd.f32 %v4768, %v4781
    %4783 = vdwg.mxu0
    %4784 = vmatpush.bf16.msra.mxu0 %v4172
    %4785 = vmatpush.bf16.msra.mxu0 %v4169
    %4786 = vmatpush.bf16.msra.mxu0 %v4166
    %4787 = vmatpush.bf16.msra.mxu0 %v4163
    %4788 = vmatpush.bf16.msra.mxu0 %v4160
    %4789 = vmatpush.bf16.msra.mxu0 %v4157
    %4790 = vmatpush.bf16.msra.mxu0 %v4154
    %4791 = vmatpush.bf16.msra.mxu0 %v4151
    %4792 = vmatmul.bf16.gmra.mxu0 %v2533
    %v4793 = vpop.f32.mrf.mxu0
    %v4794 = vadd.f32 %v4780, %v4793
    %v4795 = vpop.f32.mrf.mxu0
    %v4796 = vadd.f32 %v4782, %v4795
    %4797 = vdwg.mxu0
    %4798 = vmatpush.bf16.msra.mxu0 %v3909
    %4799 = vmatpush.bf16.msra.mxu0 %v3906
    %4800 = vmatpush.bf16.msra.mxu0 %v3903
    %4801 = vmatpush.bf16.msra.mxu0 %v3900
    %4802 = vmatpush.bf16.msra.mxu0 %v3897
    %4803 = vmatpush.bf16.msra.mxu0 %v3894
    %4804 = vmatpush.bf16.msra.mxu0 %v3891
    %4805 = vmatpush.bf16.msra.mxu0 %v3888
    %4806 = vmatmul.bf16.gmra.mxu0 %v2522
    %v4807 = vpop.f32.mrf.mxu0
    %v4808 = vadd.f32 %v2922, %v4807
    %v4809 = vpop.f32.mrf.mxu0
    %v4810 = vadd.f32 %v2922, %v4809
    %4811 = vdwg.mxu0
    %4812 = vmatpush.bf16.msra.mxu0 %v3933
    %4813 = vmatpush.bf16.msra.mxu0 %v3930
    %4814 = vmatpush.bf16.msra.mxu0 %v3927
    %4815 = vmatpush.bf16.msra.mxu0 %v3924
    %4816 = vmatpush.bf16.msra.mxu0 %v3921
    %4817 = vmatpush.bf16.msra.mxu0 %v3918
    %4818 = vmatpush.bf16.msra.mxu0 %v3915
    %4819 = vmatpush.bf16.msra.mxu0 %v3912
    %4820 = vmatmul.bf16.gmra.mxu0 %v2523
    %v4821 = vpop.f32.mrf.mxu0
    %v4822 = vadd.f32 %v4808, %v4821
    %v4823 = vpop.f32.mrf.mxu0
    %v4824 = vadd.f32 %v4810, %v4823
    %4825 = vdwg.mxu0
    %4826 = vmatpush.bf16.msra.mxu0 %v3957
    %4827 = vmatpush.bf16.msra.mxu0 %v3954
    %4828 = vmatpush.bf16.msra.mxu0 %v3951
    %4829 = vmatpush.bf16.msra.mxu0 %v3948
    %4830 = vmatpush.bf16.msra.mxu0 %v3945
    %4831 = vmatpush.bf16.msra.mxu0 %v3942
    %4832 = vmatpush.bf16.msra.mxu0 %v3939
    %4833 = vmatpush.bf16.msra.mxu0 %v3936
    %4834 = vmatmul.bf16.gmra.mxu0 %v2524
    %v4835 = vpop.f32.mrf.mxu0
    %v4836 = vadd.f32 %v4822, %v4835
    %v4837 = vpop.f32.mrf.mxu0
    %v4838 = vadd.f32 %v4824, %v4837
    %4839 = vdwg.mxu0
    %4840 = vmatpush.bf16.msra.mxu0 %v3981
    %4841 = vmatpush.bf16.msra.mxu0 %v3978
    %4842 = vmatpush.bf16.msra.mxu0 %v3975
    %4843 = vmatpush.bf16.msra.mxu0 %v3972
    %4844 = vmatpush.bf16.msra.mxu0 %v3969
    %4845 = vmatpush.bf16.msra.mxu0 %v3966
    %4846 = vmatpush.bf16.msra.mxu0 %v3963
    %4847 = vmatpush.bf16.msra.mxu0 %v3960
    %4848 = vmatmul.bf16.gmra.mxu0 %v2525
    %v4849 = vpop.f32.mrf.mxu0
    %v4850 = vadd.f32 %v4836, %v4849
    %v4851 = vpop.f32.mrf.mxu0
    %v4852 = vadd.f32 %v4838, %v4851
    %4853 = vdwg.mxu0
    %4854 = vmatpush.bf16.msra.mxu0 %v4005
    %4855 = vmatpush.bf16.msra.mxu0 %v4002
    %4856 = vmatpush.bf16.msra.mxu0 %v3999
    %4857 = vmatpush.bf16.msra.mxu0 %v3996
    %4858 = vmatpush.bf16.msra.mxu0 %v3993
    %4859 = vmatpush.bf16.msra.mxu0 %v3990
    %4860 = vmatpush.bf16.msra.mxu0 %v3987
    %4861 = vmatpush.bf16.msra.mxu0 %v3984
    %4862 = vmatmul.bf16.gmra.mxu0 %v2526
    %v4863 = vpop.f32.mrf.mxu0
    %v4864 = vadd.f32 %v4850, %v4863
    %v4865 = vpop.f32.mrf.mxu0
    %v4866 = vadd.f32 %v4852, %v4865
    %4867 = vdwg.mxu0
    %4868 = vmatpush.bf16.msra.mxu0 %v4029
    %4869 = vmatpush.bf16.msra.mxu0 %v4026
    %4870 = vmatpush.bf16.msra.mxu0 %v4023
    %4871 = vmatpush.bf16.msra.mxu0 %v4020
    %4872 = vmatpush.bf16.msra.mxu0 %v4017
    %4873 = vmatpush.bf16.msra.mxu0 %v4014
    %4874 = vmatpush.bf16.msra.mxu0 %v4011
    %4875 = vmatpush.bf16.msra.mxu0 %v4008
    %4876 = vmatmul.bf16.gmra.mxu0 %v2527
    %v4877 = vpop.f32.mrf.mxu0
    %v4878 = vadd.f32 %v4864, %v4877
    %v4879 = vpop.f32.mrf.mxu0
    %v4880 = vadd.f32 %v4866, %v4879
    %4881 = vdwg.mxu0
    %4882 = vmatpush.bf16.msra.mxu0 %v4053
    %4883 = vmatpush.bf16.msra.mxu0 %v4050
    %4884 = vmatpush.bf16.msra.mxu0 %v4047
    %4885 = vmatpush.bf16.msra.mxu0 %v4044
    %4886 = vmatpush.bf16.msra.mxu0 %v4041
    %4887 = vmatpush.bf16.msra.mxu0 %v4038
    %4888 = vmatpush.bf16.msra.mxu0 %v4035
    %4889 = vmatpush.bf16.msra.mxu0 %v4032
    %4890 = vmatmul.bf16.gmra.mxu0 %v2528
    %v4891 = vpop.f32.mrf.mxu0
    %v4892 = vadd.f32 %v4878, %v4891
    %v4893 = vpop.f32.mrf.mxu0
    %v4894 = vadd.f32 %v4880, %v4893
    %4895 = vdwg.mxu0
    %4896 = vmatpush.bf16.msra.mxu0 %v4077
    %4897 = vmatpush.bf16.msra.mxu0 %v4074
    %4898 = vmatpush.bf16.msra.mxu0 %v4071
    %4899 = vmatpush.bf16.msra.mxu0 %v4068
    %4900 = vmatpush.bf16.msra.mxu0 %v4065
    %4901 = vmatpush.bf16.msra.mxu0 %v4062
    %4902 = vmatpush.bf16.msra.mxu0 %v4059
    %4903 = vmatpush.bf16.msra.mxu0 %v4056
    %4904 = vmatmul.bf16.gmra.mxu0 %v2529
    %v4905 = vpop.f32.mrf.mxu0
    %v4906 = vadd.f32 %v4892, %v4905
    %v4907 = vpop.f32.mrf.mxu0
    %v4908 = vadd.f32 %v4894, %v4907
    %4909 = vdwg.mxu0
    %4910 = vmatpush.bf16.msra.mxu0 %v4101
    %4911 = vmatpush.bf16.msra.mxu0 %v4098
    %4912 = vmatpush.bf16.msra.mxu0 %v4095
    %4913 = vmatpush.bf16.msra.mxu0 %v4092
    %4914 = vmatpush.bf16.msra.mxu0 %v4089
    %4915 = vmatpush.bf16.msra.mxu0 %v4086
    %4916 = vmatpush.bf16.msra.mxu0 %v4083
    %4917 = vmatpush.bf16.msra.mxu0 %v4080
    %4918 = vmatmul.bf16.gmra.mxu0 %v2530
    %v4919 = vpop.f32.mrf.mxu0
    %v4920 = vadd.f32 %v4906, %v4919
    %v4921 = vpop.f32.mrf.mxu0
    %v4922 = vadd.f32 %v4908, %v4921
    %4923 = vdwg.mxu0
    %4924 = vmatpush.bf16.msra.mxu0 %v4125
    %4925 = vmatpush.bf16.msra.mxu0 %v4122
    %4926 = vmatpush.bf16.msra.mxu0 %v4119
    %4927 = vmatpush.bf16.msra.mxu0 %v4116
    %4928 = vmatpush.bf16.msra.mxu0 %v4113
    %4929 = vmatpush.bf16.msra.mxu0 %v4110
    %4930 = vmatpush.bf16.msra.mxu0 %v4107
    %4931 = vmatpush.bf16.msra.mxu0 %v4104
    %4932 = vmatmul.bf16.gmra.mxu0 %v2531
    %v4933 = vpop.f32.mrf.mxu0
    %v4934 = vadd.f32 %v4920, %v4933
    %v4935 = vpop.f32.mrf.mxu0
    %v4936 = vadd.f32 %v4922, %v4935
    %4937 = vdwg.mxu0
    %4938 = vmatpush.bf16.msra.mxu0 %v4149
    %4939 = vmatpush.bf16.msra.mxu0 %v4146
    %4940 = vmatpush.bf16.msra.mxu0 %v4143
    %4941 = vmatpush.bf16.msra.mxu0 %v4140
    %4942 = vmatpush.bf16.msra.mxu0 %v4137
    %4943 = vmatpush.bf16.msra.mxu0 %v4134
    %4944 = vmatpush.bf16.msra.mxu0 %v4131
    %4945 = vmatpush.bf16.msra.mxu0 %v4128
    %4946 = vmatmul.bf16.gmra.mxu0 %v2532
    %v4947 = vpop.f32.mrf.mxu0
    %v4948 = vadd.f32 %v4934, %v4947
    %v4949 = vpop.f32.mrf.mxu0
    %v4950 = vadd.f32 %v4936, %v4949
    %4951 = vdwg.mxu0
    %4952 = vmatpush.bf16.msra.mxu0 %v4173
    %4953 = vmatpush.bf16.msra.mxu0 %v4170
    %4954 = vmatpush.bf16.msra.mxu0 %v4167
    %4955 = vmatpush.bf16.msra.mxu0 %v4164
    %4956 = vmatpush.bf16.msra.mxu0 %v4161
    %4957 = vmatpush.bf16.msra.mxu0 %v4158
    %4958 = vmatpush.bf16.msra.mxu0 %v4155
    %4959 = vmatpush.bf16.msra.mxu0 %v4152
    %4960 = vmatmul.bf16.gmra.mxu0 %v2533
    %v4961 = vpop.f32.mrf.mxu0
    %v4962 = vadd.f32 %v4948, %v4961
    %v4963 = vpop.f32.mrf.mxu0
    %v4964 = vadd.f32 %v4950, %v4963
    %4965 = vdwg.mxu0
    %4966 = vst [vmem:[#allocation11] sm:$0xff] %v4626
    %4967 = vst [vmem:[#allocation11 + $0x8] sm:$0xff] %v4794
    %4968 = vst [vmem:[#allocation11 + $0x10] sm:$0xff] %v4962
    %4969 = vst [vmem:[#allocation11 + $0x18] sm:$0xff] %v4628
    %4970 = vst [vmem:[#allocation11 + $0x20] sm:$0xff] %v4796
    %4971 = vst [vmem:[#allocation11 + $0x28] sm:$0xff] %v4964
    // Predicated region
    $region42: #{tpu_custom_call.1} parent=1 // pred_check
      _
    $region43: #{tpu_custom_call.1} parent=1 // pred_check_branch
      %4973 = sbr.rel (0) target = $region45
    $region44: #{tpu_custom_call.1} parent=1 // pred_region
      %4975 = vsyncadd [#allocation4], 0
      %s4976 = sshll.u32 [#allocation11], 4
      %s4977 = int_to_ptr.vmem [resolvable:$true] %s4976
      %s4978 = sshll.u32 %s5, 4
      %s4979 = int_to_ptr.hbm [resolvable:$true] %s4978
      %4984 = dma.vmem_to_hbm [thread:$0]  %s4977, 768, %s4979, [#allocation4], 384, 384, 24
    $region45: #{tpu_custom_call.1} parent=1 // pred_fallthru
      _
    // Predicated region
    $region46: #{tpu_custom_call.1} parent=1 // pred_check
      _
    $region47: #{tpu_custom_call.1} parent=1 // pred_check_branch
      %4986 = sbr.rel (0) target = $region49
    $region48: #{tpu_custom_call.1} parent=1 // pred_region
      %4988 = dma.done [#allocation4], 768
    $region49: #{tpu_custom_call.1} parent=1 // pred_fallthru
      _
    %4989 = vsyncpa [#allocation3], 1
    %4990 = vsyncpa [#allocation6], 1
    %4991 = vsyncpa [#allocation9], 1
    %4992 = vsyncpa [#allocation4], 1

</llo_original>
